<compile_context>
chip_gen: v6e
topology: v6e:2x2x1
jax: 0.10.0
libtpu: 0.0.40
codegen_flags: <defaults>
</compile_context>

<pallas_src>
import jax
import jax.numpy as jnp
from jax.experimental import pallas as pl
from jax.experimental.pallas import tpu as pltpu

C = 16           # channels in every conv layer
S2 = 14          # conv2 spatial size (full conv3 domain)
S2S = S2 * S2    # 196 valid positions per image
S3 = 12          # conv3 valid spatial size
PIMG = 256       # per-image padded position count (2 x 128 lanes)
NTAP = 9         # 3x3 taps


# ----------------------------------------------------------------------------
# Fused kernel (one image per grid step):
#   conv1 -> conv2 -> conv3 -> (folded flatten) -> fc1 -> qvals
# ----------------------------------------------------------------------------
def _dqn_kernel(cols_ref, w1_ref, b1_ref, w2_ref, b2_ref, w3_ref, b3_ref,
                wf_ref, bf_ref, wq_ref, bq_ref, o_ref):
    f32 = jnp.float32
    cols = cols_ref[0]                                     # (9, 9*256) float32

    # conv1, evaluated once per conv2 tap block: (16,9) @ (9, 2304) on the MXU.
    t1 = jnp.dot(w1_ref[...].astype(f32), cols, preferred_element_type=f32)
    t1 = jnp.maximum(t1 + b1_ref[...], 0.0)                # (16, 2304)

    # conv2: the 9 tap blocks are 128-aligned (256-lane) slices; stack on sublanes.
    p2 = jnp.concatenate(
        [t1[:, t * PIMG:(t + 1) * PIMG] for t in range(NTAP)], axis=0)  # (144,256)
    a2 = jnp.dot(w2_ref[...].astype(f32), p2, preferred_element_type=f32)
    a2 = jnp.maximum(a2 + b2_ref[...], 0.0)                # (16, 256)

    # conv3 (stride 1): tap (kh,kw) is a lane rotation by kh*14+kw inside the
    # 256-lane image block.  Valid outputs (oh,ow <= 11) only read valid conv2
    # lanes; rotated-in / border / pad lanes hold finite garbage which is
    # multiplied by exactly-zero rows of wf below.
    taps = []
    for kh in range(3):
        for kw in range(3):
            s = kh * S2 + kw
            taps.append(a2 if s == 0
                        else jnp.concatenate([a2[:, s:], a2[:, :s]], axis=1))
    p3 = jnp.concatenate(taps, axis=0)                     # (144, 256)
    a3 = jnp.dot(w3_ref[...].astype(f32), p3, preferred_element_type=f32)
    a3 = jnp.maximum(a3 + b3_ref[...], 0.0)                # (16, 256)

    # fc1: NCHW flatten + 12x12 crop + 256-pad are folded into wf (16, 256, 128);
    # the contraction over (channel, position) runs as 16 accumulated matmuls,
    # so no flatten copies and no work that scales with batch.
    wf = wf_ref[...].astype(f32)                           # (16, 256, 128)
    h = jnp.dot(a3[0:1, :], wf[0], preferred_element_type=f32)
    for c in range(1, C):
        h = h + jnp.dot(a3[c:c + 1, :], wf[c], preferred_element_type=f32)
    h = jnp.maximum(h + bf_ref[...], 0.0)                  # (1, 128)

    q = jnp.dot(h, wq_ref[...].astype(f32), preferred_element_type=f32) + bq_ref[...]
    o_ref[...] = q.reshape(o_ref.shape).astype(o_ref.dtype)


# ----------------------------------------------------------------------------
# XLA glue on the raw input only: conv1 patches grouped by conv2 tap, built with
# 81 static strided slices (no gather), per-image positions padded 196 -> 256.
#   cols[b, k1h*3+k1w, (k2h*3+k2w)*256 + oh*14 + ow]
#     = x[b, 0, 4*oh + 2*k2h + k1h, 4*ow + 2*k2w + k1w]
# ----------------------------------------------------------------------------
def _build_conv1_cols(x_nchw, dtype=jnp.float32):
    b = x_nchw.shape[0]
    x2 = x_nchw[:, 0, :, :].astype(jnp.float32)            # (B, 60, 60)
    lim = 4 * (S2 - 1) + 1                                 # 53 (last start 6+52=58<60)
    blocks = []
    for k1h in range(3):
        for k1w in range(3):
            taps = []
            for k2h in range(3):
                for k2w in range(3):
                    sh, sw = 2 * k2h + k1h, 2 * k2w + k1w
                    taps.append(jax.lax.slice(
                        x2, (0, sh, sw), (b, sh + lim, sw + lim), (1, 4, 4)))
            blocks.append(jnp.stack(taps, axis=0))         # (9, B, 14, 14)
    g = jnp.stack(blocks, axis=0)                          # (9, 9, B, 14, 14)
    g = g.reshape(NTAP, NTAP, b, S2S)
    g = jnp.pad(g, ((0, 0), (0, 0), (0, 0), (0, PIMG - S2S)))
    g = jnp.transpose(g, (2, 0, 1, 3)).reshape(b, NTAP, NTAP * PIMG)
    return g.astype(dtype)


# ----------------------------------------------------------------------------
# Parameters: PyTorch-layout init + one-time kernel-layout preparation.
# ----------------------------------------------------------------------------
def init_params(key, actions=1):
    def u(k, shape, fan_in):
        bound = 1.0 / jnp.sqrt(jnp.float32(fan_in))
        return jax.random.uniform(k, shape, jnp.float32, -bound, bound)

    ks = jax.random.split(key, 10)
    fc_in = S3 * S3 * C
    return {
        "conv1_w": u(ks[0], (C, 1, 3, 3), 9),
        "conv1_b": u(ks[1], (C,), 9),
        "conv2_w": u(ks[2], (C, C, 3, 3), C * 9),
        "conv2_b": u(ks[3], (C,), C * 9),
        "conv3_w": u(ks[4], (C, C, 3, 3), C * 9),
        "conv3_b": u(ks[5], (C,), C * 9),
        "fc1_w": u(ks[6], (128, fc_in), fc_in),            # PyTorch (out, in)
        "fc1_b": u(ks[7], (128,), fc_in),
        "q_w": u(ks[8], (actions, 128), 128),              # PyTorch (out, in)
        "q_b": u(ks[9], (actions,), 128),
    }


def prepare_params(params, compute_dtype=jnp.bfloat16):
    """One-time layout folding.  Weights are stored in `compute_dtype`
    (bfloat16 by default on all TPU generations: the kernel is weight-DMA
    bound).  Biases stay float32; activations stay float32 in the kernel."""
    w1 = params["conv1_w"].reshape(C, 9)
    w2 = jnp.transpose(params["conv2_w"], (0, 2, 3, 1)).reshape(C, 9 * C)
    w3 = jnp.transpose(params["conv3_w"], (0, 2, 3, 1)).reshape(C, 9 * C)
    # fc1 weight: fold NCHW flatten + 12x12 valid crop + per-image 256-lane pad
    # into a (C, 256, 128) tensor with zero rows at border/pad positions.
    wf = params["fc1_w"].reshape(128, C, S3, S3)
    wf = jnp.pad(wf, ((0, 0), (0, 0), (0, S2 - S3), (0, S2 - S3)))
    wf = wf.reshape(128, C, S2S)
    wf = jnp.pad(wf, ((0, 0), (0, 0), (0, PIMG - S2S)))
    wf = jnp.transpose(wf, (1, 2, 0))                      # (16, 256, 128)
    return {
        "w1": w1.astype(compute_dtype),
        "b1": params["conv1_b"].reshape(C, 1).astype(jnp.float32),
        "w2": w2.astype(compute_dtype),
        "b2": params["conv2_b"].reshape(C, 1).astype(jnp.float32),
        "w3": w3.astype(compute_dtype),
        "b3": params["conv3_b"].reshape(C, 1).astype(jnp.float32),
        "wf": wf.astype(compute_dtype),
        "bf": params["fc1_b"].reshape(1, 128).astype(jnp.float32),
        "wq": params["q_w"].T.astype(compute_dtype),
        "bq": params["q_b"].reshape(1, -1).astype(jnp.float32),
    }


# ----------------------------------------------------------------------------
# Forward pass: one pallas_call, gridded over the batch dimension.
# ----------------------------------------------------------------------------
def dqn_forward(prepared, x_nchw):
    assert x_nchw.shape[1:] == (1, 60, 60), "kernel is specialized to 1x60x60 input"
    b = x_nchw.shape[0]
    actions = prepared["wq"].shape[1]

    cols = _build_conv1_cols(x_nchw)                       # (B, 9, 2304) float32
    weights = (prepared["w1"], prepared["b1"], prepared["w2"], prepared["b2"],
               prepared["w3"], prepared["b3"], prepared["wf"], prepared["bf"],
               prepared["wq"], prepared["bq"])

    def const_spec(arr):
        zeros = (0,) * arr.ndim

        def imap(i):
            return zeros
        return pl.BlockSpec(arr.shape, imap)

    in_specs = [pl.BlockSpec((1, NTAP, NTAP * PIMG), lambda i: (i, 0, 0))]
    in_specs += [const_spec(w) for w in weights]

    weight_bytes = sum(int(w.size) * w.dtype.itemsize for w in weights)
    cols_bytes = int(cols.size) * cols.dtype.itemsize
    flops_per_img = 2 * (C * 9 * NTAP * PIMG            # conv1 (per-tap blocks)
                         + 2 * C * (9 * C) * PIMG       # conv2 + conv3
                         + C * PIMG * 128               # fc1
                         + 128 * actions)               # q head
    cost = pl.CostEstimate(flops=b * flops_per_img, transcendentals=0,
                           bytes_accessed=weight_bytes + cols_bytes + b * actions * 4)

    out = pl.pallas_call(
        _dqn_kernel,
        out_shape=jax.ShapeDtypeStruct((b, 1, actions), jnp.float32),
        grid=(b,),
        in_specs=in_specs,
        out_specs=pl.BlockSpec((1, 1, actions), lambda i: (i, 0, 0)),
        compiler_params=pltpu.CompilerParams(
            dimension_semantics=("parallel",),
            vmem_limit_bytes=32 * 1024 * 1024),
        cost_estimate=cost,
    )(cols, *weights)
    return out.reshape(b, actions)


# ----------------------------------------------------------------------------
# Pure-JAX reference (mirrors the PyTorch module exactly)
# ----------------------------------------------------------------------------
def dqn_reference(params, x):
    prec = jax.lax.Precision.HIGHEST
    dn = ("NCHW", "OIHW", "NCHW")
    y = x
    y = jax.nn.relu(jax.lax.conv_general_dilated(
        y, params["conv1_w"], (2, 2), "VALID", dimension_numbers=dn, precision=prec)
        + params["conv1_b"][None, :, None, None])
    y = jax.nn.relu(jax.lax.conv_general_dilated(
        y, params["conv2_w"], (2, 2), "VALID", dimension_numbers=dn, precision=prec)
        + params["conv2_b"][None, :, None, None])
    y = jax.nn.relu(jax.lax.conv_general_dilated(
        y, params["conv3_w"], (1, 1), "VALID", dimension_numbers=dn, precision=prec)
        + params["conv3_b"][None, :, None, None])
    v = y.reshape(y.shape[0], -1)                          # NCHW flatten (x.view(B,-1))
    h = jax.nn.relu(jnp.dot(v, params["fc1_w"].T, precision=prec) + params["fc1_b"])
    return jnp.dot(h, params["q_w"].T, precision=prec) + params["q_b"]


if __name__ == "__main__":
    B, IMG, ACTIONS = 2, 60, 4          # module default input_size=(1, 60, 60)

    key = jax.random.PRNGKey(0)
    pkey, xkey = jax.random.split(key)
    params = init_params(pkey, actions=ACTIONS)
    x = jax.random.normal(xkey, (B, 1, IMG, IMG), dtype=jnp.float32)

    ref = dqn_reference(params, x)
    scale = float(jnp.max(jnp.abs(ref)))
    fwd = jax.jit(dqn_forward)

    # Default path: bf16 weights (DMA-optimal), f32 activations + accumulation.
    prepared = prepare_params(params)
    out = jax.block_until_ready(fwd(prepared, x))
    assert out.shape == (B, ACTIONS) and out.dtype == jnp.float32
    err_bf16 = float(jnp.max(jnp.abs(out - ref)))
    assert err_bf16 <= 4e-2 * scale + 3e-3, (err_bf16, scale)

    # f32-weight path: tighter check of the kernel dataflow itself.
    prepared32 = prepare_params(params, compute_dtype=jnp.float32)
    out32 = jax.block_until_ready(fwd(prepared32, x))
    err_f32 = float(jnp.max(jnp.abs(out32 - ref)))
    assert err_f32 <= 1e-2 * scale + 1e-3, (err_f32, scale)

    print("KERNEL_OK")
</pallas_src>

<mosaic_0001>
module attributes {stable_mosaic.version = 11 : i64} {
  func.func @_dqn_kernel(%arg0: i32, %arg1: memref<1x9x2304xf32, #tpu.memory_space<vmem>>, %arg2: memref<16x9xbf16, #tpu.memory_space<vmem>>, %arg3: memref<16x1xf32, #tpu.memory_space<vmem>>, %arg4: memref<16x144xbf16, #tpu.memory_space<vmem>>, %arg5: memref<16x1xf32, #tpu.memory_space<vmem>>, %arg6: memref<16x144xbf16, #tpu.memory_space<vmem>>, %arg7: memref<16x1xf32, #tpu.memory_space<vmem>>, %arg8: memref<16x256x128xbf16, #tpu.memory_space<vmem>>, %arg9: memref<1x128xf32, #tpu.memory_space<vmem>>, %arg10: memref<128x4xbf16, #tpu.memory_space<vmem>>, %arg11: memref<1x4xf32, #tpu.memory_space<vmem>>, %arg12: memref<1x1x4xf32, #tpu.memory_space<vmem>>) attributes {dimension_semantics = [#tpu.dimension_semantics<parallel>], iteration_bounds = array<i64: 2>, scalar_prefetch = 0 : i64, scratch_operands = 0 : i64, tpu.core_type = #tpu.core_type<tc>, window_params = [{transform_indices = @transform_0, window_bounds = array<i64: 1, 9, 2304>}, {pipeline_mode = #tpu.pipeline_mode<synchronous>, transform_indices = @transform_1, window_bounds = array<i64: 16, 9>}, {pipeline_mode = #tpu.pipeline_mode<synchronous>, transform_indices = @transform_2, window_bounds = array<i64: 16, 1>}, {pipeline_mode = #tpu.pipeline_mode<synchronous>, transform_indices = @transform_3, window_bounds = array<i64: 16, 144>}, {pipeline_mode = #tpu.pipeline_mode<synchronous>, transform_indices = @transform_4, window_bounds = array<i64: 16, 1>}, {pipeline_mode = #tpu.pipeline_mode<synchronous>, transform_indices = @transform_5, window_bounds = array<i64: 16, 144>}, {pipeline_mode = #tpu.pipeline_mode<synchronous>, transform_indices = @transform_6, window_bounds = array<i64: 16, 1>}, {pipeline_mode = #tpu.pipeline_mode<synchronous>, transform_indices = @transform_7, window_bounds = array<i64: 16, 256, 128>}, {pipeline_mode = #tpu.pipeline_mode<synchronous>, transform_indices = @transform_8, window_bounds = array<i64: 1, 128>}, {pipeline_mode = #tpu.pipeline_mode<synchronous>, transform_indices = @transform_9, window_bounds = array<i64: 128, 4>}, {pipeline_mode = #tpu.pipeline_mode<synchronous>, transform_indices = @transform_10, window_bounds = array<i64: 1, 4>}, {transform_indices = @transform_11, window_bounds = array<i64: 1, 1, 4>}]} {
    %c0 = arith.constant 0 : index
    %c0_0 = arith.constant 0 : index
    %c0_1 = arith.constant 0 : index
    %0 = vector.load %arg1[%c0, %c0_0, %c0_1] : memref<1x9x2304xf32, #tpu.memory_space<vmem>>, vector<1x9x2304xf32>
    %1 = vector.shape_cast %0 : vector<1x9x2304xf32> to vector<9x2304xf32>
    %c0_2 = arith.constant 0 : index
    %c0_3 = arith.constant 0 : index
    %2 = vector.load %arg2[%c0_2, %c0_3] : memref<16x9xbf16, #tpu.memory_space<vmem>>, vector<16x9xbf16>
    %3 = arith.extf %2 : vector<16x9xbf16> to vector<16x9xf32>
    %cst = arith.constant dense<0.000000e+00> : vector<16x2304xf32>
    %4 = tpu.matmul %3, %1, %cst {dimension_numbers = #tpu.dot_dimension_numbers<[1], [0], [0], [1], [0, 0, 1, 1], [], []>} : vector<16x9xf32>, vector<9x2304xf32>, vector<16x2304xf32> -> vector<16x2304xf32>
    %c0_4 = arith.constant 0 : index
    %c0_5 = arith.constant 0 : index
    %5 = vector.load %arg3[%c0_4, %c0_5] : memref<16x1xf32, #tpu.memory_space<vmem>>, vector<16x1xf32>
    %6 = vector.broadcast %5 : vector<16x1xf32> to vector<16x2304xf32>
    %7 = arith.addf %4, %6 : vector<16x2304xf32>
    %cst_6 = arith.constant 0.000000e+00 : f32
    %8 = vector.broadcast %cst_6 : f32 to vector<16x2304xf32>
    %9 = arith.maximumf %7, %8 : vector<16x2304xf32>
    %10 = vector.extract_strided_slice %9 {offsets = [0, 0], sizes = [16, 256], strides = [1, 1]} : vector<16x2304xf32> to vector<16x256xf32>
    %11 = vector.extract_strided_slice %9 {offsets = [0, 256], sizes = [16, 256], strides = [1, 1]} : vector<16x2304xf32> to vector<16x256xf32>
    %12 = vector.extract_strided_slice %9 {offsets = [0, 512], sizes = [16, 256], strides = [1, 1]} : vector<16x2304xf32> to vector<16x256xf32>
    %13 = vector.extract_strided_slice %9 {offsets = [0, 768], sizes = [16, 256], strides = [1, 1]} : vector<16x2304xf32> to vector<16x256xf32>
    %14 = vector.extract_strided_slice %9 {offsets = [0, 1024], sizes = [16, 256], strides = [1, 1]} : vector<16x2304xf32> to vector<16x256xf32>
    %15 = vector.extract_strided_slice %9 {offsets = [0, 1280], sizes = [16, 256], strides = [1, 1]} : vector<16x2304xf32> to vector<16x256xf32>
    %16 = vector.extract_strided_slice %9 {offsets = [0, 1536], sizes = [16, 256], strides = [1, 1]} : vector<16x2304xf32> to vector<16x256xf32>
    %17 = vector.extract_strided_slice %9 {offsets = [0, 1792], sizes = [16, 256], strides = [1, 1]} : vector<16x2304xf32> to vector<16x256xf32>
    %18 = vector.extract_strided_slice %9 {offsets = [0, 2048], sizes = [16, 256], strides = [1, 1]} : vector<16x2304xf32> to vector<16x256xf32>
    %19 = tpu.concatenate %10, %11, %12, %13, %14, %15, %16, %17, %18 in 0 : vector<16x256xf32>, vector<16x256xf32>, vector<16x256xf32>, vector<16x256xf32>, vector<16x256xf32>, vector<16x256xf32>, vector<16x256xf32>, vector<16x256xf32>, vector<16x256xf32> -> vector<144x256xf32>
    %c0_7 = arith.constant 0 : index
    %c0_8 = arith.constant 0 : index
    %20 = vector.load %arg4[%c0_7, %c0_8] : memref<16x144xbf16, #tpu.memory_space<vmem>>, vector<16x144xbf16>
    %21 = arith.extf %20 : vector<16x144xbf16> to vector<16x144xf32>
    %cst_9 = arith.constant dense<0.000000e+00> : vector<16x256xf32>
    %22 = tpu.matmul %21, %19, %cst_9 {dimension_numbers = #tpu.dot_dimension_numbers<[1], [0], [0], [1], [0, 0, 1, 1], [], []>} : vector<16x144xf32>, vector<144x256xf32>, vector<16x256xf32> -> vector<16x256xf32>
    %c0_10 = arith.constant 0 : index
    %c0_11 = arith.constant 0 : index
    %23 = vector.load %arg5[%c0_10, %c0_11] : memref<16x1xf32, #tpu.memory_space<vmem>>, vector<16x1xf32>
    %24 = vector.broadcast %23 : vector<16x1xf32> to vector<16x256xf32>
    %25 = arith.addf %22, %24 : vector<16x256xf32>
    %cst_12 = arith.constant 0.000000e+00 : f32
    %26 = vector.broadcast %cst_12 : f32 to vector<16x256xf32>
    %27 = arith.maximumf %25, %26 : vector<16x256xf32>
    %28 = vector.extract_strided_slice %27 {offsets = [0, 1], sizes = [16, 255], strides = [1, 1]} : vector<16x256xf32> to vector<16x255xf32>
    %29 = vector.extract_strided_slice %27 {offsets = [0, 0], sizes = [16, 1], strides = [1, 1]} : vector<16x256xf32> to vector<16x1xf32>
    %30 = tpu.concatenate %28, %29 in 1 : vector<16x255xf32>, vector<16x1xf32> -> vector<16x256xf32>
    %31 = vector.extract_strided_slice %27 {offsets = [0, 2], sizes = [16, 254], strides = [1, 1]} : vector<16x256xf32> to vector<16x254xf32>
    %32 = vector.extract_strided_slice %27 {offsets = [0, 0], sizes = [16, 2], strides = [1, 1]} : vector<16x256xf32> to vector<16x2xf32>
    %33 = tpu.concatenate %31, %32 in 1 : vector<16x254xf32>, vector<16x2xf32> -> vector<16x256xf32>
    %34 = vector.extract_strided_slice %27 {offsets = [0, 14], sizes = [16, 242], strides = [1, 1]} : vector<16x256xf32> to vector<16x242xf32>
    %35 = vector.extract_strided_slice %27 {offsets = [0, 0], sizes = [16, 14], strides = [1, 1]} : vector<16x256xf32> to vector<16x14xf32>
    %36 = tpu.concatenate %34, %35 in 1 : vector<16x242xf32>, vector<16x14xf32> -> vector<16x256xf32>
    %37 = vector.extract_strided_slice %27 {offsets = [0, 15], sizes = [16, 241], strides = [1, 1]} : vector<16x256xf32> to vector<16x241xf32>
    %38 = vector.extract_strided_slice %27 {offsets = [0, 0], sizes = [16, 15], strides = [1, 1]} : vector<16x256xf32> to vector<16x15xf32>
    %39 = tpu.concatenate %37, %38 in 1 : vector<16x241xf32>, vector<16x15xf32> -> vector<16x256xf32>
    %40 = vector.extract_strided_slice %27 {offsets = [0, 16], sizes = [16, 240], strides = [1, 1]} : vector<16x256xf32> to vector<16x240xf32>
    %41 = vector.extract_strided_slice %27 {offsets = [0, 0], sizes = [16, 16], strides = [1, 1]} : vector<16x256xf32> to vector<16x16xf32>
    %42 = tpu.concatenate %40, %41 in 1 : vector<16x240xf32>, vector<16x16xf32> -> vector<16x256xf32>
    %43 = vector.extract_strided_slice %27 {offsets = [0, 28], sizes = [16, 228], strides = [1, 1]} : vector<16x256xf32> to vector<16x228xf32>
    %44 = vector.extract_strided_slice %27 {offsets = [0, 0], sizes = [16, 28], strides = [1, 1]} : vector<16x256xf32> to vector<16x28xf32>
    %45 = tpu.concatenate %43, %44 in 1 : vector<16x228xf32>, vector<16x28xf32> -> vector<16x256xf32>
    %46 = vector.extract_strided_slice %27 {offsets = [0, 29], sizes = [16, 227], strides = [1, 1]} : vector<16x256xf32> to vector<16x227xf32>
    %47 = vector.extract_strided_slice %27 {offsets = [0, 0], sizes = [16, 29], strides = [1, 1]} : vector<16x256xf32> to vector<16x29xf32>
    %48 = tpu.concatenate %46, %47 in 1 : vector<16x227xf32>, vector<16x29xf32> -> vector<16x256xf32>
    %49 = vector.extract_strided_slice %27 {offsets = [0, 30], sizes = [16, 226], strides = [1, 1]} : vector<16x256xf32> to vector<16x226xf32>
    %50 = vector.extract_strided_slice %27 {offsets = [0, 0], sizes = [16, 30], strides = [1, 1]} : vector<16x256xf32> to vector<16x30xf32>
    %51 = tpu.concatenate %49, %50 in 1 : vector<16x226xf32>, vector<16x30xf32> -> vector<16x256xf32>
    %52 = tpu.concatenate %27, %30, %33, %36, %39, %42, %45, %48, %51 in 0 : vector<16x256xf32>, vector<16x256xf32>, vector<16x256xf32>, vector<16x256xf32>, vector<16x256xf32>, vector<16x256xf32>, vector<16x256xf32>, vector<16x256xf32>, vector<16x256xf32> -> vector<144x256xf32>
    %c0_13 = arith.constant 0 : index
    %c0_14 = arith.constant 0 : index
    %53 = vector.load %arg6[%c0_13, %c0_14] : memref<16x144xbf16, #tpu.memory_space<vmem>>, vector<16x144xbf16>
    %54 = arith.extf %53 : vector<16x144xbf16> to vector<16x144xf32>
    %cst_15 = arith.constant dense<0.000000e+00> : vector<16x256xf32>
    %55 = tpu.matmul %54, %52, %cst_15 {dimension_numbers = #tpu.dot_dimension_numbers<[1], [0], [0], [1], [0, 0, 1, 1], [], []>} : vector<16x144xf32>, vector<144x256xf32>, vector<16x256xf32> -> vector<16x256xf32>
    %c0_16 = arith.constant 0 : index
    %c0_17 = arith.constant 0 : index
    %56 = vector.load %arg7[%c0_16, %c0_17] : memref<16x1xf32, #tpu.memory_space<vmem>>, vector<16x1xf32>
    %57 = vector.broadcast %56 : vector<16x1xf32> to vector<16x256xf32>
    %58 = arith.addf %55, %57 : vector<16x256xf32>
    %cst_18 = arith.constant 0.000000e+00 : f32
    %59 = vector.broadcast %cst_18 : f32 to vector<16x256xf32>
    %60 = arith.maximumf %58, %59 : vector<16x256xf32>
    %c0_19 = arith.constant 0 : index
    %c0_20 = arith.constant 0 : index
    %c0_21 = arith.constant 0 : index
    %61 = vector.load %arg8[%c0_19, %c0_20, %c0_21] : memref<16x256x128xbf16, #tpu.memory_space<vmem>>, vector<16x256x128xbf16>
    %62 = arith.extf %61 : vector<16x256x128xbf16> to vector<16x256x128xf32>
    %63 = vector.extract_strided_slice %60 {offsets = [0, 0], sizes = [1, 256], strides = [1, 1]} : vector<16x256xf32> to vector<1x256xf32>
    %64 = vector.extract_strided_slice %62 {offsets = [0, 0, 0], sizes = [1, 256, 128], strides = [1, 1, 1]} : vector<16x256x128xf32> to vector<1x256x128xf32>
    %65 = vector.shape_cast %64 : vector<1x256x128xf32> to vector<256x128xf32>
    %cst_22 = arith.constant dense<0.000000e+00> : vector<1x128xf32>
    %66 = tpu.matmul %63, %65, %cst_22 {dimension_numbers = #tpu.dot_dimension_numbers<[1], [0], [0], [1], [0, 0, 1, 1], [], []>} : vector<1x256xf32>, vector<256x128xf32>, vector<1x128xf32> -> vector<1x128xf32>
    %67 = vector.extract_strided_slice %60 {offsets = [1, 0], sizes = [1, 256], strides = [1, 1]} : vector<16x256xf32> to vector<1x256xf32>
    %68 = vector.extract_strided_slice %62 {offsets = [1, 0, 0], sizes = [1, 256, 128], strides = [1, 1, 1]} : vector<16x256x128xf32> to vector<1x256x128xf32>
    %69 = vector.shape_cast %68 : vector<1x256x128xf32> to vector<256x128xf32>
    %cst_23 = arith.constant dense<0.000000e+00> : vector<1x128xf32>
    %70 = tpu.matmul %67, %69, %cst_23 {dimension_numbers = #tpu.dot_dimension_numbers<[1], [0], [0], [1], [0, 0, 1, 1], [], []>} : vector<1x256xf32>, vector<256x128xf32>, vector<1x128xf32> -> vector<1x128xf32>
    %71 = arith.addf %66, %70 : vector<1x128xf32>
    %72 = vector.extract_strided_slice %60 {offsets = [2, 0], sizes = [1, 256], strides = [1, 1]} : vector<16x256xf32> to vector<1x256xf32>
    %73 = vector.extract_strided_slice %62 {offsets = [2, 0, 0], sizes = [1, 256, 128], strides = [1, 1, 1]} : vector<16x256x128xf32> to vector<1x256x128xf32>
    %74 = vector.shape_cast %73 : vector<1x256x128xf32> to vector<256x128xf32>
    %cst_24 = arith.constant dense<0.000000e+00> : vector<1x128xf32>
    %75 = tpu.matmul %72, %74, %cst_24 {dimension_numbers = #tpu.dot_dimension_numbers<[1], [0], [0], [1], [0, 0, 1, 1], [], []>} : vector<1x256xf32>, vector<256x128xf32>, vector<1x128xf32> -> vector<1x128xf32>
    %76 = arith.addf %71, %75 : vector<1x128xf32>
    %77 = vector.extract_strided_slice %60 {offsets = [3, 0], sizes = [1, 256], strides = [1, 1]} : vector<16x256xf32> to vector<1x256xf32>
    %78 = vector.extract_strided_slice %62 {offsets = [3, 0, 0], sizes = [1, 256, 128], strides = [1, 1, 1]} : vector<16x256x128xf32> to vector<1x256x128xf32>
    %79 = vector.shape_cast %78 : vector<1x256x128xf32> to vector<256x128xf32>
    %cst_25 = arith.constant dense<0.000000e+00> : vector<1x128xf32>
    %80 = tpu.matmul %77, %79, %cst_25 {dimension_numbers = #tpu.dot_dimension_numbers<[1], [0], [0], [1], [0, 0, 1, 1], [], []>} : vector<1x256xf32>, vector<256x128xf32>, vector<1x128xf32> -> vector<1x128xf32>
    %81 = arith.addf %76, %80 : vector<1x128xf32>
    %82 = vector.extract_strided_slice %60 {offsets = [4, 0], sizes = [1, 256], strides = [1, 1]} : vector<16x256xf32> to vector<1x256xf32>
    %83 = vector.extract_strided_slice %62 {offsets = [4, 0, 0], sizes = [1, 256, 128], strides = [1, 1, 1]} : vector<16x256x128xf32> to vector<1x256x128xf32>
    %84 = vector.shape_cast %83 : vector<1x256x128xf32> to vector<256x128xf32>
    %cst_26 = arith.constant dense<0.000000e+00> : vector<1x128xf32>
    %85 = tpu.matmul %82, %84, %cst_26 {dimension_numbers = #tpu.dot_dimension_numbers<[1], [0], [0], [1], [0, 0, 1, 1], [], []>} : vector<1x256xf32>, vector<256x128xf32>, vector<1x128xf32> -> vector<1x128xf32>
    %86 = arith.addf %81, %85 : vector<1x128xf32>
    %87 = vector.extract_strided_slice %60 {offsets = [5, 0], sizes = [1, 256], strides = [1, 1]} : vector<16x256xf32> to vector<1x256xf32>
    %88 = vector.extract_strided_slice %62 {offsets = [5, 0, 0], sizes = [1, 256, 128], strides = [1, 1, 1]} : vector<16x256x128xf32> to vector<1x256x128xf32>
    %89 = vector.shape_cast %88 : vector<1x256x128xf32> to vector<256x128xf32>
    %cst_27 = arith.constant dense<0.000000e+00> : vector<1x128xf32>
    %90 = tpu.matmul %87, %89, %cst_27 {dimension_numbers = #tpu.dot_dimension_numbers<[1], [0], [0], [1], [0, 0, 1, 1], [], []>} : vector<1x256xf32>, vector<256x128xf32>, vector<1x128xf32> -> vector<1x128xf32>
    %91 = arith.addf %86, %90 : vector<1x128xf32>
    %92 = vector.extract_strided_slice %60 {offsets = [6, 0], sizes = [1, 256], strides = [1, 1]} : vector<16x256xf32> to vector<1x256xf32>
    %93 = vector.extract_strided_slice %62 {offsets = [6, 0, 0], sizes = [1, 256, 128], strides = [1, 1, 1]} : vector<16x256x128xf32> to vector<1x256x128xf32>
    %94 = vector.shape_cast %93 : vector<1x256x128xf32> to vector<256x128xf32>
    %cst_28 = arith.constant dense<0.000000e+00> : vector<1x128xf32>
    %95 = tpu.matmul %92, %94, %cst_28 {dimension_numbers = #tpu.dot_dimension_numbers<[1], [0], [0], [1], [0, 0, 1, 1], [], []>} : vector<1x256xf32>, vector<256x128xf32>, vector<1x128xf32> -> vector<1x128xf32>
    %96 = arith.addf %91, %95 : vector<1x128xf32>
    %97 = vector.extract_strided_slice %60 {offsets = [7, 0], sizes = [1, 256], strides = [1, 1]} : vector<16x256xf32> to vector<1x256xf32>
    %98 = vector.extract_strided_slice %62 {offsets = [7, 0, 0], sizes = [1, 256, 128], strides = [1, 1, 1]} : vector<16x256x128xf32> to vector<1x256x128xf32>
    %99 = vector.shape_cast %98 : vector<1x256x128xf32> to vector<256x128xf32>
    %cst_29 = arith.constant dense<0.000000e+00> : vector<1x128xf32>
    %100 = tpu.matmul %97, %99, %cst_29 {dimension_numbers = #tpu.dot_dimension_numbers<[1], [0], [0], [1], [0, 0, 1, 1], [], []>} : vector<1x256xf32>, vector<256x128xf32>, vector<1x128xf32> -> vector<1x128xf32>
    %101 = arith.addf %96, %100 : vector<1x128xf32>
    %102 = vector.extract_strided_slice %60 {offsets = [8, 0], sizes = [1, 256], strides = [1, 1]} : vector<16x256xf32> to vector<1x256xf32>
    %103 = vector.extract_strided_slice %62 {offsets = [8, 0, 0], sizes = [1, 256, 128], strides = [1, 1, 1]} : vector<16x256x128xf32> to vector<1x256x128xf32>
    %104 = vector.shape_cast %103 : vector<1x256x128xf32> to vector<256x128xf32>
    %cst_30 = arith.constant dense<0.000000e+00> : vector<1x128xf32>
    %105 = tpu.matmul %102, %104, %cst_30 {dimension_numbers = #tpu.dot_dimension_numbers<[1], [0], [0], [1], [0, 0, 1, 1], [], []>} : vector<1x256xf32>, vector<256x128xf32>, vector<1x128xf32> -> vector<1x128xf32>
    %106 = arith.addf %101, %105 : vector<1x128xf32>
    %107 = vector.extract_strided_slice %60 {offsets = [9, 0], sizes = [1, 256], strides = [1, 1]} : vector<16x256xf32> to vector<1x256xf32>
    %108 = vector.extract_strided_slice %62 {offsets = [9, 0, 0], sizes = [1, 256, 128], strides = [1, 1, 1]} : vector<16x256x128xf32> to vector<1x256x128xf32>
    %109 = vector.shape_cast %108 : vector<1x256x128xf32> to vector<256x128xf32>
    %cst_31 = arith.constant dense<0.000000e+00> : vector<1x128xf32>
    %110 = tpu.matmul %107, %109, %cst_31 {dimension_numbers = #tpu.dot_dimension_numbers<[1], [0], [0], [1], [0, 0, 1, 1], [], []>} : vector<1x256xf32>, vector<256x128xf32>, vector<1x128xf32> -> vector<1x128xf32>
    %111 = arith.addf %106, %110 : vector<1x128xf32>
    %112 = vector.extract_strided_slice %60 {offsets = [10, 0], sizes = [1, 256], strides = [1, 1]} : vector<16x256xf32> to vector<1x256xf32>
    %113 = vector.extract_strided_slice %62 {offsets = [10, 0, 0], sizes = [1, 256, 128], strides = [1, 1, 1]} : vector<16x256x128xf32> to vector<1x256x128xf32>
    %114 = vector.shape_cast %113 : vector<1x256x128xf32> to vector<256x128xf32>
    %cst_32 = arith.constant dense<0.000000e+00> : vector<1x128xf32>
    %115 = tpu.matmul %112, %114, %cst_32 {dimension_numbers = #tpu.dot_dimension_numbers<[1], [0], [0], [1], [0, 0, 1, 1], [], []>} : vector<1x256xf32>, vector<256x128xf32>, vector<1x128xf32> -> vector<1x128xf32>
    %116 = arith.addf %111, %115 : vector<1x128xf32>
    %117 = vector.extract_strided_slice %60 {offsets = [11, 0], sizes = [1, 256], strides = [1, 1]} : vector<16x256xf32> to vector<1x256xf32>
    %118 = vector.extract_strided_slice %62 {offsets = [11, 0, 0], sizes = [1, 256, 128], strides = [1, 1, 1]} : vector<16x256x128xf32> to vector<1x256x128xf32>
    %119 = vector.shape_cast %118 : vector<1x256x128xf32> to vector<256x128xf32>
    %cst_33 = arith.constant dense<0.000000e+00> : vector<1x128xf32>
    %120 = tpu.matmul %117, %119, %cst_33 {dimension_numbers = #tpu.dot_dimension_numbers<[1], [0], [0], [1], [0, 0, 1, 1], [], []>} : vector<1x256xf32>, vector<256x128xf32>, vector<1x128xf32> -> vector<1x128xf32>
    %121 = arith.addf %116, %120 : vector<1x128xf32>
    %122 = vector.extract_strided_slice %60 {offsets = [12, 0], sizes = [1, 256], strides = [1, 1]} : vector<16x256xf32> to vector<1x256xf32>
    %123 = vector.extract_strided_slice %62 {offsets = [12, 0, 0], sizes = [1, 256, 128], strides = [1, 1, 1]} : vector<16x256x128xf32> to vector<1x256x128xf32>
    %124 = vector.shape_cast %123 : vector<1x256x128xf32> to vector<256x128xf32>
    %cst_34 = arith.constant dense<0.000000e+00> : vector<1x128xf32>
    %125 = tpu.matmul %122, %124, %cst_34 {dimension_numbers = #tpu.dot_dimension_numbers<[1], [0], [0], [1], [0, 0, 1, 1], [], []>} : vector<1x256xf32>, vector<256x128xf32>, vector<1x128xf32> -> vector<1x128xf32>
    %126 = arith.addf %121, %125 : vector<1x128xf32>
    %127 = vector.extract_strided_slice %60 {offsets = [13, 0], sizes = [1, 256], strides = [1, 1]} : vector<16x256xf32> to vector<1x256xf32>
    %128 = vector.extract_strided_slice %62 {offsets = [13, 0, 0], sizes = [1, 256, 128], strides = [1, 1, 1]} : vector<16x256x128xf32> to vector<1x256x128xf32>
    %129 = vector.shape_cast %128 : vector<1x256x128xf32> to vector<256x128xf32>
    %cst_35 = arith.constant dense<0.000000e+00> : vector<1x128xf32>
    %130 = tpu.matmul %127, %129, %cst_35 {dimension_numbers = #tpu.dot_dimension_numbers<[1], [0], [0], [1], [0, 0, 1, 1], [], []>} : vector<1x256xf32>, vector<256x128xf32>, vector<1x128xf32> -> vector<1x128xf32>
    %131 = arith.addf %126, %130 : vector<1x128xf32>
    %132 = vector.extract_strided_slice %60 {offsets = [14, 0], sizes = [1, 256], strides = [1, 1]} : vector<16x256xf32> to vector<1x256xf32>
    %133 = vector.extract_strided_slice %62 {offsets = [14, 0, 0], sizes = [1, 256, 128], strides = [1, 1, 1]} : vector<16x256x128xf32> to vector<1x256x128xf32>
    %134 = vector.shape_cast %133 : vector<1x256x128xf32> to vector<256x128xf32>
    %cst_36 = arith.constant dense<0.000000e+00> : vector<1x128xf32>
    %135 = tpu.matmul %132, %134, %cst_36 {dimension_numbers = #tpu.dot_dimension_numbers<[1], [0], [0], [1], [0, 0, 1, 1], [], []>} : vector<1x256xf32>, vector<256x128xf32>, vector<1x128xf32> -> vector<1x128xf32>
    %136 = arith.addf %131, %135 : vector<1x128xf32>
    %137 = vector.extract_strided_slice %60 {offsets = [15, 0], sizes = [1, 256], strides = [1, 1]} : vector<16x256xf32> to vector<1x256xf32>
    %138 = vector.extract_strided_slice %62 {offsets = [15, 0, 0], sizes = [1, 256, 128], strides = [1, 1, 1]} : vector<16x256x128xf32> to vector<1x256x128xf32>
    %139 = vector.shape_cast %138 : vector<1x256x128xf32> to vector<256x128xf32>
    %cst_37 = arith.constant dense<0.000000e+00> : vector<1x128xf32>
    %140 = tpu.matmul %137, %139, %cst_37 {dimension_numbers = #tpu.dot_dimension_numbers<[1], [0], [0], [1], [0, 0, 1, 1], [], []>} : vector<1x256xf32>, vector<256x128xf32>, vector<1x128xf32> -> vector<1x128xf32>
    %141 = arith.addf %136, %140 : vector<1x128xf32>
    %c0_38 = arith.constant 0 : index
    %c0_39 = arith.constant 0 : index
    %142 = vector.load %arg9[%c0_38, %c0_39] : memref<1x128xf32, #tpu.memory_space<vmem>>, vector<1x128xf32>
    %143 = arith.addf %141, %142 : vector<1x128xf32>
    %cst_40 = arith.constant 0.000000e+00 : f32
    %144 = vector.broadcast %cst_40 : f32 to vector<1x128xf32>
    %145 = arith.maximumf %143, %144 : vector<1x128xf32>
    %c0_41 = arith.constant 0 : index
    %c0_42 = arith.constant 0 : index
    %146 = vector.load %arg10[%c0_41, %c0_42] : memref<128x4xbf16, #tpu.memory_space<vmem>>, vector<128x4xbf16>
    %147 = arith.extf %146 : vector<128x4xbf16> to vector<128x4xf32>
    %cst_43 = arith.constant dense<0.000000e+00> : vector<1x4xf32>
    %148 = tpu.matmul %145, %147, %cst_43 {dimension_numbers = #tpu.dot_dimension_numbers<[1], [0], [0], [1], [0, 0, 1, 1], [], []>} : vector<1x128xf32>, vector<128x4xf32>, vector<1x4xf32> -> vector<1x4xf32>
    %c0_44 = arith.constant 0 : index
    %c0_45 = arith.constant 0 : index
    %149 = vector.load %arg11[%c0_44, %c0_45] : memref<1x4xf32, #tpu.memory_space<vmem>>, vector<1x4xf32>
    %150 = arith.addf %148, %149 : vector<1x4xf32>
    %151 = vector.shape_cast %150 : vector<1x4xf32> to vector<1x1x4xf32>
    %c0_46 = arith.constant 0 : index
    %c0_47 = arith.constant 0 : index
    %c0_48 = arith.constant 0 : index
    %152 = vector.load %arg12[%c0_46, %c0_47, %c0_48] : memref<1x1x4xf32, #tpu.memory_space<vmem>>, vector<1x1x4xf32>
    tpu.vector_store %arg12[%c0_46, %c0_47, %c0_48], %151 {strides = array<i32>} : memref<1x1x4xf32, #tpu.memory_space<vmem>>, vector<1x1x4xf32>,
    return
  }
  func.func @transform_0(%arg0: i32) -> (i32, i32, i32) {
    %c0_i32 = arith.constant 0 : i32
    %c0_i32_0 = arith.constant 0 : i32
    %c0_i32_1 = arith.constant 0 : i32
    return %arg0, %c0_i32, %c0_i32_0 : i32, i32, i32
  }
  func.func @transform_1(%arg0: i32) -> (i32, i32) {
    %c0_i32 = arith.constant 0 : i32
    %c0_i32_0 = arith.constant 0 : i32
    %c0_i32_1 = arith.constant 0 : i32
    return %c0_i32, %c0_i32_0 : i32, i32
  }
  func.func @transform_2(%arg0: i32) -> (i32, i32) {
    %c0_i32 = arith.constant 0 : i32
    %c0_i32_0 = arith.constant 0 : i32
    %c0_i32_1 = arith.constant 0 : i32
    return %c0_i32, %c0_i32_0 : i32, i32
  }
  func.func @transform_3(%arg0: i32) -> (i32, i32) {
    %c0_i32 = arith.constant 0 : i32
    %c0_i32_0 = arith.constant 0 : i32
    %c0_i32_1 = arith.constant 0 : i32
    return %c0_i32, %c0_i32_0 : i32, i32
  }
  func.func @transform_4(%arg0: i32) -> (i32, i32) {
    %c0_i32 = arith.constant 0 : i32
    %c0_i32_0 = arith.constant 0 : i32
    %c0_i32_1 = arith.constant 0 : i32
    return %c0_i32, %c0_i32_0 : i32, i32
  }
  func.func @transform_5(%arg0: i32) -> (i32, i32) {
    %c0_i32 = arith.constant 0 : i32
    %c0_i32_0 = arith.constant 0 : i32
    %c0_i32_1 = arith.constant 0 : i32
    return %c0_i32, %c0_i32_0 : i32, i32
  }
  func.func @transform_6(%arg0: i32) -> (i32, i32) {
    %c0_i32 = arith.constant 0 : i32
    %c0_i32_0 = arith.constant 0 : i32
    %c0_i32_1 = arith.constant 0 : i32
    return %c0_i32, %c0_i32_0 : i32, i32
  }
  func.func @transform_7(%arg0: i32) -> (i32, i32, i32) {
    %c0_i32 = arith.constant 0 : i32
    %c0_i32_0 = arith.constant 0 : i32
    %c0_i32_1 = arith.constant 0 : i32
    %c0_i32_2 = arith.constant 0 : i32
    return %c0_i32, %c0_i32_0, %c0_i32_1 : i32, i32, i32
  }
  func.func @transform_8(%arg0: i32) -> (i32, i32) {
    %c0_i32 = arith.constant 0 : i32
    %c0_i32_0 = arith.constant 0 : i32
    %c0_i32_1 = arith.constant 0 : i32
    return %c0_i32, %c0_i32_0 : i32, i32
  }
  func.func @transform_9(%arg0: i32) -> (i32, i32) {
    %c0_i32 = arith.constant 0 : i32
    %c0_i32_0 = arith.constant 0 : i32
    %c0_i32_1 = arith.constant 0 : i32
    return %c0_i32, %c0_i32_0 : i32, i32
  }
  func.func @transform_10(%arg0: i32) -> (i32, i32) {
    %c0_i32 = arith.constant 0 : i32
    %c0_i32_0 = arith.constant 0 : i32
    %c0_i32_1 = arith.constant 0 : i32
    return %c0_i32, %c0_i32_0 : i32, i32
  }
  func.func @transform_11(%arg0: i32) -> (i32, i32, i32) {
    %c0_i32 = arith.constant 0 : i32
    %c0_i32_0 = arith.constant 0 : i32
    %c0_i32_1 = arith.constant 0 : i32
    return %arg0, %c0_i32, %c0_i32_0 : i32, i32, i32
  }
}

</mosaic_0001>

<llo_original>
// kernel: dqn_forward.1
$region0: #{dqn_forward.1}
  #allocation0 [shape = 'u32[]', space=smem, size = 0x4, offset = 0x4, fixed_abs, tag = 'smem constant byte address 0x4 - core index']
  #allocation1 [shape = 'u32[144,128]{1,0:T(1,128)}', space=vmem, size = 0x12000, scoped, tag = 'internal scratch']
  %s0 = inlined_call_operand.vmem [shape: f32[2,9,2304], index: 0, kind: input, shape index: {}]
  %s1 = inlined_call_operand.vmem [shape: bf16[16,9], index: 1, kind: input, shape index: {}]
  %s2 = inlined_call_operand.vmem [shape: f32[16,1], index: 2, kind: input, shape index: {}]
  %s3 = inlined_call_operand.vmem [shape: bf16[16,144], index: 3, kind: input, shape index: {}]
  %s4 = inlined_call_operand.vmem [shape: f32[16,1], index: 4, kind: input, shape index: {}]
  %s5 = inlined_call_operand.vmem [shape: bf16[16,144], index: 5, kind: input, shape index: {}]
  %s6 = inlined_call_operand.vmem [shape: f32[16,1], index: 6, kind: input, shape index: {}]
  %s7 = inlined_call_operand.vmem [shape: bf16[16,256,128], index: 7, kind: input, shape index: {}]
  %s8 = inlined_call_operand.vmem [shape: f32[1,128], index: 8, kind: input, shape index: {}]
  %s9 = inlined_call_operand.vmem [shape: bf16[128,4], index: 9, kind: input, shape index: {}]
  %s10 = inlined_call_operand.vmem [shape: f32[1,4], index: 10, kind: input, shape index: {}]
  %s11 = inlined_call_operand.hbm [shape: f32[2,1,4], index: 11, kind: output, shape index: {}]
  %s12 = sld [smem:[#allocation0]]
  $region77: #{dqn_forward.1} parent=0
    _
  %s14 = ssub.s32 1, %s12
  %s15 = scalar_select 0, %s14, %s12
  $region1: #{dqn_forward.1} parent=0
    #allocation2 [shape = 'u8[1024]{0}', space=vmem, size = 0x400, scoped, tag = 'output window, operand 0']
    #allocation3 [shape = 's32[2]{0}', space=sflag, size = 0x8, scoped, tag = 'scoped memory for dqn_forward.1']
    %16 = vsyncpa [#allocation3], 0
    %s17 = scalar_lea.sflag [#allocation3], 1
    %18 = vsyncpa %s17, 0
    loop: start=0, step=1, limit=4
    $region2: #{dqn_forward.1} parent=1 // loop_pre_header
      _
    $region3: #{dqn_forward.1} parent=1 // loop_header
      %s20 = sphi 0, %s24
      %p21 = scmp.ge.s32.totalorder %s20, 4
      %s30 = sphi 0, %s32
      %s33 = sphi 0, %s30
      %s34 = sphi 0, %s33
      %s50 = sphi 0, %s34
      %s54 = sphi 0, %s54
      %s56 = sphi 0, %s54
      %s57 = sphi 0, %s56
      %s71 = sphi 0, %s57
      %s75 = sphi 0, %s75
      %s77 = sphi 0, %s75
      %s78 = sphi 0, %s77
      %s92 = sphi 0, %s78
      %s96 = sphi 0, %s96
      %s98 = sphi 0, %s96
      %s99 = sphi 0, %s98
      %s113 = sphi 0, %s99
      %s117 = sphi 0, %s117
      %s119 = sphi 0, %s117
      %s120 = sphi 0, %s119
      %s134 = sphi 0, %s120
      %s138 = sphi 0, %s138
      %s140 = sphi 0, %s138
      %s141 = sphi 0, %s140
      %s155 = sphi 0, %s141
      %s159 = sphi 0, %s159
      %s161 = sphi 0, %s159
      %s162 = sphi 0, %s161
      %s176 = sphi 0, %s162
      %s180 = sphi 0, %s180
      %s182 = sphi 0, %s180
      %s183 = sphi 0, %s182
      %s197 = sphi 0, %s183
      %s201 = sphi 0, %s201
      %s203 = sphi 0, %s201
      %s204 = sphi 0, %s203
      %s218 = sphi 0, %s204
      %s222 = sphi 0, %s222
      %s224 = sphi 0, %s222
      %s225 = sphi 0, %s224
      %s239 = sphi 0, %s225
      %s243 = sphi 0, %s243
      %s245 = sphi 0, %s243
      %s246 = sphi 0, %s245
      %s260 = sphi 0, %s246
      %s266 = sphi 0, %s268
      %s269 = sphi 0, %s266
      %s270 = sphi 0, %s269
      %s286 = sphi 0, %s270
    $region4: #{dqn_forward.1} parent=1 // loop_header_branch
      %23 = sbr.rel (%p21) target = $region8
    $region5: #{dqn_forward.1} parent=1 // loop_body
      %s25 = ssub.s32 %s20, 1
      %s26 = ssub.s32 %s20, 2
      %s27 = sadd.s32 %s20, 1
      %s28 = ssub.s32 %s20, %s27
      %p29 = scmp.eq.s32.totalorder %s28, 0
      %s31 = sadd.s32 %s30, 1
      %s32 = scalar_select %p29, %s30, %s31
      %p35 = pneg %p29
      %p36 = scmp.eq.s32.totalorder %s20, 1
      %p37 = por %p35, %p36
      %p38 = scmp.ne.s32.totalorder %s30, %s33
      %p39 = scmp.eq.s32.totalorder %s20, 0
      %p40 = por %p38, %p39
      %p41 = scmp.ne.s32.totalorder %s30, %s33
      %p42 = scmp.eq.s32.totalorder %s25, 1
      %p43 = por %p41, %p42
      %p44 = scmp.ne.s32.totalorder %s33, %s34
      %p45 = scmp.eq.s32.totalorder %s25, 0
      %p46 = por %p44, %p45
      %p47 = scmp.ne.s32.totalorder %s33, %s34
      %p48 = scmp.eq.s32.totalorder %s26, 1
      %p49 = por %p47, %p48
      %p51 = scmp.ne.s32.totalorder %s34, %s50
      %p52 = scmp.eq.s32.totalorder %s26, 0
      %p53 = por %p51, %p52
      %s55 = sadd.s32 %s54, 1
      %p58 = scmp.eq.s32.totalorder %s20, 1
      %p59 = scmp.ne.s32.totalorder %s54, %s56
      %p60 = scmp.eq.s32.totalorder %s20, 0
      %p61 = por %p59, %p60
      %p62 = scmp.ne.s32.totalorder %s54, %s56
      %p63 = scmp.eq.s32.totalorder %s25, 1
      %p64 = por %p62, %p63
      %p65 = scmp.ne.s32.totalorder %s56, %s57
      %p66 = scmp.eq.s32.totalorder %s25, 0
      %p67 = por %p65, %p66
      %p68 = scmp.ne.s32.totalorder %s56, %s57
      %p69 = scmp.eq.s32.totalorder %s26, 1
      %p70 = por %p68, %p69
      %p72 = scmp.ne.s32.totalorder %s57, %s71
      %p73 = scmp.eq.s32.totalorder %s26, 0
      %p74 = por %p72, %p73
      %s76 = sadd.s32 %s75, 1
      %p79 = scmp.eq.s32.totalorder %s20, 1
      %p80 = scmp.ne.s32.totalorder %s75, %s77
      %p81 = scmp.eq.s32.totalorder %s20, 0
      %p82 = por %p80, %p81
      %p83 = scmp.ne.s32.totalorder %s75, %s77
      %p84 = scmp.eq.s32.totalorder %s25, 1
      %p85 = por %p83, %p84
      %p86 = scmp.ne.s32.totalorder %s77, %s78
      %p87 = scmp.eq.s32.totalorder %s25, 0
      %p88 = por %p86, %p87
      %p89 = scmp.ne.s32.totalorder %s77, %s78
      %p90 = scmp.eq.s32.totalorder %s26, 1
      %p91 = por %p89, %p90
      %p93 = scmp.ne.s32.totalorder %s78, %s92
      %p94 = scmp.eq.s32.totalorder %s26, 0
      %p95 = por %p93, %p94
      %s97 = sadd.s32 %s96, 1
      %p100 = scmp.eq.s32.totalorder %s20, 1
      %p101 = scmp.ne.s32.totalorder %s96, %s98
      %p102 = scmp.eq.s32.totalorder %s20, 0
      %p103 = por %p101, %p102
      %p104 = scmp.ne.s32.totalorder %s96, %s98
      %p105 = scmp.eq.s32.totalorder %s25, 1
      %p106 = por %p104, %p105
      %p107 = scmp.ne.s32.totalorder %s98, %s99
      %p108 = scmp.eq.s32.totalorder %s25, 0
      %p109 = por %p107, %p108
      %p110 = scmp.ne.s32.totalorder %s98, %s99
      %p111 = scmp.eq.s32.totalorder %s26, 1
      %p112 = por %p110, %p111
      %p114 = scmp.ne.s32.totalorder %s99, %s113
      %p115 = scmp.eq.s32.totalorder %s26, 0
      %p116 = por %p114, %p115
      %s118 = sadd.s32 %s117, 1
      %p121 = scmp.eq.s32.totalorder %s20, 1
      %p122 = scmp.ne.s32.totalorder %s117, %s119
      %p123 = scmp.eq.s32.totalorder %s20, 0
      %p124 = por %p122, %p123
      %p125 = scmp.ne.s32.totalorder %s117, %s119
      %p126 = scmp.eq.s32.totalorder %s25, 1
      %p127 = por %p125, %p126
      %p128 = scmp.ne.s32.totalorder %s119, %s120
      %p129 = scmp.eq.s32.totalorder %s25, 0
      %p130 = por %p128, %p129
      %p131 = scmp.ne.s32.totalorder %s119, %s120
      %p132 = scmp.eq.s32.totalorder %s26, 1
      %p133 = por %p131, %p132
      %p135 = scmp.ne.s32.totalorder %s120, %s134
      %p136 = scmp.eq.s32.totalorder %s26, 0
      %p137 = por %p135, %p136
      %s139 = sadd.s32 %s138, 1
      %p142 = scmp.eq.s32.totalorder %s20, 1
      %p143 = scmp.ne.s32.totalorder %s138, %s140
      %p144 = scmp.eq.s32.totalorder %s20, 0
      %p145 = por %p143, %p144
      %p146 = scmp.ne.s32.totalorder %s138, %s140
      %p147 = scmp.eq.s32.totalorder %s25, 1
      %p148 = por %p146, %p147
      %p149 = scmp.ne.s32.totalorder %s140, %s141
      %p150 = scmp.eq.s32.totalorder %s25, 0
      %p151 = por %p149, %p150
      %p152 = scmp.ne.s32.totalorder %s140, %s141
      %p153 = scmp.eq.s32.totalorder %s26, 1
      %p154 = por %p152, %p153
      %p156 = scmp.ne.s32.totalorder %s141, %s155
      %p157 = scmp.eq.s32.totalorder %s26, 0
      %p158 = por %p156, %p157
      %s160 = sadd.s32 %s159, 1
      %p163 = scmp.eq.s32.totalorder %s20, 1
      %p164 = scmp.ne.s32.totalorder %s159, %s161
      %p165 = scmp.eq.s32.totalorder %s20, 0
      %p166 = por %p164, %p165
      %p167 = scmp.ne.s32.totalorder %s159, %s161
      %p168 = scmp.eq.s32.totalorder %s25, 1
      %p169 = por %p167, %p168
      %p170 = scmp.ne.s32.totalorder %s161, %s162
      %p171 = scmp.eq.s32.totalorder %s25, 0
      %p172 = por %p170, %p171
      %p173 = scmp.ne.s32.totalorder %s161, %s162
      %p174 = scmp.eq.s32.totalorder %s26, 1
      %p175 = por %p173, %p174
      %p177 = scmp.ne.s32.totalorder %s162, %s176
      %p178 = scmp.eq.s32.totalorder %s26, 0
      %p179 = por %p177, %p178
      %s181 = sadd.s32 %s180, 1
      %p184 = scmp.eq.s32.totalorder %s20, 1
      %p185 = scmp.ne.s32.totalorder %s180, %s182
      %p186 = scmp.eq.s32.totalorder %s20, 0
      %p187 = por %p185, %p186
      %p188 = scmp.ne.s32.totalorder %s180, %s182
      %p189 = scmp.eq.s32.totalorder %s25, 1
      %p190 = por %p188, %p189
      %p191 = scmp.ne.s32.totalorder %s182, %s183
      %p192 = scmp.eq.s32.totalorder %s25, 0
      %p193 = por %p191, %p192
      %p194 = scmp.ne.s32.totalorder %s182, %s183
      %p195 = scmp.eq.s32.totalorder %s26, 1
      %p196 = por %p194, %p195
      %p198 = scmp.ne.s32.totalorder %s183, %s197
      %p199 = scmp.eq.s32.totalorder %s26, 0
      %p200 = por %p198, %p199
      %s202 = sadd.s32 %s201, 1
      %p205 = scmp.eq.s32.totalorder %s20, 1
      %p206 = scmp.ne.s32.totalorder %s201, %s203
      %p207 = scmp.eq.s32.totalorder %s20, 0
      %p208 = por %p206, %p207
      %p209 = scmp.ne.s32.totalorder %s201, %s203
      %p210 = scmp.eq.s32.totalorder %s25, 1
      %p211 = por %p209, %p210
      %p212 = scmp.ne.s32.totalorder %s203, %s204
      %p213 = scmp.eq.s32.totalorder %s25, 0
      %p214 = por %p212, %p213
      %p215 = scmp.ne.s32.totalorder %s203, %s204
      %p216 = scmp.eq.s32.totalorder %s26, 1
      %p217 = por %p215, %p216
      %p219 = scmp.ne.s32.totalorder %s204, %s218
      %p220 = scmp.eq.s32.totalorder %s26, 0
      %p221 = por %p219, %p220
      %s223 = sadd.s32 %s222, 1
      %p226 = scmp.eq.s32.totalorder %s20, 1
      %p227 = scmp.ne.s32.totalorder %s222, %s224
      %p228 = scmp.eq.s32.totalorder %s20, 0
      %p229 = por %p227, %p228
      %p230 = scmp.ne.s32.totalorder %s222, %s224
      %p231 = scmp.eq.s32.totalorder %s25, 1
      %p232 = por %p230, %p231
      %p233 = scmp.ne.s32.totalorder %s224, %s225
      %p234 = scmp.eq.s32.totalorder %s25, 0
      %p235 = por %p233, %p234
      %p236 = scmp.ne.s32.totalorder %s224, %s225
      %p237 = scmp.eq.s32.totalorder %s26, 1
      %p238 = por %p236, %p237
      %p240 = scmp.ne.s32.totalorder %s225, %s239
      %p241 = scmp.eq.s32.totalorder %s26, 0
      %p242 = por %p240, %p241
      %s244 = sadd.s32 %s243, 1
      %p247 = scmp.eq.s32.totalorder %s20, 1
      %p248 = scmp.ne.s32.totalorder %s243, %s245
      %p249 = scmp.eq.s32.totalorder %s20, 0
      %p250 = por %p248, %p249
      %p251 = scmp.ne.s32.totalorder %s243, %s245
      %p252 = scmp.eq.s32.totalorder %s25, 1
      %p253 = por %p251, %p252
      %p254 = scmp.ne.s32.totalorder %s245, %s246
      %p255 = scmp.eq.s32.totalorder %s25, 0
      %p256 = por %p254, %p255
      %p257 = scmp.ne.s32.totalorder %s245, %s246
      %p258 = scmp.eq.s32.totalorder %s26, 1
      %p259 = por %p257, %p258
      %p261 = scmp.ne.s32.totalorder %s246, %s260
      %p262 = scmp.eq.s32.totalorder %s26, 0
      %p263 = por %p261, %p262
      %s264 = ssub.s32 %s20, %s27
      %p265 = scmp.eq.s32.totalorder %s264, 0
      %s267 = sadd.s32 %s266, 1
      %s268 = scalar_select %p265, %s266, %s267
      %p271 = pneg %p265
      %p272 = scmp.eq.s32.totalorder %s20, 1
      %p273 = por %p271, %p272
      %p274 = scmp.ne.s32.totalorder %s266, %s269
      %p275 = scmp.eq.s32.totalorder %s20, 0
      %p276 = por %p274, %p275
      %p277 = scmp.ne.s32.totalorder %s266, %s269
      %p278 = scmp.eq.s32.totalorder %s25, 1
      %p279 = por %p277, %p278
      %p280 = scmp.ne.s32.totalorder %s269, %s270
      %p281 = scmp.eq.s32.totalorder %s25, 0
      %p282 = por %p280, %p281
      %p283 = scmp.ne.s32.totalorder %s269, %s270
      %p284 = scmp.eq.s32.totalorder %s26, 1
      %p285 = por %p283, %p284
      %p287 = scmp.ne.s32.totalorder %s270, %s286
      %p288 = scmp.eq.s32.totalorder %s26, 0
      %p289 = por %p287, %p288
      %p290 = scmp.le.s32.totalorder 1, %s20
      %p291 = scmp.lt.s32.totalorder %s20, 3
      %p292 = pnand %p290, %p291
      %p293 = pneg %p292
      // Predicated region
      $region9: #{dqn_forward.1} parent=5 // pred_check
        _
      $region10: #{dqn_forward.1} parent=5 // pred_check_branch
        %295 = sbr.rel (%p292) target = $region12
      $region11: #{dqn_forward.1} parent=5 // pred_region
        %s296 = ssub.s32 %s20, 1
        // Predicated region
        $region13: #{dqn_forward.1} parent=11 // pred_check
          %p297 = pneg %p67
        $region14: #{dqn_forward.1} parent=11 // pred_check_branch
          %299 = sbr.rel (%p297) target = $region16
        $region15: #{dqn_forward.1} parent=11 // pred_region
          _
        $region16: #{dqn_forward.1} parent=11 // pred_fallthru
          _
        // Predicated region
        $region17: #{dqn_forward.1} parent=11 // pred_check
          %p300 = pneg %p88
        $region18: #{dqn_forward.1} parent=11 // pred_check_branch
          %302 = sbr.rel (%p300) target = $region20
        $region19: #{dqn_forward.1} parent=11 // pred_region
          _
        $region20: #{dqn_forward.1} parent=11 // pred_fallthru
          _
        // Predicated region
        $region21: #{dqn_forward.1} parent=11 // pred_check
          %p303 = pneg %p109
        $region22: #{dqn_forward.1} parent=11 // pred_check_branch
          %305 = sbr.rel (%p303) target = $region24
        $region23: #{dqn_forward.1} parent=11 // pred_region
          _
        $region24: #{dqn_forward.1} parent=11 // pred_fallthru
          _
        // Predicated region
        $region25: #{dqn_forward.1} parent=11 // pred_check
          %p306 = pneg %p130
        $region26: #{dqn_forward.1} parent=11 // pred_check_branch
          %308 = sbr.rel (%p306) target = $region28
        $region27: #{dqn_forward.1} parent=11 // pred_region
          _
        $region28: #{dqn_forward.1} parent=11 // pred_fallthru
          _
        // Predicated region
        $region29: #{dqn_forward.1} parent=11 // pred_check
          %p309 = pneg %p151
        $region30: #{dqn_forward.1} parent=11 // pred_check_branch
          %311 = sbr.rel (%p309) target = $region32
        $region31: #{dqn_forward.1} parent=11 // pred_region
          _
        $region32: #{dqn_forward.1} parent=11 // pred_fallthru
          _
        // Predicated region
        $region33: #{dqn_forward.1} parent=11 // pred_check
          %p312 = pneg %p172
        $region34: #{dqn_forward.1} parent=11 // pred_check_branch
          %314 = sbr.rel (%p312) target = $region36
        $region35: #{dqn_forward.1} parent=11 // pred_region
          _
        $region36: #{dqn_forward.1} parent=11 // pred_fallthru
          _
        // Predicated region
        $region37: #{dqn_forward.1} parent=11 // pred_check
          %p315 = pneg %p193
        $region38: #{dqn_forward.1} parent=11 // pred_check_branch
          %317 = sbr.rel (%p315) target = $region40
        $region39: #{dqn_forward.1} parent=11 // pred_region
          _
        $region40: #{dqn_forward.1} parent=11 // pred_fallthru
          _
        // Predicated region
        $region41: #{dqn_forward.1} parent=11 // pred_check
          %p318 = pneg %p214
        $region42: #{dqn_forward.1} parent=11 // pred_check_branch
          %320 = sbr.rel (%p318) target = $region44
        $region43: #{dqn_forward.1} parent=11 // pred_region
          _
        $region44: #{dqn_forward.1} parent=11 // pred_fallthru
          _
        // Predicated region
        $region45: #{dqn_forward.1} parent=11 // pred_check
          %p321 = pneg %p235
        $region46: #{dqn_forward.1} parent=11 // pred_check_branch
          %323 = sbr.rel (%p321) target = $region48
        $region47: #{dqn_forward.1} parent=11 // pred_region
          _
        $region48: #{dqn_forward.1} parent=11 // pred_fallthru
          _
        // Predicated region
        $region49: #{dqn_forward.1} parent=11 // pred_check
          %p324 = pneg %p256
        $region50: #{dqn_forward.1} parent=11 // pred_check_branch
          %326 = sbr.rel (%p324) target = $region52
        $region51: #{dqn_forward.1} parent=11 // pred_region
          _
        $region52: #{dqn_forward.1} parent=11 // pred_fallthru
          _
      $region12: #{dqn_forward.1} parent=5 // pred_fallthru
        _
      %p327 = scmp.lt.s32.totalorder %s20, 2
      // Predicated region
      $region53: #{dqn_forward.1} parent=5 // pred_check
        %p328 = pneg %p327
      $region54: #{dqn_forward.1} parent=5 // pred_check_branch
        %330 = sbr.rel (%p328) target = $region56
      $region55: #{dqn_forward.1} parent=5 // pred_region
        // Predicated region
        $region57: #{dqn_forward.1} parent=55 // pred_check
          %p331 = pneg %p40
        $region58: #{dqn_forward.1} parent=55 // pred_check_branch
          %333 = sbr.rel (%p331) target = $region60
        $region59: #{dqn_forward.1} parent=55 // pred_region
          %p334 = scmp.lt.s32.totalorder %s20, 1
          %s335 = scalar_select %p334, %s20, 1
          %s336 = smul.addr %s335, 36
          %s337 = smul.addr %s336, 8
          %s338 = scalar_lea.vmem %s0, %s337
        $region60: #{dqn_forward.1} parent=55 // pred_fallthru
          _
      $region56: #{dqn_forward.1} parent=5 // pred_fallthru
        _
      %p339 = scmp.le.s32.totalorder 1, %s20
      %p340 = scmp.lt.s32.totalorder %s20, 3
      %p341 = pnand %p339, %p340
      %p342 = pneg %p341
      // Predicated region
      $region61: #{dqn_forward.1} parent=5 // pred_check
        _
      $region62: #{dqn_forward.1} parent=5 // pred_check_branch
        %344 = sbr.rel (%p341) target = $region64
      $region63: #{dqn_forward.1} parent=5 // pred_region
        %s345 = ssub.s32 %s20, 1
        %p346 = scmp.lt.s32.totalorder %s25, 1
        %s347 = scalar_select %p346, %s25, 1
        %s348 = smul.addr %s347, 36
        %s349 = smul.addr %s348, 8
        %s350 = scalar_lea.vmem %s0, %s349
        %p351 = pneg %p46
        %p352 = pneg %p43
        %p353 = pneg %p67
        %p354 = pneg %p64
        %p355 = pneg %p88
        %p356 = pneg %p85
        %p357 = pneg %p109
        %p358 = pneg %p106
        %p359 = pneg %p130
        %p360 = pneg %p127
        %p361 = pneg %p151
        %p362 = pneg %p148
        %p363 = pneg %p172
        %p364 = pneg %p169
        %p365 = pneg %p193
        %p366 = pneg %p190
        %p367 = pneg %p214
        %p368 = pneg %p211
        %p369 = pneg %p235
        %p370 = pneg %p232
        %p371 = pneg %p256
        %p372 = pneg %p253
        %p373 = pneg %p282
        %p374 = pneg %p279
        %s375 = sand.u32 %s269, 1
        %s376 = scalar_lea.sflag [#allocation3], %s375
        %s377 = sand.u32 %s269, 1
        %s378 = scalar_lea.vmem [#allocation2], %s377
        %p379 = scmp.lt.s32.totalorder %s25, 1
        %s380 = scalar_select %p379, %s25, 1
        %s381 = smul.addr %s380, 36
        %s382 = smul.addr %s381, 8
        %s383 = scalar_lea.vmem %s0, %s382
        %v384 = vld [vmem:[%s383] sm:$0xff]
        %v385 = vld [vmem:[%s383 + $0x8] sm:$0xff]
        %v386 = vld [vmem:[%s383 + $0x10] sm:$0xff]
        %v387 = vld [vmem:[%s383 + $0x18] sm:$0xff]
        %v388 = vld [vmem:[%s383 + $0x20] sm:$0xff]
        %v389 = vld [vmem:[%s383 + $0x28] sm:$0xff]
        %v390 = vld [vmem:[%s383 + $0x30] sm:$0xff]
        %v391 = vld [vmem:[%s383 + $0x38] sm:$0xff]
        %v392 = vld [vmem:[%s383 + $0x40] sm:$0xff]
        %v393 = vld [vmem:[%s383 + $0x48] sm:$0xff]
        %v394 = vld [vmem:[%s383 + $0x50] sm:$0xff]
        %v395 = vld [vmem:[%s383 + $0x58] sm:$0xff]
        %v396 = vld [vmem:[%s383 + $0x60] sm:$0xff]
        %v397 = vld [vmem:[%s383 + $0x68] sm:$0xff]
        %v398 = vld [vmem:[%s383 + $0x70] sm:$0xff]
        %v399 = vld [vmem:[%s383 + $0x78] sm:$0xff]
        %v400 = vld [vmem:[%s383 + $0x80] sm:$0xff]
        %v401 = vld [vmem:[%s383 + $0x88] sm:$0xff]
        %v402 = vld [vmem:[%s383 + $0x90] sm:$0x1]
        %v403 = vld [vmem:[%s383 + $0x98] sm:$0x1]
        %v404 = vld [vmem:[%s383 + $0xa0] sm:$0x1]
        %v405 = vld [vmem:[%s383 + $0xa8] sm:$0x1]
        %v406 = vld [vmem:[%s383 + $0xb0] sm:$0x1]
        %v407 = vld [vmem:[%s383 + $0xb8] sm:$0x1]
        %v408 = vld [vmem:[%s383 + $0xc0] sm:$0x1]
        %v409 = vld [vmem:[%s383 + $0xc8] sm:$0x1]
        %v410 = vld [vmem:[%s383 + $0xd0] sm:$0x1]
        %v411 = vld [vmem:[%s383 + $0xd8] sm:$0x1]
        %v412 = vld [vmem:[%s383 + $0xe0] sm:$0x1]
        %v413 = vld [vmem:[%s383 + $0xe8] sm:$0x1]
        %v414 = vld [vmem:[%s383 + $0xf0] sm:$0x1]
        %v415 = vld [vmem:[%s383 + $0xf8] sm:$0x1]
        %v416 = vld [vmem:[%s383 + $0x100] sm:$0x1]
        %v417 = vld [vmem:[%s383 + $0x108] sm:$0x1]
        %v418 = vld [vmem:[%s383 + $0x110] sm:$0x1]
        %v419 = vld [vmem:[%s383 + $0x118] sm:$0x1]
        %v420 = vld [vmem:[%s1] sm:$0xf]
        %v421 = vld [vmem:[%s1 + $0x4] sm:$0xf]
        %v422 = vunpack.c.l.bf16 %v420
        %v423 = vunpack.c.l.bf16 %v421
        %v424 = vld [vmem:[%s2] sm:$0xff]
        %v425 = vld [vmem:[%s2 + $0x8] sm:$0xff]
        %427 = vset.pattern.permute.xlu0 0
        %428 = vperm.xlu0 %427, %v424
        %v429 = vpop.permute.xlu0 %428
        %432 = vset.pattern.permute.xlu0 0
        %433 = vperm.xlu0 %432, %v425
        %v434 = vpop.permute.xlu0 %433
        %vm436 = vcmask 72704
        %v438 = vsel %vm436, %v422, 0
        %v441 = vsel %vm436, %v423, 0
        %vm443 = vcmask 1040384
        %v445 = vsel %vm443, %v402, 0
        %v448 = vsel %vm443, %v403, 0
        %v451 = vsel %vm443, %v404, 0
        %v454 = vsel %vm443, %v405, 0
        %v457 = vsel %vm443, %v406, 0
        %v460 = vsel %vm443, %v407, 0
        %v463 = vsel %vm443, %v408, 0
        %v466 = vsel %vm443, %v409, 0
        %v469 = vsel %vm443, %v410, 0
        %v472 = vsel %vm443, %v411, 0
        %v475 = vsel %vm443, %v412, 0
        %v478 = vsel %vm443, %v413, 0
        %v481 = vsel %vm443, %v414, 0
        %v484 = vsel %vm443, %v415, 0
        %v487 = vsel %vm443, %v416, 0
        %v490 = vsel %vm443, %v417, 0
        %v493 = vsel %vm443, %v418, 0
        %v496 = vsel %vm443, %v419, 0
        %498 = vmatprep.subr.mxu0 0.0
        %499 = vmatpush1.msra.mxu0 0.0
        %500 = vmatprep.subr.mxu0 0.0
        %501 = vmatpush1.msra.mxu0 0.0
        %502 = vmatprep.subr.mxu0 0.0
        %503 = vmatpush1.msra.mxu0 0.0
        %504 = vmatprep.subr.mxu0 0.0
        %505 = vmatpush1.msra.mxu0 0.0
        %506 = vmatprep.subr.mxu0 0.0
        %507 = vmatpush1.msra.mxu0 0.0
        %508 = vmatprep.subr.mxu0 0.0
        %509 = vmatpush1.msra.mxu0 0.0
        %510 = vmatprep.subr.mxu0 0.0
        %511 = vmatpush1.msra.mxu0 0.0
        %512 = vmatprep.subr.mxu0 0.0
        %513 = vmatpush1.msra.mxu0 0.0
        %514 = vmatprep.subr.mxu0 0.0
        %515 = vmatpush1.msra.mxu0 0.0
        %516 = vmatprep.subr.mxu0 0.0
        %517 = vmatpush1.msra.mxu0 0.0
        %518 = vmatprep.subr.mxu0 0.0
        %519 = vmatpush1.msra.mxu0 0.0
        %520 = vmatprep.subr.mxu0 0.0
        %521 = vmatpush1.msra.mxu0 0.0
        %522 = vmatprep.subr.mxu0 0.0
        %523 = vmatpush1.msra.mxu0 0.0
        %524 = vmatprep.subr.mxu0 0.0
        %525 = vmatpush1.msra.mxu0 0.0
        %526 = vmatprep.subr.mxu0 %v448
        %527 = vmatpush1.msra.mxu0 %v445
        %528 = vmatprep.subr.mxu0 %v385
        %529 = vmatpush1.msra.mxu0 %v384
        %530 = vmatprep.subr.mxu0 0.0
        %531 = vmatpush2.msra.mxu0 0.0
        %532 = vmatprep.subr.mxu0 0.0
        %533 = vmatpush2.msra.mxu0 0.0
        %534 = vmatprep.subr.mxu0 0.0
        %535 = vmatpush2.msra.mxu0 0.0
        %536 = vmatprep.subr.mxu0 0.0
        %537 = vmatpush2.msra.mxu0 0.0
        %538 = vmatprep.subr.mxu0 0.0
        %539 = vmatpush2.msra.mxu0 0.0
        %540 = vmatprep.subr.mxu0 0.0
        %541 = vmatpush2.msra.mxu0 0.0
        %542 = vmatprep.subr.mxu0 0.0
        %543 = vmatpush2.msra.mxu0 0.0
        %544 = vmatprep.subr.mxu0 0.0
        %545 = vmatpush2.msra.mxu0 0.0
        %546 = vmatprep.subr.mxu0 0.0
        %547 = vmatpush2.msra.mxu0 0.0
        %548 = vmatprep.subr.mxu0 0.0
        %549 = vmatpush2.msra.mxu0 0.0
        %550 = vmatprep.subr.mxu0 0.0
        %551 = vmatpush2.msra.mxu0 0.0
        %552 = vmatprep.subr.mxu0 0.0
        %553 = vmatpush2.msra.mxu0 0.0
        %554 = vmatprep.subr.mxu0 0.0
        %555 = vmatpush2.msra.mxu0 0.0
        %556 = vmatprep.subr.mxu0 0.0
        %557 = vmatpush2.msra.mxu0 0.0
        %558 = vmatprep.subr.mxu0 0.0
        %559 = vmatpush2.msra.mxu0 0.0
        %560 = vmatprep.subr.mxu0 0.0
        %561 = vmatpush2.msra.mxu0 0.0
        %562 = vmatprep.mubr.f32.mxu0 0.0
        %563 = vmatmul.mubr.f32.gmra.mxu0 %v438
        %v564 = vpop.f32.mrf.mxu0
        %v565 = vadd.f32 %v429, %v564
        %v566 = vpop.f32.mrf.mxu0
        %v567 = vadd.f32 %v429, %v566
        %568 = vmatprep.mubr.f32.mxu0 0.0
        %569 = vmatmul.mubr.f32.gmra.mxu0 %v441
        %v570 = vpop.f32.mrf.mxu0
        %v571 = vadd.f32 %v434, %v570
        %v572 = vpop.f32.mrf.mxu0
        %v573 = vadd.f32 %v434, %v572
        %574 = vdwg.mxu0
        %575 = vmatprep.subr.mxu0 0.0
        %576 = vmatpush1.msra.mxu0 0.0
        %577 = vmatprep.subr.mxu0 0.0
        %578 = vmatpush1.msra.mxu0 0.0
        %579 = vmatprep.subr.mxu0 0.0
        %580 = vmatpush1.msra.mxu0 0.0
        %581 = vmatprep.subr.mxu0 0.0
        %582 = vmatpush1.msra.mxu0 0.0
        %583 = vmatprep.subr.mxu0 0.0
        %584 = vmatpush1.msra.mxu0 0.0
        %585 = vmatprep.subr.mxu0 0.0
        %586 = vmatpush1.msra.mxu0 0.0
        %587 = vmatprep.subr.mxu0 0.0
        %588 = vmatpush1.msra.mxu0 0.0
        %589 = vmatprep.subr.mxu0 0.0
        %590 = vmatpush1.msra.mxu0 0.0
        %591 = vmatprep.subr.mxu0 0.0
        %592 = vmatpush1.msra.mxu0 0.0
        %593 = vmatprep.subr.mxu0 0.0
        %594 = vmatpush1.msra.mxu0 0.0
        %595 = vmatprep.subr.mxu0 0.0
        %596 = vmatpush1.msra.mxu0 0.0
        %597 = vmatprep.subr.mxu0 0.0
        %598 = vmatpush1.msra.mxu0 0.0
        %599 = vmatprep.subr.mxu0 0.0
        %600 = vmatpush1.msra.mxu0 0.0
        %601 = vmatprep.subr.mxu0 0.0
        %602 = vmatpush1.msra.mxu0 0.0
        %603 = vmatprep.subr.mxu0 %v454
        %604 = vmatpush1.msra.mxu0 %v451
        %605 = vmatprep.subr.mxu0 %v387
        %606 = vmatpush1.msra.mxu0 %v386
        %607 = vmatprep.subr.mxu0 0.0
        %608 = vmatpush2.msra.mxu0 0.0
        %609 = vmatprep.subr.mxu0 0.0
        %610 = vmatpush2.msra.mxu0 0.0
        %611 = vmatprep.subr.mxu0 0.0
        %612 = vmatpush2.msra.mxu0 0.0
        %613 = vmatprep.subr.mxu0 0.0
        %614 = vmatpush2.msra.mxu0 0.0
        %615 = vmatprep.subr.mxu0 0.0
        %616 = vmatpush2.msra.mxu0 0.0
        %617 = vmatprep.subr.mxu0 0.0
        %618 = vmatpush2.msra.mxu0 0.0
        %619 = vmatprep.subr.mxu0 0.0
        %620 = vmatpush2.msra.mxu0 0.0
        %621 = vmatprep.subr.mxu0 0.0
        %622 = vmatpush2.msra.mxu0 0.0
        %623 = vmatprep.subr.mxu0 0.0
        %624 = vmatpush2.msra.mxu0 0.0
        %625 = vmatprep.subr.mxu0 0.0
        %626 = vmatpush2.msra.mxu0 0.0
        %627 = vmatprep.subr.mxu0 0.0
        %628 = vmatpush2.msra.mxu0 0.0
        %629 = vmatprep.subr.mxu0 0.0
        %630 = vmatpush2.msra.mxu0 0.0
        %631 = vmatprep.subr.mxu0 0.0
        %632 = vmatpush2.msra.mxu0 0.0
        %633 = vmatprep.subr.mxu0 0.0
        %634 = vmatpush2.msra.mxu0 0.0
        %635 = vmatprep.subr.mxu0 0.0
        %636 = vmatpush2.msra.mxu0 0.0
        %637 = vmatprep.subr.mxu0 0.0
        %638 = vmatpush2.msra.mxu0 0.0
        %639 = vmatprep.mubr.f32.mxu0 0.0
        %640 = vmatmul.mubr.f32.gmra.mxu0 %v438
        %v641 = vpop.f32.mrf.mxu0
        %v642 = vadd.f32 %v429, %v641
        %v643 = vpop.f32.mrf.mxu0
        %v644 = vadd.f32 %v429, %v643
        %645 = vmatprep.mubr.f32.mxu0 0.0
        %646 = vmatmul.mubr.f32.gmra.mxu0 %v441
        %v647 = vpop.f32.mrf.mxu0
        %v648 = vadd.f32 %v434, %v647
        %v649 = vpop.f32.mrf.mxu0
        %v650 = vadd.f32 %v434, %v649
        %651 = vdwg.mxu0
        %652 = vmatprep.subr.mxu0 0.0
        %653 = vmatpush1.msra.mxu0 0.0
        %654 = vmatprep.subr.mxu0 0.0
        %655 = vmatpush1.msra.mxu0 0.0
        %656 = vmatprep.subr.mxu0 0.0
        %657 = vmatpush1.msra.mxu0 0.0
        %658 = vmatprep.subr.mxu0 0.0
        %659 = vmatpush1.msra.mxu0 0.0
        %660 = vmatprep.subr.mxu0 0.0
        %661 = vmatpush1.msra.mxu0 0.0
        %662 = vmatprep.subr.mxu0 0.0
        %663 = vmatpush1.msra.mxu0 0.0
        %664 = vmatprep.subr.mxu0 0.0
        %665 = vmatpush1.msra.mxu0 0.0
        %666 = vmatprep.subr.mxu0 0.0
        %667 = vmatpush1.msra.mxu0 0.0
        %668 = vmatprep.subr.mxu0 0.0
        %669 = vmatpush1.msra.mxu0 0.0
        %670 = vmatprep.subr.mxu0 0.0
        %671 = vmatpush1.msra.mxu0 0.0
        %672 = vmatprep.subr.mxu0 0.0
        %673 = vmatpush1.msra.mxu0 0.0
        %674 = vmatprep.subr.mxu0 0.0
        %675 = vmatpush1.msra.mxu0 0.0
        %676 = vmatprep.subr.mxu0 0.0
        %677 = vmatpush1.msra.mxu0 0.0
        %678 = vmatprep.subr.mxu0 0.0
        %679 = vmatpush1.msra.mxu0 0.0
        %680 = vmatprep.subr.mxu0 %v460
        %681 = vmatpush1.msra.mxu0 %v457
        %682 = vmatprep.subr.mxu0 %v389
        %683 = vmatpush1.msra.mxu0 %v388
        %684 = vmatprep.subr.mxu0 0.0
        %685 = vmatpush2.msra.mxu0 0.0
        %686 = vmatprep.subr.mxu0 0.0
        %687 = vmatpush2.msra.mxu0 0.0
        %688 = vmatprep.subr.mxu0 0.0
        %689 = vmatpush2.msra.mxu0 0.0
        %690 = vmatprep.subr.mxu0 0.0
        %691 = vmatpush2.msra.mxu0 0.0
        %692 = vmatprep.subr.mxu0 0.0
        %693 = vmatpush2.msra.mxu0 0.0
        %694 = vmatprep.subr.mxu0 0.0
        %695 = vmatpush2.msra.mxu0 0.0
        %696 = vmatprep.subr.mxu0 0.0
        %697 = vmatpush2.msra.mxu0 0.0
        %698 = vmatprep.subr.mxu0 0.0
        %699 = vmatpush2.msra.mxu0 0.0
        %700 = vmatprep.subr.mxu0 0.0
        %701 = vmatpush2.msra.mxu0 0.0
        %702 = vmatprep.subr.mxu0 0.0
        %703 = vmatpush2.msra.mxu0 0.0
        %704 = vmatprep.subr.mxu0 0.0
        %705 = vmatpush2.msra.mxu0 0.0
        %706 = vmatprep.subr.mxu0 0.0
        %707 = vmatpush2.msra.mxu0 0.0
        %708 = vmatprep.subr.mxu0 0.0
        %709 = vmatpush2.msra.mxu0 0.0
        %710 = vmatprep.subr.mxu0 0.0
        %711 = vmatpush2.msra.mxu0 0.0
        %712 = vmatprep.subr.mxu0 0.0
        %713 = vmatpush2.msra.mxu0 0.0
        %714 = vmatprep.subr.mxu0 0.0
        %715 = vmatpush2.msra.mxu0 0.0
        %716 = vmatprep.mubr.f32.mxu0 0.0
        %717 = vmatmul.mubr.f32.gmra.mxu0 %v438
        %v718 = vpop.f32.mrf.mxu0
        %v719 = vadd.f32 %v429, %v718
        %v720 = vpop.f32.mrf.mxu0
        %v721 = vadd.f32 %v429, %v720
        %722 = vmatprep.mubr.f32.mxu0 0.0
        %723 = vmatmul.mubr.f32.gmra.mxu0 %v441
        %v724 = vpop.f32.mrf.mxu0
        %v725 = vadd.f32 %v434, %v724
        %v726 = vpop.f32.mrf.mxu0
        %v727 = vadd.f32 %v434, %v726
        %728 = vdwg.mxu0
        %729 = vmatprep.subr.mxu0 0.0
        %730 = vmatpush1.msra.mxu0 0.0
        %731 = vmatprep.subr.mxu0 0.0
        %732 = vmatpush1.msra.mxu0 0.0
        %733 = vmatprep.subr.mxu0 0.0
        %734 = vmatpush1.msra.mxu0 0.0
        %735 = vmatprep.subr.mxu0 0.0
        %736 = vmatpush1.msra.mxu0 0.0
        %737 = vmatprep.subr.mxu0 0.0
        %738 = vmatpush1.msra.mxu0 0.0
        %739 = vmatprep.subr.mxu0 0.0
        %740 = vmatpush1.msra.mxu0 0.0
        %741 = vmatprep.subr.mxu0 0.0
        %742 = vmatpush1.msra.mxu0 0.0
        %743 = vmatprep.subr.mxu0 0.0
        %744 = vmatpush1.msra.mxu0 0.0
        %745 = vmatprep.subr.mxu0 0.0
        %746 = vmatpush1.msra.mxu0 0.0
        %747 = vmatprep.subr.mxu0 0.0
        %748 = vmatpush1.msra.mxu0 0.0
        %749 = vmatprep.subr.mxu0 0.0
        %750 = vmatpush1.msra.mxu0 0.0
        %751 = vmatprep.subr.mxu0 0.0
        %752 = vmatpush1.msra.mxu0 0.0
        %753 = vmatprep.subr.mxu0 0.0
        %754 = vmatpush1.msra.mxu0 0.0
        %755 = vmatprep.subr.mxu0 0.0
        %756 = vmatpush1.msra.mxu0 0.0
        %757 = vmatprep.subr.mxu0 %v466
        %758 = vmatpush1.msra.mxu0 %v463
        %759 = vmatprep.subr.mxu0 %v391
        %760 = vmatpush1.msra.mxu0 %v390
        %761 = vmatprep.subr.mxu0 0.0
        %762 = vmatpush2.msra.mxu0 0.0
        %763 = vmatprep.subr.mxu0 0.0
        %764 = vmatpush2.msra.mxu0 0.0
        %765 = vmatprep.subr.mxu0 0.0
        %766 = vmatpush2.msra.mxu0 0.0
        %767 = vmatprep.subr.mxu0 0.0
        %768 = vmatpush2.msra.mxu0 0.0
        %769 = vmatprep.subr.mxu0 0.0
        %770 = vmatpush2.msra.mxu0 0.0
        %771 = vmatprep.subr.mxu0 0.0
        %772 = vmatpush2.msra.mxu0 0.0
        %773 = vmatprep.subr.mxu0 0.0
        %774 = vmatpush2.msra.mxu0 0.0
        %775 = vmatprep.subr.mxu0 0.0
        %776 = vmatpush2.msra.mxu0 0.0
        %777 = vmatprep.subr.mxu0 0.0
        %778 = vmatpush2.msra.mxu0 0.0
        %779 = vmatprep.subr.mxu0 0.0
        %780 = vmatpush2.msra.mxu0 0.0
        %781 = vmatprep.subr.mxu0 0.0
        %782 = vmatpush2.msra.mxu0 0.0
        %783 = vmatprep.subr.mxu0 0.0
        %784 = vmatpush2.msra.mxu0 0.0
        %785 = vmatprep.subr.mxu0 0.0
        %786 = vmatpush2.msra.mxu0 0.0
        %787 = vmatprep.subr.mxu0 0.0
        %788 = vmatpush2.msra.mxu0 0.0
        %789 = vmatprep.subr.mxu0 0.0
        %790 = vmatpush2.msra.mxu0 0.0
        %791 = vmatprep.subr.mxu0 0.0
        %792 = vmatpush2.msra.mxu0 0.0
        %793 = vmatprep.mubr.f32.mxu0 0.0
        %794 = vmatmul.mubr.f32.gmra.mxu0 %v438
        %v795 = vpop.f32.mrf.mxu0
        %v796 = vadd.f32 %v429, %v795
        %v797 = vpop.f32.mrf.mxu0
        %v798 = vadd.f32 %v429, %v797
        %799 = vmatprep.mubr.f32.mxu0 0.0
        %800 = vmatmul.mubr.f32.gmra.mxu0 %v441
        %v801 = vpop.f32.mrf.mxu0
        %v802 = vadd.f32 %v434, %v801
        %v803 = vpop.f32.mrf.mxu0
        %v804 = vadd.f32 %v434, %v803
        %805 = vdwg.mxu0
        %806 = vmatprep.subr.mxu0 0.0
        %807 = vmatpush1.msra.mxu0 0.0
        %808 = vmatprep.subr.mxu0 0.0
        %809 = vmatpush1.msra.mxu0 0.0
        %810 = vmatprep.subr.mxu0 0.0
        %811 = vmatpush1.msra.mxu0 0.0
        %812 = vmatprep.subr.mxu0 0.0
        %813 = vmatpush1.msra.mxu0 0.0
        %814 = vmatprep.subr.mxu0 0.0
        %815 = vmatpush1.msra.mxu0 0.0
        %816 = vmatprep.subr.mxu0 0.0
        %817 = vmatpush1.msra.mxu0 0.0
        %818 = vmatprep.subr.mxu0 0.0
        %819 = vmatpush1.msra.mxu0 0.0
        %820 = vmatprep.subr.mxu0 0.0
        %821 = vmatpush1.msra.mxu0 0.0
        %822 = vmatprep.subr.mxu0 0.0
        %823 = vmatpush1.msra.mxu0 0.0
        %824 = vmatprep.subr.mxu0 0.0
        %825 = vmatpush1.msra.mxu0 0.0
        %826 = vmatprep.subr.mxu0 0.0
        %827 = vmatpush1.msra.mxu0 0.0
        %828 = vmatprep.subr.mxu0 0.0
        %829 = vmatpush1.msra.mxu0 0.0
        %830 = vmatprep.subr.mxu0 0.0
        %831 = vmatpush1.msra.mxu0 0.0
        %832 = vmatprep.subr.mxu0 0.0
        %833 = vmatpush1.msra.mxu0 0.0
        %834 = vmatprep.subr.mxu0 %v472
        %835 = vmatpush1.msra.mxu0 %v469
        %836 = vmatprep.subr.mxu0 %v393
        %837 = vmatpush1.msra.mxu0 %v392
        %838 = vmatprep.subr.mxu0 0.0
        %839 = vmatpush2.msra.mxu0 0.0
        %840 = vmatprep.subr.mxu0 0.0
        %841 = vmatpush2.msra.mxu0 0.0
        %842 = vmatprep.subr.mxu0 0.0
        %843 = vmatpush2.msra.mxu0 0.0
        %844 = vmatprep.subr.mxu0 0.0
        %845 = vmatpush2.msra.mxu0 0.0
        %846 = vmatprep.subr.mxu0 0.0
        %847 = vmatpush2.msra.mxu0 0.0
        %848 = vmatprep.subr.mxu0 0.0
        %849 = vmatpush2.msra.mxu0 0.0
        %850 = vmatprep.subr.mxu0 0.0
        %851 = vmatpush2.msra.mxu0 0.0
        %852 = vmatprep.subr.mxu0 0.0
        %853 = vmatpush2.msra.mxu0 0.0
        %854 = vmatprep.subr.mxu0 0.0
        %855 = vmatpush2.msra.mxu0 0.0
        %856 = vmatprep.subr.mxu0 0.0
        %857 = vmatpush2.msra.mxu0 0.0
        %858 = vmatprep.subr.mxu0 0.0
        %859 = vmatpush2.msra.mxu0 0.0
        %860 = vmatprep.subr.mxu0 0.0
        %861 = vmatpush2.msra.mxu0 0.0
        %862 = vmatprep.subr.mxu0 0.0
        %863 = vmatpush2.msra.mxu0 0.0
        %864 = vmatprep.subr.mxu0 0.0
        %865 = vmatpush2.msra.mxu0 0.0
        %866 = vmatprep.subr.mxu0 0.0
        %867 = vmatpush2.msra.mxu0 0.0
        %868 = vmatprep.subr.mxu0 0.0
        %869 = vmatpush2.msra.mxu0 0.0
        %870 = vmatprep.mubr.f32.mxu0 0.0
        %871 = vmatmul.mubr.f32.gmra.mxu0 %v438
        %v872 = vpop.f32.mrf.mxu0
        %v873 = vadd.f32 %v429, %v872
        %v874 = vpop.f32.mrf.mxu0
        %v875 = vadd.f32 %v429, %v874
        %876 = vmatprep.mubr.f32.mxu0 0.0
        %877 = vmatmul.mubr.f32.gmra.mxu0 %v441
        %v878 = vpop.f32.mrf.mxu0
        %v879 = vadd.f32 %v434, %v878
        %v880 = vpop.f32.mrf.mxu0
        %v881 = vadd.f32 %v434, %v880
        %882 = vdwg.mxu0
        %883 = vmatprep.subr.mxu0 0.0
        %884 = vmatpush1.msra.mxu0 0.0
        %885 = vmatprep.subr.mxu0 0.0
        %886 = vmatpush1.msra.mxu0 0.0
        %887 = vmatprep.subr.mxu0 0.0
        %888 = vmatpush1.msra.mxu0 0.0
        %889 = vmatprep.subr.mxu0 0.0
        %890 = vmatpush1.msra.mxu0 0.0
        %891 = vmatprep.subr.mxu0 0.0
        %892 = vmatpush1.msra.mxu0 0.0
        %893 = vmatprep.subr.mxu0 0.0
        %894 = vmatpush1.msra.mxu0 0.0
        %895 = vmatprep.subr.mxu0 0.0
        %896 = vmatpush1.msra.mxu0 0.0
        %897 = vmatprep.subr.mxu0 0.0
        %898 = vmatpush1.msra.mxu0 0.0
        %899 = vmatprep.subr.mxu0 0.0
        %900 = vmatpush1.msra.mxu0 0.0
        %901 = vmatprep.subr.mxu0 0.0
        %902 = vmatpush1.msra.mxu0 0.0
        %903 = vmatprep.subr.mxu0 0.0
        %904 = vmatpush1.msra.mxu0 0.0
        %905 = vmatprep.subr.mxu0 0.0
        %906 = vmatpush1.msra.mxu0 0.0
        %907 = vmatprep.subr.mxu0 0.0
        %908 = vmatpush1.msra.mxu0 0.0
        %909 = vmatprep.subr.mxu0 0.0
        %910 = vmatpush1.msra.mxu0 0.0
        %911 = vmatprep.subr.mxu0 %v478
        %912 = vmatpush1.msra.mxu0 %v475
        %913 = vmatprep.subr.mxu0 %v395
        %914 = vmatpush1.msra.mxu0 %v394
        %915 = vmatprep.subr.mxu0 0.0
        %916 = vmatpush2.msra.mxu0 0.0
        %917 = vmatprep.subr.mxu0 0.0
        %918 = vmatpush2.msra.mxu0 0.0
        %919 = vmatprep.subr.mxu0 0.0
        %920 = vmatpush2.msra.mxu0 0.0
        %921 = vmatprep.subr.mxu0 0.0
        %922 = vmatpush2.msra.mxu0 0.0
        %923 = vmatprep.subr.mxu0 0.0
        %924 = vmatpush2.msra.mxu0 0.0
        %925 = vmatprep.subr.mxu0 0.0
        %926 = vmatpush2.msra.mxu0 0.0
        %927 = vmatprep.subr.mxu0 0.0
        %928 = vmatpush2.msra.mxu0 0.0
        %929 = vmatprep.subr.mxu0 0.0
        %930 = vmatpush2.msra.mxu0 0.0
        %931 = vmatprep.subr.mxu0 0.0
        %932 = vmatpush2.msra.mxu0 0.0
        %933 = vmatprep.subr.mxu0 0.0
        %934 = vmatpush2.msra.mxu0 0.0
        %935 = vmatprep.subr.mxu0 0.0
        %936 = vmatpush2.msra.mxu0 0.0
        %937 = vmatprep.subr.mxu0 0.0
        %938 = vmatpush2.msra.mxu0 0.0
        %939 = vmatprep.subr.mxu0 0.0
        %940 = vmatpush2.msra.mxu0 0.0
        %941 = vmatprep.subr.mxu0 0.0
        %942 = vmatpush2.msra.mxu0 0.0
        %943 = vmatprep.subr.mxu0 0.0
        %944 = vmatpush2.msra.mxu0 0.0
        %945 = vmatprep.subr.mxu0 0.0
        %946 = vmatpush2.msra.mxu0 0.0
        %947 = vmatprep.mubr.f32.mxu0 0.0
        %948 = vmatmul.mubr.f32.gmra.mxu0 %v438
        %v949 = vpop.f32.mrf.mxu0
        %v950 = vadd.f32 %v429, %v949
        %v951 = vpop.f32.mrf.mxu0
        %v952 = vadd.f32 %v429, %v951
        %953 = vmatprep.mubr.f32.mxu0 0.0
        %954 = vmatmul.mubr.f32.gmra.mxu0 %v441
        %v955 = vpop.f32.mrf.mxu0
        %v956 = vadd.f32 %v434, %v955
        %v957 = vpop.f32.mrf.mxu0
        %v958 = vadd.f32 %v434, %v957
        %959 = vdwg.mxu0
        %960 = vmatprep.subr.mxu0 0.0
        %961 = vmatpush1.msra.mxu0 0.0
        %962 = vmatprep.subr.mxu0 0.0
        %963 = vmatpush1.msra.mxu0 0.0
        %964 = vmatprep.subr.mxu0 0.0
        %965 = vmatpush1.msra.mxu0 0.0
        %966 = vmatprep.subr.mxu0 0.0
        %967 = vmatpush1.msra.mxu0 0.0
        %968 = vmatprep.subr.mxu0 0.0
        %969 = vmatpush1.msra.mxu0 0.0
        %970 = vmatprep.subr.mxu0 0.0
        %971 = vmatpush1.msra.mxu0 0.0
        %972 = vmatprep.subr.mxu0 0.0
        %973 = vmatpush1.msra.mxu0 0.0
        %974 = vmatprep.subr.mxu0 0.0
        %975 = vmatpush1.msra.mxu0 0.0
        %976 = vmatprep.subr.mxu0 0.0
        %977 = vmatpush1.msra.mxu0 0.0
        %978 = vmatprep.subr.mxu0 0.0
        %979 = vmatpush1.msra.mxu0 0.0
        %980 = vmatprep.subr.mxu0 0.0
        %981 = vmatpush1.msra.mxu0 0.0
        %982 = vmatprep.subr.mxu0 0.0
        %983 = vmatpush1.msra.mxu0 0.0
        %984 = vmatprep.subr.mxu0 0.0
        %985 = vmatpush1.msra.mxu0 0.0
        %986 = vmatprep.subr.mxu0 0.0
        %987 = vmatpush1.msra.mxu0 0.0
        %988 = vmatprep.subr.mxu0 %v484
        %989 = vmatpush1.msra.mxu0 %v481
        %990 = vmatprep.subr.mxu0 %v397
        %991 = vmatpush1.msra.mxu0 %v396
        %992 = vmatprep.subr.mxu0 0.0
        %993 = vmatpush2.msra.mxu0 0.0
        %994 = vmatprep.subr.mxu0 0.0
        %995 = vmatpush2.msra.mxu0 0.0
        %996 = vmatprep.subr.mxu0 0.0
        %997 = vmatpush2.msra.mxu0 0.0
        %998 = vmatprep.subr.mxu0 0.0
        %999 = vmatpush2.msra.mxu0 0.0
        %1000 = vmatprep.subr.mxu0 0.0
        %1001 = vmatpush2.msra.mxu0 0.0
        %1002 = vmatprep.subr.mxu0 0.0
        %1003 = vmatpush2.msra.mxu0 0.0
        %1004 = vmatprep.subr.mxu0 0.0
        %1005 = vmatpush2.msra.mxu0 0.0
        %1006 = vmatprep.subr.mxu0 0.0
        %1007 = vmatpush2.msra.mxu0 0.0
        %1008 = vmatprep.subr.mxu0 0.0
        %1009 = vmatpush2.msra.mxu0 0.0
        %1010 = vmatprep.subr.mxu0 0.0
        %1011 = vmatpush2.msra.mxu0 0.0
        %1012 = vmatprep.subr.mxu0 0.0
        %1013 = vmatpush2.msra.mxu0 0.0
        %1014 = vmatprep.subr.mxu0 0.0
        %1015 = vmatpush2.msra.mxu0 0.0
        %1016 = vmatprep.subr.mxu0 0.0
        %1017 = vmatpush2.msra.mxu0 0.0
        %1018 = vmatprep.subr.mxu0 0.0
        %1019 = vmatpush2.msra.mxu0 0.0
        %1020 = vmatprep.subr.mxu0 0.0
        %1021 = vmatpush2.msra.mxu0 0.0
        %1022 = vmatprep.subr.mxu0 0.0
        %1023 = vmatpush2.msra.mxu0 0.0
        %1024 = vmatprep.mubr.f32.mxu0 0.0
        %1025 = vmatmul.mubr.f32.gmra.mxu0 %v438
        %v1026 = vpop.f32.mrf.mxu0
        %v1027 = vadd.f32 %v429, %v1026
        %v1028 = vpop.f32.mrf.mxu0
        %v1029 = vadd.f32 %v429, %v1028
        %1030 = vmatprep.mubr.f32.mxu0 0.0
        %1031 = vmatmul.mubr.f32.gmra.mxu0 %v441
        %v1032 = vpop.f32.mrf.mxu0
        %v1033 = vadd.f32 %v434, %v1032
        %v1034 = vpop.f32.mrf.mxu0
        %v1035 = vadd.f32 %v434, %v1034
        %1036 = vdwg.mxu0
        %1037 = vmatprep.subr.mxu0 0.0
        %1038 = vmatpush1.msra.mxu0 0.0
        %1039 = vmatprep.subr.mxu0 0.0
        %1040 = vmatpush1.msra.mxu0 0.0
        %1041 = vmatprep.subr.mxu0 0.0
        %1042 = vmatpush1.msra.mxu0 0.0
        %1043 = vmatprep.subr.mxu0 0.0
        %1044 = vmatpush1.msra.mxu0 0.0
        %1045 = vmatprep.subr.mxu0 0.0
        %1046 = vmatpush1.msra.mxu0 0.0
        %1047 = vmatprep.subr.mxu0 0.0
        %1048 = vmatpush1.msra.mxu0 0.0
        %1049 = vmatprep.subr.mxu0 0.0
        %1050 = vmatpush1.msra.mxu0 0.0
        %1051 = vmatprep.subr.mxu0 0.0
        %1052 = vmatpush1.msra.mxu0 0.0
        %1053 = vmatprep.subr.mxu0 0.0
        %1054 = vmatpush1.msra.mxu0 0.0
        %1055 = vmatprep.subr.mxu0 0.0
        %1056 = vmatpush1.msra.mxu0 0.0
        %1057 = vmatprep.subr.mxu0 0.0
        %1058 = vmatpush1.msra.mxu0 0.0
        %1059 = vmatprep.subr.mxu0 0.0
        %1060 = vmatpush1.msra.mxu0 0.0
        %1061 = vmatprep.subr.mxu0 0.0
        %1062 = vmatpush1.msra.mxu0 0.0
        %1063 = vmatprep.subr.mxu0 0.0
        %1064 = vmatpush1.msra.mxu0 0.0
        %1065 = vmatprep.subr.mxu0 %v490
        %1066 = vmatpush1.msra.mxu0 %v487
        %1067 = vmatprep.subr.mxu0 %v399
        %1068 = vmatpush1.msra.mxu0 %v398
        %1069 = vmatprep.subr.mxu0 0.0
        %1070 = vmatpush2.msra.mxu0 0.0
        %1071 = vmatprep.subr.mxu0 0.0
        %1072 = vmatpush2.msra.mxu0 0.0
        %1073 = vmatprep.subr.mxu0 0.0
        %1074 = vmatpush2.msra.mxu0 0.0
        %1075 = vmatprep.subr.mxu0 0.0
        %1076 = vmatpush2.msra.mxu0 0.0
        %1077 = vmatprep.subr.mxu0 0.0
        %1078 = vmatpush2.msra.mxu0 0.0
        %1079 = vmatprep.subr.mxu0 0.0
        %1080 = vmatpush2.msra.mxu0 0.0
        %1081 = vmatprep.subr.mxu0 0.0
        %1082 = vmatpush2.msra.mxu0 0.0
        %1083 = vmatprep.subr.mxu0 0.0
        %1084 = vmatpush2.msra.mxu0 0.0
        %1085 = vmatprep.subr.mxu0 0.0
        %1086 = vmatpush2.msra.mxu0 0.0
        %1087 = vmatprep.subr.mxu0 0.0
        %1088 = vmatpush2.msra.mxu0 0.0
        %1089 = vmatprep.subr.mxu0 0.0
        %1090 = vmatpush2.msra.mxu0 0.0
        %1091 = vmatprep.subr.mxu0 0.0
        %1092 = vmatpush2.msra.mxu0 0.0
        %1093 = vmatprep.subr.mxu0 0.0
        %1094 = vmatpush2.msra.mxu0 0.0
        %1095 = vmatprep.subr.mxu0 0.0
        %1096 = vmatpush2.msra.mxu0 0.0
        %1097 = vmatprep.subr.mxu0 0.0
        %1098 = vmatpush2.msra.mxu0 0.0
        %1099 = vmatprep.subr.mxu0 0.0
        %1100 = vmatpush2.msra.mxu0 0.0
        %1101 = vmatprep.mubr.f32.mxu0 0.0
        %1102 = vmatmul.mubr.f32.gmra.mxu0 %v438
        %v1103 = vpop.f32.mrf.mxu0
        %v1104 = vadd.f32 %v429, %v1103
        %v1105 = vpop.f32.mrf.mxu0
        %v1106 = vadd.f32 %v429, %v1105
        %1107 = vmatprep.mubr.f32.mxu0 0.0
        %1108 = vmatmul.mubr.f32.gmra.mxu0 %v441
        %v1109 = vpop.f32.mrf.mxu0
        %v1110 = vadd.f32 %v434, %v1109
        %v1111 = vpop.f32.mrf.mxu0
        %v1112 = vadd.f32 %v434, %v1111
        %1113 = vdwg.mxu0
        %1114 = vmatprep.subr.mxu0 0.0
        %1115 = vmatpush1.msra.mxu0 0.0
        %1116 = vmatprep.subr.mxu0 0.0
        %1117 = vmatpush1.msra.mxu0 0.0
        %1118 = vmatprep.subr.mxu0 0.0
        %1119 = vmatpush1.msra.mxu0 0.0
        %1120 = vmatprep.subr.mxu0 0.0
        %1121 = vmatpush1.msra.mxu0 0.0
        %1122 = vmatprep.subr.mxu0 0.0
        %1123 = vmatpush1.msra.mxu0 0.0
        %1124 = vmatprep.subr.mxu0 0.0
        %1125 = vmatpush1.msra.mxu0 0.0
        %1126 = vmatprep.subr.mxu0 0.0
        %1127 = vmatpush1.msra.mxu0 0.0
        %1128 = vmatprep.subr.mxu0 0.0
        %1129 = vmatpush1.msra.mxu0 0.0
        %1130 = vmatprep.subr.mxu0 0.0
        %1131 = vmatpush1.msra.mxu0 0.0
        %1132 = vmatprep.subr.mxu0 0.0
        %1133 = vmatpush1.msra.mxu0 0.0
        %1134 = vmatprep.subr.mxu0 0.0
        %1135 = vmatpush1.msra.mxu0 0.0
        %1136 = vmatprep.subr.mxu0 0.0
        %1137 = vmatpush1.msra.mxu0 0.0
        %1138 = vmatprep.subr.mxu0 0.0
        %1139 = vmatpush1.msra.mxu0 0.0
        %1140 = vmatprep.subr.mxu0 0.0
        %1141 = vmatpush1.msra.mxu0 0.0
        %1142 = vmatprep.subr.mxu0 %v496
        %1143 = vmatpush1.msra.mxu0 %v493
        %1144 = vmatprep.subr.mxu0 %v401
        %1145 = vmatpush1.msra.mxu0 %v400
        %1146 = vmatprep.subr.mxu0 0.0
        %1147 = vmatpush2.msra.mxu0 0.0
        %1148 = vmatprep.subr.mxu0 0.0
        %1149 = vmatpush2.msra.mxu0 0.0
        %1150 = vmatprep.subr.mxu0 0.0
        %1151 = vmatpush2.msra.mxu0 0.0
        %1152 = vmatprep.subr.mxu0 0.0
        %1153 = vmatpush2.msra.mxu0 0.0
        %1154 = vmatprep.subr.mxu0 0.0
        %1155 = vmatpush2.msra.mxu0 0.0
        %1156 = vmatprep.subr.mxu0 0.0
        %1157 = vmatpush2.msra.mxu0 0.0
        %1158 = vmatprep.subr.mxu0 0.0
        %1159 = vmatpush2.msra.mxu0 0.0
        %1160 = vmatprep.subr.mxu0 0.0
        %1161 = vmatpush2.msra.mxu0 0.0
        %1162 = vmatprep.subr.mxu0 0.0
        %1163 = vmatpush2.msra.mxu0 0.0
        %1164 = vmatprep.subr.mxu0 0.0
        %1165 = vmatpush2.msra.mxu0 0.0
        %1166 = vmatprep.subr.mxu0 0.0
        %1167 = vmatpush2.msra.mxu0 0.0
        %1168 = vmatprep.subr.mxu0 0.0
        %1169 = vmatpush2.msra.mxu0 0.0
        %1170 = vmatprep.subr.mxu0 0.0
        %1171 = vmatpush2.msra.mxu0 0.0
        %1172 = vmatprep.subr.mxu0 0.0
        %1173 = vmatpush2.msra.mxu0 0.0
        %1174 = vmatprep.subr.mxu0 0.0
        %1175 = vmatpush2.msra.mxu0 0.0
        %1176 = vmatprep.subr.mxu0 0.0
        %1177 = vmatpush2.msra.mxu0 0.0
        %1178 = vmatprep.mubr.f32.mxu0 0.0
        %1179 = vmatmul.mubr.f32.gmra.mxu0 %v438
        %v1180 = vpop.f32.mrf.mxu0
        %v1181 = vadd.f32 %v429, %v1180
        %v1182 = vpop.f32.mrf.mxu0
        %v1183 = vadd.f32 %v429, %v1182
        %1184 = vmatprep.mubr.f32.mxu0 0.0
        %1185 = vmatmul.mubr.f32.gmra.mxu0 %v441
        %v1186 = vpop.f32.mrf.mxu0
        %v1187 = vadd.f32 %v434, %v1186
        %v1188 = vpop.f32.mrf.mxu0
        %v1189 = vadd.f32 %v434, %v1188
        %1190 = vdwg.mxu0
        %v1191 = vmax.f32 %v565, 0.0
        %v1192 = vmax.f32 %v567, 0.0
        %v1193 = vmax.f32 %v642, 0.0
        %v1194 = vmax.f32 %v644, 0.0
        %v1195 = vmax.f32 %v719, 0.0
        %v1196 = vmax.f32 %v721, 0.0
        %v1197 = vmax.f32 %v796, 0.0
        %v1198 = vmax.f32 %v798, 0.0
        %v1199 = vmax.f32 %v873, 0.0
        %v1200 = vmax.f32 %v875, 0.0
        %v1201 = vmax.f32 %v950, 0.0
        %v1202 = vmax.f32 %v952, 0.0
        %v1203 = vmax.f32 %v1027, 0.0
        %v1204 = vmax.f32 %v1029, 0.0
        %v1205 = vmax.f32 %v1104, 0.0
        %v1206 = vmax.f32 %v1106, 0.0
        %v1207 = vmax.f32 %v1181, 0.0
        %v1208 = vmax.f32 %v1183, 0.0
        %v1209 = vmax.f32 %v571, 0.0
        %v1210 = vmax.f32 %v573, 0.0
        %v1211 = vmax.f32 %v648, 0.0
        %v1212 = vmax.f32 %v650, 0.0
        %v1213 = vmax.f32 %v725, 0.0
        %v1214 = vmax.f32 %v727, 0.0
        %v1215 = vmax.f32 %v802, 0.0
        %v1216 = vmax.f32 %v804, 0.0
        %v1217 = vmax.f32 %v879, 0.0
        %v1218 = vmax.f32 %v881, 0.0
        %v1219 = vmax.f32 %v956, 0.0
        %v1220 = vmax.f32 %v958, 0.0
        %v1221 = vmax.f32 %v1033, 0.0
        %v1222 = vmax.f32 %v1035, 0.0
        %v1223 = vmax.f32 %v1110, 0.0
        %v1224 = vmax.f32 %v1112, 0.0
        %v1225 = vmax.f32 %v1187, 0.0
        %v1226 = vmax.f32 %v1189, 0.0
        %v1227 = vld [vmem:[%s3] sm:$0xff]
        %v1228 = vld [vmem:[%s3 + $0x8] sm:$0xff]
        %v1229 = vunpack.c.l.bf16 %v1227
        %v1230 = vunpack.c.h.bf16 %v1227
        %v1231 = vunpack.c.l.bf16 %v1228
        %v1232 = vunpack.c.h.bf16 %v1228
        %v1233 = vld [vmem:[%s4] sm:$0xff]
        %v1234 = vld [vmem:[%s4 + $0x8] sm:$0xff]
        %1236 = vset.pattern.permute.xlu0 0
        %1237 = vperm.xlu0 %1236, %v1233
        %v1238 = vpop.permute.xlu0 %1237
        %1241 = vset.pattern.permute.xlu0 0
        %1242 = vperm.xlu0 %1241, %v1234
        %v1243 = vpop.permute.xlu0 %1242
        %vm1245 = vcmask 130048
        %v1247 = vsel %vm1245, %v1230, 0
        %v1250 = vsel %vm1245, %v1232, 0
        %1252 = vmatprep.subr.mxu0 %v1224
        %1253 = vmatpush1.msra.mxu0 %v1223
        %1254 = vmatprep.subr.mxu0 %v1206
        %1255 = vmatpush1.msra.mxu0 %v1205
        %1256 = vmatprep.subr.mxu0 %v1222
        %1257 = vmatpush1.msra.mxu0 %v1221
        %1258 = vmatprep.subr.mxu0 %v1204
        %1259 = vmatpush1.msra.mxu0 %v1203
        %1260 = vmatprep.subr.mxu0 %v1220
        %1261 = vmatpush1.msra.mxu0 %v1219
        %1262 = vmatprep.subr.mxu0 %v1202
        %1263 = vmatpush1.msra.mxu0 %v1201
        %1264 = vmatprep.subr.mxu0 %v1218
        %1265 = vmatpush1.msra.mxu0 %v1217
        %1266 = vmatprep.subr.mxu0 %v1200
        %1267 = vmatpush1.msra.mxu0 %v1199
        %1268 = vmatprep.subr.mxu0 %v1216
        %1269 = vmatpush1.msra.mxu0 %v1215
        %1270 = vmatprep.subr.mxu0 %v1198
        %1271 = vmatpush1.msra.mxu0 %v1197
        %1272 = vmatprep.subr.mxu0 %v1214
        %1273 = vmatpush1.msra.mxu0 %v1213
        %1274 = vmatprep.subr.mxu0 %v1196
        %1275 = vmatpush1.msra.mxu0 %v1195
        %1276 = vmatprep.subr.mxu0 %v1212
        %1277 = vmatpush1.msra.mxu0 %v1211
        %1278 = vmatprep.subr.mxu0 %v1194
        %1279 = vmatpush1.msra.mxu0 %v1193
        %1280 = vmatprep.subr.mxu0 %v1210
        %1281 = vmatpush1.msra.mxu0 %v1209
        %1282 = vmatprep.subr.mxu0 %v1192
        %1283 = vmatpush1.msra.mxu0 %v1191
        %1284 = vmatprep.subr.mxu0 0.0
        %1285 = vmatpush2.msra.mxu0 0.0
        %1286 = vmatprep.subr.mxu0 0.0
        %1287 = vmatpush2.msra.mxu0 0.0
        %1288 = vmatprep.subr.mxu0 0.0
        %1289 = vmatpush2.msra.mxu0 0.0
        %1290 = vmatprep.subr.mxu0 0.0
        %1291 = vmatpush2.msra.mxu0 0.0
        %1292 = vmatprep.subr.mxu0 0.0
        %1293 = vmatpush2.msra.mxu0 0.0
        %1294 = vmatprep.subr.mxu0 0.0
        %1295 = vmatpush2.msra.mxu0 0.0
        %1296 = vmatprep.subr.mxu0 0.0
        %1297 = vmatpush2.msra.mxu0 0.0
        %1298 = vmatprep.subr.mxu0 0.0
        %1299 = vmatpush2.msra.mxu0 0.0
        %1300 = vmatprep.subr.mxu0 0.0
        %1301 = vmatpush2.msra.mxu0 0.0
        %1302 = vmatprep.subr.mxu0 0.0
        %1303 = vmatpush2.msra.mxu0 0.0
        %1304 = vmatprep.subr.mxu0 0.0
        %1305 = vmatpush2.msra.mxu0 0.0
        %1306 = vmatprep.subr.mxu0 0.0
        %1307 = vmatpush2.msra.mxu0 0.0
        %1308 = vmatprep.subr.mxu0 0.0
        %1309 = vmatpush2.msra.mxu0 0.0
        %1310 = vmatprep.subr.mxu0 0.0
        %1311 = vmatpush2.msra.mxu0 0.0
        %1312 = vmatprep.subr.mxu0 %v1226
        %1313 = vmatpush2.msra.mxu0 %v1225
        %1314 = vmatprep.subr.mxu0 %v1208
        %1315 = vmatpush2.msra.mxu0 %v1207
        %1316 = vmatprep.mubr.f32.mxu0 %v1247
        %1317 = vmatmul.mubr.f32.gmra.mxu0 %v1229
        %v1318 = vpop.f32.mrf.mxu0
        %v1319 = vadd.f32 %v1238, %v1318
        %v1320 = vpop.f32.mrf.mxu0
        %v1321 = vadd.f32 %v1238, %v1320
        %1322 = vmatprep.mubr.f32.mxu0 %v1250
        %1323 = vmatmul.mubr.f32.gmra.mxu0 %v1231
        %v1324 = vpop.f32.mrf.mxu0
        %v1325 = vadd.f32 %v1243, %v1324
        %v1326 = vpop.f32.mrf.mxu0
        %v1327 = vadd.f32 %v1243, %v1326
        %1328 = vdwg.mxu0
        %v1329 = vmax.f32 %v1319, 0.0
        %v1330 = vmax.f32 %v1321, 0.0
        %v1331 = vmax.f32 %v1325, 0.0
        %v1332 = vmax.f32 %v1327, 0.0
        %1337 = vrot.lane.b32.xlu0 %v1329, 127
        %v1338 = vpop.permute.xlu0 %1337
        %1339 = vrot.lane.b32.xlu0 %v1330, 127
        %v1340 = vpop.permute.xlu0 %1339
        %1341 = vrot.lane.b32.xlu0 %v1331, 127
        %v1342 = vpop.permute.xlu0 %1341
        %1343 = vrot.lane.b32.xlu0 %v1332, 127
        %v1344 = vpop.permute.xlu0 %1343
        %vm1345 = vcmask 1039360
        %v1346 = vsel %vm1345, %v1338, %v1340
        %v1347 = vsel %vm1345, %v1342, %v1344
        %v1354 = vsel %vm1345, %v1340, %v1338
        %v1355 = vsel %vm1345, %v1344, %v1342
        %1356 = vrot.lane.b32.xlu0 %v1329, 126
        %v1357 = vpop.permute.xlu0 %1356
        %1358 = vrot.lane.b32.xlu0 %v1330, 126
        %v1359 = vpop.permute.xlu0 %1358
        %1360 = vrot.lane.b32.xlu0 %v1331, 126
        %v1361 = vpop.permute.xlu0 %1360
        %1362 = vrot.lane.b32.xlu0 %v1332, 126
        %v1363 = vpop.permute.xlu0 %1362
        %vm1364 = vcmask 1031168
        %v1365 = vsel %vm1364, %v1357, %v1359
        %v1366 = vsel %vm1364, %v1361, %v1363
        %v1373 = vsel %vm1364, %v1359, %v1357
        %v1374 = vsel %vm1364, %v1363, %v1361
        %1375 = vrot.lane.b32.xlu0 %v1329, 114
        %v1376 = vpop.permute.xlu0 %1375
        %1377 = vrot.lane.b32.xlu0 %v1330, 114
        %v1378 = vpop.permute.xlu0 %1377
        %1379 = vrot.lane.b32.xlu0 %v1331, 114
        %v1380 = vpop.permute.xlu0 %1379
        %1381 = vrot.lane.b32.xlu0 %v1332, 114
        %v1382 = vpop.permute.xlu0 %1381
        %vm1383 = vcmask 932864
        %v1384 = vsel %vm1383, %v1376, %v1378
        %v1385 = vsel %vm1383, %v1380, %v1382
        %v1392 = vsel %vm1383, %v1378, %v1376
        %v1393 = vsel %vm1383, %v1382, %v1380
        %1394 = vrot.lane.b32.xlu0 %v1329, 113
        %v1395 = vpop.permute.xlu0 %1394
        %1396 = vrot.lane.b32.xlu0 %v1330, 113
        %v1397 = vpop.permute.xlu0 %1396
        %1398 = vrot.lane.b32.xlu0 %v1331, 113
        %v1399 = vpop.permute.xlu0 %1398
        %1400 = vrot.lane.b32.xlu0 %v1332, 113
        %v1401 = vpop.permute.xlu0 %1400
        %vm1402 = vcmask 924672
        %v1403 = vsel %vm1402, %v1395, %v1397
        %v1404 = vsel %vm1402, %v1399, %v1401
        %v1411 = vsel %vm1402, %v1397, %v1395
        %v1412 = vsel %vm1402, %v1401, %v1399
        %1413 = vrot.lane.b32.xlu0 %v1329, 112
        %v1414 = vpop.permute.xlu0 %1413
        %1415 = vrot.lane.b32.xlu0 %v1330, 112
        %v1416 = vpop.permute.xlu0 %1415
        %1417 = vrot.lane.b32.xlu0 %v1331, 112
        %v1418 = vpop.permute.xlu0 %1417
        %1419 = vrot.lane.b32.xlu0 %v1332, 112
        %v1420 = vpop.permute.xlu0 %1419
        %vm1421 = vcmask 916480
        %v1422 = vsel %vm1421, %v1414, %v1416
        %v1423 = vsel %vm1421, %v1418, %v1420
        %v1430 = vsel %vm1421, %v1416, %v1414
        %v1431 = vsel %vm1421, %v1420, %v1418
        %1432 = vrot.lane.b32.xlu0 %v1329, 100
        %v1433 = vpop.permute.xlu0 %1432
        %1434 = vrot.lane.b32.xlu0 %v1330, 100
        %v1435 = vpop.permute.xlu0 %1434
        %1436 = vrot.lane.b32.xlu0 %v1331, 100
        %v1437 = vpop.permute.xlu0 %1436
        %1438 = vrot.lane.b32.xlu0 %v1332, 100
        %v1439 = vpop.permute.xlu0 %1438
        %vm1440 = vcmask 818176
        %v1441 = vsel %vm1440, %v1433, %v1435
        %v1442 = vsel %vm1440, %v1437, %v1439
        %v1449 = vsel %vm1440, %v1435, %v1433
        %v1450 = vsel %vm1440, %v1439, %v1437
        %1451 = vrot.lane.b32.xlu0 %v1329, 99
        %v1452 = vpop.permute.xlu0 %1451
        %1453 = vrot.lane.b32.xlu0 %v1330, 99
        %v1454 = vpop.permute.xlu0 %1453
        %1455 = vrot.lane.b32.xlu0 %v1331, 99
        %v1456 = vpop.permute.xlu0 %1455
        %1457 = vrot.lane.b32.xlu0 %v1332, 99
        %v1458 = vpop.permute.xlu0 %1457
        %vm1459 = vcmask 809984
        %v1460 = vsel %vm1459, %v1452, %v1454
        %v1461 = vsel %vm1459, %v1456, %v1458
        %v1468 = vsel %vm1459, %v1454, %v1452
        %v1469 = vsel %vm1459, %v1458, %v1456
        %1470 = vrot.lane.b32.xlu0 %v1329, 98
        %v1471 = vpop.permute.xlu0 %1470
        %1472 = vrot.lane.b32.xlu0 %v1330, 98
        %v1473 = vpop.permute.xlu0 %1472
        %1474 = vrot.lane.b32.xlu0 %v1331, 98
        %v1475 = vpop.permute.xlu0 %1474
        %1476 = vrot.lane.b32.xlu0 %v1332, 98
        %v1477 = vpop.permute.xlu0 %1476
        %vm1478 = vcmask 801792
        %v1479 = vsel %vm1478, %v1471, %v1473
        %v1480 = vsel %vm1478, %v1475, %v1477
        %v1487 = vsel %vm1478, %v1473, %v1471
        %v1488 = vsel %vm1478, %v1477, %v1475
        %v1489 = vld [vmem:[%s5] sm:$0xff]
        %v1490 = vld [vmem:[%s5 + $0x8] sm:$0xff]
        %v1491 = vunpack.c.l.bf16 %v1489
        %v1492 = vunpack.c.h.bf16 %v1489
        %v1493 = vunpack.c.l.bf16 %v1490
        %v1494 = vunpack.c.h.bf16 %v1490
        %v1495 = vld [vmem:[%s6] sm:$0xff]
        %v1496 = vld [vmem:[%s6 + $0x8] sm:$0xff]
        %1498 = vset.pattern.permute.xlu0 0
        %1499 = vperm.xlu0 %1498, %v1495
        %v1500 = vpop.permute.xlu0 %1499
        %1503 = vset.pattern.permute.xlu0 0
        %1504 = vperm.xlu0 %1503, %v1496
        %v1505 = vpop.permute.xlu0 %1504
        %v1508 = vsel %vm1245, %v1492, 0
        %v1511 = vsel %vm1245, %v1494, 0
        %1513 = vmatprep.subr.mxu0 %v1469
        %1514 = vmatpush1.msra.mxu0 %v1461
        %1515 = vmatprep.subr.mxu0 %v1468
        %1516 = vmatpush1.msra.mxu0 %v1460
        %1517 = vmatprep.subr.mxu0 %v1450
        %1518 = vmatpush1.msra.mxu0 %v1442
        %1519 = vmatprep.subr.mxu0 %v1449
        %1520 = vmatpush1.msra.mxu0 %v1441
        %1521 = vmatprep.subr.mxu0 %v1431
        %1522 = vmatpush1.msra.mxu0 %v1423
        %1523 = vmatprep.subr.mxu0 %v1430
        %1524 = vmatpush1.msra.mxu0 %v1422
        %1525 = vmatprep.subr.mxu0 %v1412
        %1526 = vmatpush1.msra.mxu0 %v1404
        %1527 = vmatprep.subr.mxu0 %v1411
        %1528 = vmatpush1.msra.mxu0 %v1403
        %1529 = vmatprep.subr.mxu0 %v1393
        %1530 = vmatpush1.msra.mxu0 %v1385
        %1531 = vmatprep.subr.mxu0 %v1392
        %1532 = vmatpush1.msra.mxu0 %v1384
        %1533 = vmatprep.subr.mxu0 %v1374
        %1534 = vmatpush1.msra.mxu0 %v1366
        %1535 = vmatprep.subr.mxu0 %v1373
        %1536 = vmatpush1.msra.mxu0 %v1365
        %1537 = vmatprep.subr.mxu0 %v1355
        %1538 = vmatpush1.msra.mxu0 %v1347
        %1539 = vmatprep.subr.mxu0 %v1354
        %1540 = vmatpush1.msra.mxu0 %v1346
        %1541 = vmatprep.subr.mxu0 %v1332
        %1542 = vmatpush1.msra.mxu0 %v1331
        %1543 = vmatprep.subr.mxu0 %v1330
        %1544 = vmatpush1.msra.mxu0 %v1329
        %1545 = vmatprep.subr.mxu0 0.0
        %1546 = vmatpush2.msra.mxu0 0.0
        %1547 = vmatprep.subr.mxu0 0.0
        %1548 = vmatpush2.msra.mxu0 0.0
        %1549 = vmatprep.subr.mxu0 0.0
        %1550 = vmatpush2.msra.mxu0 0.0
        %1551 = vmatprep.subr.mxu0 0.0
        %1552 = vmatpush2.msra.mxu0 0.0
        %1553 = vmatprep.subr.mxu0 0.0
        %1554 = vmatpush2.msra.mxu0 0.0
        %1555 = vmatprep.subr.mxu0 0.0
        %1556 = vmatpush2.msra.mxu0 0.0
        %1557 = vmatprep.subr.mxu0 0.0
        %1558 = vmatpush2.msra.mxu0 0.0
        %1559 = vmatprep.subr.mxu0 0.0
        %1560 = vmatpush2.msra.mxu0 0.0
        %1561 = vmatprep.subr.mxu0 0.0
        %1562 = vmatpush2.msra.mxu0 0.0
        %1563 = vmatprep.subr.mxu0 0.0
        %1564 = vmatpush2.msra.mxu0 0.0
        %1565 = vmatprep.subr.mxu0 0.0
        %1566 = vmatpush2.msra.mxu0 0.0
        %1567 = vmatprep.subr.mxu0 0.0
        %1568 = vmatpush2.msra.mxu0 0.0
        %1569 = vmatprep.subr.mxu0 0.0
        %1570 = vmatpush2.msra.mxu0 0.0
        %1571 = vmatprep.subr.mxu0 0.0
        %1572 = vmatpush2.msra.mxu0 0.0
        %1573 = vmatprep.subr.mxu0 %v1488
        %1574 = vmatpush2.msra.mxu0 %v1480
        %1575 = vmatprep.subr.mxu0 %v1487
        %1576 = vmatpush2.msra.mxu0 %v1479
        %1577 = vmatprep.mubr.f32.mxu0 %v1508
        %1578 = vmatmul.mubr.f32.gmra.mxu0 %v1491
        %v1579 = vpop.f32.mrf.mxu0
        %v1580 = vadd.f32 %v1500, %v1579
        %v1581 = vpop.f32.mrf.mxu0
        %v1582 = vadd.f32 %v1500, %v1581
        %1583 = vmatprep.mubr.f32.mxu0 %v1511
        %1584 = vmatmul.mubr.f32.gmra.mxu0 %v1493
        %v1585 = vpop.f32.mrf.mxu0
        %v1586 = vadd.f32 %v1505, %v1585
        %v1587 = vpop.f32.mrf.mxu0
        %v1588 = vadd.f32 %v1505, %v1587
        %1589 = vdwg.mxu0
        %v1590 = vmax.f32 %v1580, 0.0
        %v1591 = vmax.f32 %v1582, 0.0
        %v1592 = vmax.f32 %v1586, 0.0
        %v1593 = vmax.f32 %v1588, 0.0
        %v1594 = vld [vmem:[%s7] sm:$0xf]
        %v1595 = vld [vmem:[%s7 + $0x4] sm:$0xf]
        %v1596 = vld [vmem:[%s7 + $0x8] sm:$0xf]
        %v1597 = vld [vmem:[%s7 + $0xc] sm:$0xf]
        %v1598 = vld [vmem:[%s7 + $0x10] sm:$0xf]
        %v1599 = vld [vmem:[%s7 + $0x14] sm:$0xf]
        %v1600 = vld [vmem:[%s7 + $0x18] sm:$0xf]
        %v1601 = vld [vmem:[%s7 + $0x1c] sm:$0xf]
        %v1602 = vld [vmem:[%s7 + $0x20] sm:$0xf]
        %v1603 = vld [vmem:[%s7 + $0x24] sm:$0xf]
        %v1604 = vld [vmem:[%s7 + $0x28] sm:$0xf]
        %v1605 = vld [vmem:[%s7 + $0x2c] sm:$0xf]
        %v1606 = vld [vmem:[%s7 + $0x30] sm:$0xf]
        %v1607 = vld [vmem:[%s7 + $0x34] sm:$0xf]
        %v1608 = vld [vmem:[%s7 + $0x38] sm:$0xf]
        %v1609 = vld [vmem:[%s7 + $0x3c] sm:$0xf]
        %v1610 = vld [vmem:[%s7 + $0x40] sm:$0xf]
        %v1611 = vld [vmem:[%s7 + $0x44] sm:$0xf]
        %v1612 = vld [vmem:[%s7 + $0x48] sm:$0xf]
        %v1613 = vld [vmem:[%s7 + $0x4c] sm:$0xf]
        %v1614 = vld [vmem:[%s7 + $0x50] sm:$0xf]
        %v1615 = vld [vmem:[%s7 + $0x54] sm:$0xf]
        %v1616 = vld [vmem:[%s7 + $0x58] sm:$0xf]
        %v1617 = vld [vmem:[%s7 + $0x5c] sm:$0xf]
        %v1618 = vld [vmem:[%s7 + $0x60] sm:$0xf]
        %v1619 = vld [vmem:[%s7 + $0x64] sm:$0xf]
        %v1620 = vld [vmem:[%s7 + $0x68] sm:$0xf]
        %v1621 = vld [vmem:[%s7 + $0x6c] sm:$0xf]
        %v1622 = vld [vmem:[%s7 + $0x70] sm:$0xf]
        %v1623 = vld [vmem:[%s7 + $0x74] sm:$0xf]
        %v1624 = vld [vmem:[%s7 + $0x78] sm:$0xf]
        %v1625 = vld [vmem:[%s7 + $0x7c] sm:$0xf]
        %v1626 = vld [vmem:[%s7 + $0x80] sm:$0xf]
        %v1627 = vld [vmem:[%s7 + $0x84] sm:$0xf]
        %v1628 = vld [vmem:[%s7 + $0x88] sm:$0xf]
        %v1629 = vld [vmem:[%s7 + $0x8c] sm:$0xf]
        %v1630 = vld [vmem:[%s7 + $0x90] sm:$0xf]
        %v1631 = vld [vmem:[%s7 + $0x94] sm:$0xf]
        %v1632 = vld [vmem:[%s7 + $0x98] sm:$0xf]
        %v1633 = vld [vmem:[%s7 + $0x9c] sm:$0xf]
        %v1634 = vld [vmem:[%s7 + $0xa0] sm:$0xf]
        %v1635 = vld [vmem:[%s7 + $0xa4] sm:$0xf]
        %v1636 = vld [vmem:[%s7 + $0xa8] sm:$0xf]
        %v1637 = vld [vmem:[%s7 + $0xac] sm:$0xf]
        %v1638 = vld [vmem:[%s7 + $0xb0] sm:$0xf]
        %v1639 = vld [vmem:[%s7 + $0xb4] sm:$0xf]
        %v1640 = vld [vmem:[%s7 + $0xb8] sm:$0xf]
        %v1641 = vld [vmem:[%s7 + $0xbc] sm:$0xf]
        %v1642 = vld [vmem:[%s7 + $0xc0] sm:$0xf]
        %v1643 = vld [vmem:[%s7 + $0xc4] sm:$0xf]
        %v1644 = vld [vmem:[%s7 + $0xc8] sm:$0xf]
        %v1645 = vld [vmem:[%s7 + $0xcc] sm:$0xf]
        %v1646 = vld [vmem:[%s7 + $0xd0] sm:$0xf]
        %v1647 = vld [vmem:[%s7 + $0xd4] sm:$0xf]
        %v1648 = vld [vmem:[%s7 + $0xd8] sm:$0xf]
        %v1649 = vld [vmem:[%s7 + $0xdc] sm:$0xf]
        %v1650 = vld [vmem:[%s7 + $0xe0] sm:$0xf]
        %v1651 = vld [vmem:[%s7 + $0xe4] sm:$0xf]
        %v1652 = vld [vmem:[%s7 + $0xe8] sm:$0xf]
        %v1653 = vld [vmem:[%s7 + $0xec] sm:$0xf]
        %v1654 = vld [vmem:[%s7 + $0xf0] sm:$0xf]
        %v1655 = vld [vmem:[%s7 + $0xf4] sm:$0xf]
        %v1656 = vld [vmem:[%s7 + $0xf8] sm:$0xf]
        %v1657 = vld [vmem:[%s7 + $0xfc] sm:$0xf]
        %v1658 = vld [vmem:[%s7 + $0x100] sm:$0xf]
        %v1659 = vld [vmem:[%s7 + $0x104] sm:$0xf]
        %v1660 = vld [vmem:[%s7 + $0x108] sm:$0xf]
        %v1661 = vld [vmem:[%s7 + $0x10c] sm:$0xf]
        %v1662 = vld [vmem:[%s7 + $0x110] sm:$0xf]
        %v1663 = vld [vmem:[%s7 + $0x114] sm:$0xf]
        %v1664 = vld [vmem:[%s7 + $0x118] sm:$0xf]
        %v1665 = vld [vmem:[%s7 + $0x11c] sm:$0xf]
        %v1666 = vld [vmem:[%s7 + $0x120] sm:$0xf]
        %v1667 = vld [vmem:[%s7 + $0x124] sm:$0xf]
        %v1668 = vld [vmem:[%s7 + $0x128] sm:$0xf]
        %v1669 = vld [vmem:[%s7 + $0x12c] sm:$0xf]
        %v1670 = vld [vmem:[%s7 + $0x130] sm:$0xf]
        %v1671 = vld [vmem:[%s7 + $0x134] sm:$0xf]
        %v1672 = vld [vmem:[%s7 + $0x138] sm:$0xf]
        %v1673 = vld [vmem:[%s7 + $0x13c] sm:$0xf]
        %v1674 = vld [vmem:[%s7 + $0x140] sm:$0xf]
        %v1675 = vld [vmem:[%s7 + $0x144] sm:$0xf]
        %v1676 = vld [vmem:[%s7 + $0x148] sm:$0xf]
        %v1677 = vld [vmem:[%s7 + $0x14c] sm:$0xf]
        %v1678 = vld [vmem:[%s7 + $0x150] sm:$0xf]
        %v1679 = vld [vmem:[%s7 + $0x154] sm:$0xf]
        %v1680 = vld [vmem:[%s7 + $0x158] sm:$0xf]
        %v1681 = vld [vmem:[%s7 + $0x15c] sm:$0xf]
        %v1682 = vld [vmem:[%s7 + $0x160] sm:$0xf]
        %v1683 = vld [vmem:[%s7 + $0x164] sm:$0xf]
        %v1684 = vld [vmem:[%s7 + $0x168] sm:$0xf]
        %v1685 = vld [vmem:[%s7 + $0x16c] sm:$0xf]
        %v1686 = vld [vmem:[%s7 + $0x170] sm:$0xf]
        %v1687 = vld [vmem:[%s7 + $0x174] sm:$0xf]
        %v1688 = vld [vmem:[%s7 + $0x178] sm:$0xf]
        %v1689 = vld [vmem:[%s7 + $0x17c] sm:$0xf]
        %v1690 = vld [vmem:[%s7 + $0x180] sm:$0xf]
        %v1691 = vld [vmem:[%s7 + $0x184] sm:$0xf]
        %v1692 = vld [vmem:[%s7 + $0x188] sm:$0xf]
        %v1693 = vld [vmem:[%s7 + $0x18c] sm:$0xf]
        %v1694 = vld [vmem:[%s7 + $0x190] sm:$0xf]
        %v1695 = vld [vmem:[%s7 + $0x194] sm:$0xf]
        %v1696 = vld [vmem:[%s7 + $0x198] sm:$0xf]
        %v1697 = vld [vmem:[%s7 + $0x19c] sm:$0xf]
        %v1698 = vld [vmem:[%s7 + $0x1a0] sm:$0xf]
        %v1699 = vld [vmem:[%s7 + $0x1a4] sm:$0xf]
        %v1700 = vld [vmem:[%s7 + $0x1a8] sm:$0xf]
        %v1701 = vld [vmem:[%s7 + $0x1ac] sm:$0xf]
        %v1702 = vld [vmem:[%s7 + $0x1b0] sm:$0xf]
        %v1703 = vld [vmem:[%s7 + $0x1b4] sm:$0xf]
        %v1704 = vld [vmem:[%s7 + $0x1b8] sm:$0xf]
        %v1705 = vld [vmem:[%s7 + $0x1bc] sm:$0xf]
        %v1706 = vld [vmem:[%s7 + $0x1c0] sm:$0xf]
        %v1707 = vld [vmem:[%s7 + $0x1c4] sm:$0xf]
        %v1708 = vld [vmem:[%s7 + $0x1c8] sm:$0xf]
        %v1709 = vld [vmem:[%s7 + $0x1cc] sm:$0xf]
        %v1710 = vld [vmem:[%s7 + $0x1d0] sm:$0xf]
        %v1711 = vld [vmem:[%s7 + $0x1d4] sm:$0xf]
        %v1712 = vld [vmem:[%s7 + $0x1d8] sm:$0xf]
        %v1713 = vld [vmem:[%s7 + $0x1dc] sm:$0xf]
        %v1714 = vld [vmem:[%s7 + $0x1e0] sm:$0xf]
        %v1715 = vld [vmem:[%s7 + $0x1e4] sm:$0xf]
        %v1716 = vld [vmem:[%s7 + $0x1e8] sm:$0xf]
        %v1717 = vld [vmem:[%s7 + $0x1ec] sm:$0xf]
        %v1718 = vld [vmem:[%s7 + $0x1f0] sm:$0xf]
        %v1719 = vld [vmem:[%s7 + $0x1f4] sm:$0xf]
        %v1720 = vld [vmem:[%s7 + $0x1f8] sm:$0xf]
        %v1721 = vld [vmem:[%s7 + $0x1fc] sm:$0xf]
        %v1722 = vld [vmem:[%s7 + $0x200] sm:$0xf]
        %v1723 = vld [vmem:[%s7 + $0x204] sm:$0xf]
        %v1724 = vld [vmem:[%s7 + $0x208] sm:$0xf]
        %v1725 = vld [vmem:[%s7 + $0x20c] sm:$0xf]
        %v1726 = vld [vmem:[%s7 + $0x210] sm:$0xf]
        %v1727 = vld [vmem:[%s7 + $0x214] sm:$0xf]
        %v1728 = vld [vmem:[%s7 + $0x218] sm:$0xf]
        %v1729 = vld [vmem:[%s7 + $0x21c] sm:$0xf]
        %v1730 = vld [vmem:[%s7 + $0x220] sm:$0xf]
        %v1731 = vld [vmem:[%s7 + $0x224] sm:$0xf]
        %v1732 = vld [vmem:[%s7 + $0x228] sm:$0xf]
        %v1733 = vld [vmem:[%s7 + $0x22c] sm:$0xf]
        %v1734 = vld [vmem:[%s7 + $0x230] sm:$0xf]
        %v1735 = vld [vmem:[%s7 + $0x234] sm:$0xf]
        %v1736 = vld [vmem:[%s7 + $0x238] sm:$0xf]
        %v1737 = vld [vmem:[%s7 + $0x23c] sm:$0xf]
        %v1738 = vld [vmem:[%s7 + $0x240] sm:$0xf]
        %v1739 = vld [vmem:[%s7 + $0x244] sm:$0xf]
        %v1740 = vld [vmem:[%s7 + $0x248] sm:$0xf]
        %v1741 = vld [vmem:[%s7 + $0x24c] sm:$0xf]
        %v1742 = vld [vmem:[%s7 + $0x250] sm:$0xf]
        %v1743 = vld [vmem:[%s7 + $0x254] sm:$0xf]
        %v1744 = vld [vmem:[%s7 + $0x258] sm:$0xf]
        %v1745 = vld [vmem:[%s7 + $0x25c] sm:$0xf]
        %v1746 = vld [vmem:[%s7 + $0x260] sm:$0xf]
        %v1747 = vld [vmem:[%s7 + $0x264] sm:$0xf]
        %v1748 = vld [vmem:[%s7 + $0x268] sm:$0xf]
        %v1749 = vld [vmem:[%s7 + $0x26c] sm:$0xf]
        %v1750 = vld [vmem:[%s7 + $0x270] sm:$0xf]
        %v1751 = vld [vmem:[%s7 + $0x274] sm:$0xf]
        %v1752 = vld [vmem:[%s7 + $0x278] sm:$0xf]
        %v1753 = vld [vmem:[%s7 + $0x27c] sm:$0xf]
        %v1754 = vld [vmem:[%s7 + $0x280] sm:$0xf]
        %v1755 = vld [vmem:[%s7 + $0x284] sm:$0xf]
        %v1756 = vld [vmem:[%s7 + $0x288] sm:$0xf]
        %v1757 = vld [vmem:[%s7 + $0x28c] sm:$0xf]
        %v1758 = vld [vmem:[%s7 + $0x290] sm:$0xf]
        %v1759 = vld [vmem:[%s7 + $0x294] sm:$0xf]
        %v1760 = vld [vmem:[%s7 + $0x298] sm:$0xf]
        %v1761 = vld [vmem:[%s7 + $0x29c] sm:$0xf]
        %v1762 = vld [vmem:[%s7 + $0x2a0] sm:$0xf]
        %v1763 = vld [vmem:[%s7 + $0x2a4] sm:$0xf]
        %v1764 = vld [vmem:[%s7 + $0x2a8] sm:$0xf]
        %v1765 = vld [vmem:[%s7 + $0x2ac] sm:$0xf]
        %v1766 = vld [vmem:[%s7 + $0x2b0] sm:$0xf]
        %v1767 = vld [vmem:[%s7 + $0x2b4] sm:$0xf]
        %v1768 = vld [vmem:[%s7 + $0x2b8] sm:$0xf]
        %v1769 = vld [vmem:[%s7 + $0x2bc] sm:$0xf]
        %v1770 = vld [vmem:[%s7 + $0x2c0] sm:$0xf]
        %v1771 = vld [vmem:[%s7 + $0x2c4] sm:$0xf]
        %v1772 = vld [vmem:[%s7 + $0x2c8] sm:$0xf]
        %v1773 = vld [vmem:[%s7 + $0x2cc] sm:$0xf]
        %v1774 = vld [vmem:[%s7 + $0x2d0] sm:$0xf]
        %v1775 = vld [vmem:[%s7 + $0x2d4] sm:$0xf]
        %v1776 = vld [vmem:[%s7 + $0x2d8] sm:$0xf]
        %v1777 = vld [vmem:[%s7 + $0x2dc] sm:$0xf]
        %v1778 = vld [vmem:[%s7 + $0x2e0] sm:$0xf]
        %v1779 = vld [vmem:[%s7 + $0x2e4] sm:$0xf]
        %v1780 = vld [vmem:[%s7 + $0x2e8] sm:$0xf]
        %v1781 = vld [vmem:[%s7 + $0x2ec] sm:$0xf]
        %v1782 = vld [vmem:[%s7 + $0x2f0] sm:$0xf]
        %v1783 = vld [vmem:[%s7 + $0x2f4] sm:$0xf]
        %v1784 = vld [vmem:[%s7 + $0x2f8] sm:$0xf]
        %v1785 = vld [vmem:[%s7 + $0x2fc] sm:$0xf]
        %v1786 = vld [vmem:[%s7 + $0x300] sm:$0xf]
        %v1787 = vld [vmem:[%s7 + $0x304] sm:$0xf]
        %v1788 = vld [vmem:[%s7 + $0x308] sm:$0xf]
        %v1789 = vld [vmem:[%s7 + $0x30c] sm:$0xf]
        %v1790 = vld [vmem:[%s7 + $0x310] sm:$0xf]
        %v1791 = vld [vmem:[%s7 + $0x314] sm:$0xf]
        %v1792 = vld [vmem:[%s7 + $0x318] sm:$0xf]
        %v1793 = vld [vmem:[%s7 + $0x31c] sm:$0xf]
        %v1794 = vld [vmem:[%s7 + $0x320] sm:$0xf]
        %v1795 = vld [vmem:[%s7 + $0x324] sm:$0xf]
        %v1796 = vld [vmem:[%s7 + $0x328] sm:$0xf]
        %v1797 = vld [vmem:[%s7 + $0x32c] sm:$0xf]
        %v1798 = vld [vmem:[%s7 + $0x330] sm:$0xf]
        %v1799 = vld [vmem:[%s7 + $0x334] sm:$0xf]
        %v1800 = vld [vmem:[%s7 + $0x338] sm:$0xf]
        %v1801 = vld [vmem:[%s7 + $0x33c] sm:$0xf]
        %v1802 = vld [vmem:[%s7 + $0x340] sm:$0xf]
        %v1803 = vld [vmem:[%s7 + $0x344] sm:$0xf]
        %v1804 = vld [vmem:[%s7 + $0x348] sm:$0xf]
        %v1805 = vld [vmem:[%s7 + $0x34c] sm:$0xf]
        %v1806 = vld [vmem:[%s7 + $0x350] sm:$0xf]
        %v1807 = vld [vmem:[%s7 + $0x354] sm:$0xf]
        %v1808 = vld [vmem:[%s7 + $0x358] sm:$0xf]
        %v1809 = vld [vmem:[%s7 + $0x35c] sm:$0xf]
        %v1810 = vld [vmem:[%s7 + $0x360] sm:$0xf]
        %v1811 = vld [vmem:[%s7 + $0x364] sm:$0xf]
        %v1812 = vld [vmem:[%s7 + $0x368] sm:$0xf]
        %v1813 = vld [vmem:[%s7 + $0x36c] sm:$0xf]
        %v1814 = vld [vmem:[%s7 + $0x370] sm:$0xf]
        %v1815 = vld [vmem:[%s7 + $0x374] sm:$0xf]
        %v1816 = vld [vmem:[%s7 + $0x378] sm:$0xf]
        %v1817 = vld [vmem:[%s7 + $0x37c] sm:$0xf]
        %v1818 = vld [vmem:[%s7 + $0x380] sm:$0xf]
        %v1819 = vld [vmem:[%s7 + $0x384] sm:$0xf]
        %v1820 = vld [vmem:[%s7 + $0x388] sm:$0xf]
        %v1821 = vld [vmem:[%s7 + $0x38c] sm:$0xf]
        %v1822 = vld [vmem:[%s7 + $0x390] sm:$0xf]
        %v1823 = vld [vmem:[%s7 + $0x394] sm:$0xf]
        %v1824 = vld [vmem:[%s7 + $0x398] sm:$0xf]
        %v1825 = vld [vmem:[%s7 + $0x39c] sm:$0xf]
        %v1826 = vld [vmem:[%s7 + $0x3a0] sm:$0xf]
        %v1827 = vld [vmem:[%s7 + $0x3a4] sm:$0xf]
        %v1828 = vld [vmem:[%s7 + $0x3a8] sm:$0xf]
        %v1829 = vld [vmem:[%s7 + $0x3ac] sm:$0xf]
        %v1830 = vld [vmem:[%s7 + $0x3b0] sm:$0xf]
        %v1831 = vld [vmem:[%s7 + $0x3b4] sm:$0xf]
        %v1832 = vld [vmem:[%s7 + $0x3b8] sm:$0xf]
        %v1833 = vld [vmem:[%s7 + $0x3bc] sm:$0xf]
        %v1834 = vld [vmem:[%s7 + $0x3c0] sm:$0xf]
        %v1835 = vld [vmem:[%s7 + $0x3c4] sm:$0xf]
        %v1836 = vld [vmem:[%s7 + $0x3c8] sm:$0xf]
        %v1837 = vld [vmem:[%s7 + $0x3cc] sm:$0xf]
        %v1838 = vld [vmem:[%s7 + $0x3d0] sm:$0xf]
        %v1839 = vld [vmem:[%s7 + $0x3d4] sm:$0xf]
        %v1840 = vld [vmem:[%s7 + $0x3d8] sm:$0xf]
        %v1841 = vld [vmem:[%s7 + $0x3dc] sm:$0xf]
        %v1842 = vld [vmem:[%s7 + $0x3e0] sm:$0xf]
        %v1843 = vld [vmem:[%s7 + $0x3e4] sm:$0xf]
        %v1844 = vld [vmem:[%s7 + $0x3e8] sm:$0xf]
        %v1845 = vld [vmem:[%s7 + $0x3ec] sm:$0xf]
        %v1846 = vld [vmem:[%s7 + $0x3f0] sm:$0xf]
        %v1847 = vld [vmem:[%s7 + $0x3f4] sm:$0xf]
        %v1848 = vld [vmem:[%s7 + $0x3f8] sm:$0xf]
        %v1849 = vld [vmem:[%s7 + $0x3fc] sm:$0xf]
        %v1850 = vld [vmem:[%s7 + $0x400] sm:$0xf]
        %v1851 = vld [vmem:[%s7 + $0x404] sm:$0xf]
        %v1852 = vld [vmem:[%s7 + $0x408] sm:$0xf]
        %v1853 = vld [vmem:[%s7 + $0x40c] sm:$0xf]
        %v1854 = vld [vmem:[%s7 + $0x410] sm:$0xf]
        %v1855 = vld [vmem:[%s7 + $0x414] sm:$0xf]
        %v1856 = vld [vmem:[%s7 + $0x418] sm:$0xf]
        %v1857 = vld [vmem:[%s7 + $0x41c] sm:$0xf]
        %v1858 = vld [vmem:[%s7 + $0x420] sm:$0xf]
        %v1859 = vld [vmem:[%s7 + $0x424] sm:$0xf]
        %v1860 = vld [vmem:[%s7 + $0x428] sm:$0xf]
        %v1861 = vld [vmem:[%s7 + $0x42c] sm:$0xf]
        %v1862 = vld [vmem:[%s7 + $0x430] sm:$0xf]
        %v1863 = vld [vmem:[%s7 + $0x434] sm:$0xf]
        %v1864 = vld [vmem:[%s7 + $0x438] sm:$0xf]
        %v1865 = vld [vmem:[%s7 + $0x43c] sm:$0xf]
        %v1866 = vld [vmem:[%s7 + $0x440] sm:$0xf]
        %v1867 = vld [vmem:[%s7 + $0x444] sm:$0xf]
        %v1868 = vld [vmem:[%s7 + $0x448] sm:$0xf]
        %v1869 = vld [vmem:[%s7 + $0x44c] sm:$0xf]
        %v1870 = vld [vmem:[%s7 + $0x450] sm:$0xf]
        %v1871 = vld [vmem:[%s7 + $0x454] sm:$0xf]
        %v1872 = vld [vmem:[%s7 + $0x458] sm:$0xf]
        %v1873 = vld [vmem:[%s7 + $0x45c] sm:$0xf]
        %v1874 = vld [vmem:[%s7 + $0x460] sm:$0xf]
        %v1875 = vld [vmem:[%s7 + $0x464] sm:$0xf]
        %v1876 = vld [vmem:[%s7 + $0x468] sm:$0xf]
        %v1877 = vld [vmem:[%s7 + $0x46c] sm:$0xf]
        %v1878 = vld [vmem:[%s7 + $0x470] sm:$0xf]
        %v1879 = vld [vmem:[%s7 + $0x474] sm:$0xf]
        %v1880 = vld [vmem:[%s7 + $0x478] sm:$0xf]
        %v1881 = vld [vmem:[%s7 + $0x47c] sm:$0xf]
        %v1882 = vld [vmem:[%s7 + $0x480] sm:$0xf]
        %v1883 = vld [vmem:[%s7 + $0x484] sm:$0xf]
        %v1884 = vld [vmem:[%s7 + $0x488] sm:$0xf]
        %v1885 = vld [vmem:[%s7 + $0x48c] sm:$0xf]
        %v1886 = vld [vmem:[%s7 + $0x490] sm:$0xf]
        %v1887 = vld [vmem:[%s7 + $0x494] sm:$0xf]
        %v1888 = vld [vmem:[%s7 + $0x498] sm:$0xf]
        %v1889 = vld [vmem:[%s7 + $0x49c] sm:$0xf]
        %v1890 = vld [vmem:[%s7 + $0x4a0] sm:$0xf]
        %v1891 = vld [vmem:[%s7 + $0x4a4] sm:$0xf]
        %v1892 = vld [vmem:[%s7 + $0x4a8] sm:$0xf]
        %v1893 = vld [vmem:[%s7 + $0x4ac] sm:$0xf]
        %v1894 = vld [vmem:[%s7 + $0x4b0] sm:$0xf]
        %v1895 = vld [vmem:[%s7 + $0x4b4] sm:$0xf]
        %v1896 = vld [vmem:[%s7 + $0x4b8] sm:$0xf]
        %v1897 = vld [vmem:[%s7 + $0x4bc] sm:$0xf]
        %v1898 = vld [vmem:[%s7 + $0x4c0] sm:$0xf]
        %v1899 = vld [vmem:[%s7 + $0x4c4] sm:$0xf]
        %v1900 = vld [vmem:[%s7 + $0x4c8] sm:$0xf]
        %v1901 = vld [vmem:[%s7 + $0x4cc] sm:$0xf]
        %v1902 = vld [vmem:[%s7 + $0x4d0] sm:$0xf]
        %v1903 = vld [vmem:[%s7 + $0x4d4] sm:$0xf]
        %v1904 = vld [vmem:[%s7 + $0x4d8] sm:$0xf]
        %v1905 = vld [vmem:[%s7 + $0x4dc] sm:$0xf]
        %v1906 = vld [vmem:[%s7 + $0x4e0] sm:$0xf]
        %v1907 = vld [vmem:[%s7 + $0x4e4] sm:$0xf]
        %v1908 = vld [vmem:[%s7 + $0x4e8] sm:$0xf]
        %v1909 = vld [vmem:[%s7 + $0x4ec] sm:$0xf]
        %v1910 = vld [vmem:[%s7 + $0x4f0] sm:$0xf]
        %v1911 = vld [vmem:[%s7 + $0x4f4] sm:$0xf]
        %v1912 = vld [vmem:[%s7 + $0x4f8] sm:$0xf]
        %v1913 = vld [vmem:[%s7 + $0x4fc] sm:$0xf]
        %v1914 = vld [vmem:[%s7 + $0x500] sm:$0xf]
        %v1915 = vld [vmem:[%s7 + $0x504] sm:$0xf]
        %v1916 = vld [vmem:[%s7 + $0x508] sm:$0xf]
        %v1917 = vld [vmem:[%s7 + $0x50c] sm:$0xf]
        %v1918 = vld [vmem:[%s7 + $0x510] sm:$0xf]
        %v1919 = vld [vmem:[%s7 + $0x514] sm:$0xf]
        %v1920 = vld [vmem:[%s7 + $0x518] sm:$0xf]
        %v1921 = vld [vmem:[%s7 + $0x51c] sm:$0xf]
        %v1922 = vld [vmem:[%s7 + $0x520] sm:$0xf]
        %v1923 = vld [vmem:[%s7 + $0x524] sm:$0xf]
        %v1924 = vld [vmem:[%s7 + $0x528] sm:$0xf]
        %v1925 = vld [vmem:[%s7 + $0x52c] sm:$0xf]
        %v1926 = vld [vmem:[%s7 + $0x530] sm:$0xf]
        %v1927 = vld [vmem:[%s7 + $0x534] sm:$0xf]
        %v1928 = vld [vmem:[%s7 + $0x538] sm:$0xf]
        %v1929 = vld [vmem:[%s7 + $0x53c] sm:$0xf]
        %v1930 = vld [vmem:[%s7 + $0x540] sm:$0xf]
        %v1931 = vld [vmem:[%s7 + $0x544] sm:$0xf]
        %v1932 = vld [vmem:[%s7 + $0x548] sm:$0xf]
        %v1933 = vld [vmem:[%s7 + $0x54c] sm:$0xf]
        %v1934 = vld [vmem:[%s7 + $0x550] sm:$0xf]
        %v1935 = vld [vmem:[%s7 + $0x554] sm:$0xf]
        %v1936 = vld [vmem:[%s7 + $0x558] sm:$0xf]
        %v1937 = vld [vmem:[%s7 + $0x55c] sm:$0xf]
        %v1938 = vld [vmem:[%s7 + $0x560] sm:$0xf]
        %v1939 = vld [vmem:[%s7 + $0x564] sm:$0xf]
        %v1940 = vld [vmem:[%s7 + $0x568] sm:$0xf]
        %v1941 = vld [vmem:[%s7 + $0x56c] sm:$0xf]
        %v1942 = vld [vmem:[%s7 + $0x570] sm:$0xf]
        %v1943 = vld [vmem:[%s7 + $0x574] sm:$0xf]
        %v1944 = vld [vmem:[%s7 + $0x578] sm:$0xf]
        %v1945 = vld [vmem:[%s7 + $0x57c] sm:$0xf]
        %v1946 = vld [vmem:[%s7 + $0x580] sm:$0xf]
        %v1947 = vld [vmem:[%s7 + $0x584] sm:$0xf]
        %v1948 = vld [vmem:[%s7 + $0x588] sm:$0xf]
        %v1949 = vld [vmem:[%s7 + $0x58c] sm:$0xf]
        %v1950 = vld [vmem:[%s7 + $0x590] sm:$0xf]
        %v1951 = vld [vmem:[%s7 + $0x594] sm:$0xf]
        %v1952 = vld [vmem:[%s7 + $0x598] sm:$0xf]
        %v1953 = vld [vmem:[%s7 + $0x59c] sm:$0xf]
        %v1954 = vld [vmem:[%s7 + $0x5a0] sm:$0xf]
        %v1955 = vld [vmem:[%s7 + $0x5a4] sm:$0xf]
        %v1956 = vld [vmem:[%s7 + $0x5a8] sm:$0xf]
        %v1957 = vld [vmem:[%s7 + $0x5ac] sm:$0xf]
        %v1958 = vld [vmem:[%s7 + $0x5b0] sm:$0xf]
        %v1959 = vld [vmem:[%s7 + $0x5b4] sm:$0xf]
        %v1960 = vld [vmem:[%s7 + $0x5b8] sm:$0xf]
        %v1961 = vld [vmem:[%s7 + $0x5bc] sm:$0xf]
        %v1962 = vld [vmem:[%s7 + $0x5c0] sm:$0xf]
        %v1963 = vld [vmem:[%s7 + $0x5c4] sm:$0xf]
        %v1964 = vld [vmem:[%s7 + $0x5c8] sm:$0xf]
        %v1965 = vld [vmem:[%s7 + $0x5cc] sm:$0xf]
        %v1966 = vld [vmem:[%s7 + $0x5d0] sm:$0xf]
        %v1967 = vld [vmem:[%s7 + $0x5d4] sm:$0xf]
        %v1968 = vld [vmem:[%s7 + $0x5d8] sm:$0xf]
        %v1969 = vld [vmem:[%s7 + $0x5dc] sm:$0xf]
        %v1970 = vld [vmem:[%s7 + $0x5e0] sm:$0xf]
        %v1971 = vld [vmem:[%s7 + $0x5e4] sm:$0xf]
        %v1972 = vld [vmem:[%s7 + $0x5e8] sm:$0xf]
        %v1973 = vld [vmem:[%s7 + $0x5ec] sm:$0xf]
        %v1974 = vld [vmem:[%s7 + $0x5f0] sm:$0xf]
        %v1975 = vld [vmem:[%s7 + $0x5f4] sm:$0xf]
        %v1976 = vld [vmem:[%s7 + $0x5f8] sm:$0xf]
        %v1977 = vld [vmem:[%s7 + $0x5fc] sm:$0xf]
        %v1978 = vld [vmem:[%s7 + $0x600] sm:$0xf]
        %v1979 = vld [vmem:[%s7 + $0x604] sm:$0xf]
        %v1980 = vld [vmem:[%s7 + $0x608] sm:$0xf]
        %v1981 = vld [vmem:[%s7 + $0x60c] sm:$0xf]
        %v1982 = vld [vmem:[%s7 + $0x610] sm:$0xf]
        %v1983 = vld [vmem:[%s7 + $0x614] sm:$0xf]
        %v1984 = vld [vmem:[%s7 + $0x618] sm:$0xf]
        %v1985 = vld [vmem:[%s7 + $0x61c] sm:$0xf]
        %v1986 = vld [vmem:[%s7 + $0x620] sm:$0xf]
        %v1987 = vld [vmem:[%s7 + $0x624] sm:$0xf]
        %v1988 = vld [vmem:[%s7 + $0x628] sm:$0xf]
        %v1989 = vld [vmem:[%s7 + $0x62c] sm:$0xf]
        %v1990 = vld [vmem:[%s7 + $0x630] sm:$0xf]
        %v1991 = vld [vmem:[%s7 + $0x634] sm:$0xf]
        %v1992 = vld [vmem:[%s7 + $0x638] sm:$0xf]
        %v1993 = vld [vmem:[%s7 + $0x63c] sm:$0xf]
        %v1994 = vld [vmem:[%s7 + $0x640] sm:$0xf]
        %v1995 = vld [vmem:[%s7 + $0x644] sm:$0xf]
        %v1996 = vld [vmem:[%s7 + $0x648] sm:$0xf]
        %v1997 = vld [vmem:[%s7 + $0x64c] sm:$0xf]
        %v1998 = vld [vmem:[%s7 + $0x650] sm:$0xf]
        %v1999 = vld [vmem:[%s7 + $0x654] sm:$0xf]
        %v2000 = vld [vmem:[%s7 + $0x658] sm:$0xf]
        %v2001 = vld [vmem:[%s7 + $0x65c] sm:$0xf]
        %v2002 = vld [vmem:[%s7 + $0x660] sm:$0xf]
        %v2003 = vld [vmem:[%s7 + $0x664] sm:$0xf]
        %v2004 = vld [vmem:[%s7 + $0x668] sm:$0xf]
        %v2005 = vld [vmem:[%s7 + $0x66c] sm:$0xf]
        %v2006 = vld [vmem:[%s7 + $0x670] sm:$0xf]
        %v2007 = vld [vmem:[%s7 + $0x674] sm:$0xf]
        %v2008 = vld [vmem:[%s7 + $0x678] sm:$0xf]
        %v2009 = vld [vmem:[%s7 + $0x67c] sm:$0xf]
        %v2010 = vld [vmem:[%s7 + $0x680] sm:$0xf]
        %v2011 = vld [vmem:[%s7 + $0x684] sm:$0xf]
        %v2012 = vld [vmem:[%s7 + $0x688] sm:$0xf]
        %v2013 = vld [vmem:[%s7 + $0x68c] sm:$0xf]
        %v2014 = vld [vmem:[%s7 + $0x690] sm:$0xf]
        %v2015 = vld [vmem:[%s7 + $0x694] sm:$0xf]
        %v2016 = vld [vmem:[%s7 + $0x698] sm:$0xf]
        %v2017 = vld [vmem:[%s7 + $0x69c] sm:$0xf]
        %v2018 = vld [vmem:[%s7 + $0x6a0] sm:$0xf]
        %v2019 = vld [vmem:[%s7 + $0x6a4] sm:$0xf]
        %v2020 = vld [vmem:[%s7 + $0x6a8] sm:$0xf]
        %v2021 = vld [vmem:[%s7 + $0x6ac] sm:$0xf]
        %v2022 = vld [vmem:[%s7 + $0x6b0] sm:$0xf]
        %v2023 = vld [vmem:[%s7 + $0x6b4] sm:$0xf]
        %v2024 = vld [vmem:[%s7 + $0x6b8] sm:$0xf]
        %v2025 = vld [vmem:[%s7 + $0x6bc] sm:$0xf]
        %v2026 = vld [vmem:[%s7 + $0x6c0] sm:$0xf]
        %v2027 = vld [vmem:[%s7 + $0x6c4] sm:$0xf]
        %v2028 = vld [vmem:[%s7 + $0x6c8] sm:$0xf]
        %v2029 = vld [vmem:[%s7 + $0x6cc] sm:$0xf]
        %v2030 = vld [vmem:[%s7 + $0x6d0] sm:$0xf]
        %v2031 = vld [vmem:[%s7 + $0x6d4] sm:$0xf]
        %v2032 = vld [vmem:[%s7 + $0x6d8] sm:$0xf]
        %v2033 = vld [vmem:[%s7 + $0x6dc] sm:$0xf]
        %v2034 = vld [vmem:[%s7 + $0x6e0] sm:$0xf]
        %v2035 = vld [vmem:[%s7 + $0x6e4] sm:$0xf]
        %v2036 = vld [vmem:[%s7 + $0x6e8] sm:$0xf]
        %v2037 = vld [vmem:[%s7 + $0x6ec] sm:$0xf]
        %v2038 = vld [vmem:[%s7 + $0x6f0] sm:$0xf]
        %v2039 = vld [vmem:[%s7 + $0x6f4] sm:$0xf]
        %v2040 = vld [vmem:[%s7 + $0x6f8] sm:$0xf]
        %v2041 = vld [vmem:[%s7 + $0x6fc] sm:$0xf]
        %v2042 = vld [vmem:[%s7 + $0x700] sm:$0xf]
        %v2043 = vld [vmem:[%s7 + $0x704] sm:$0xf]
        %v2044 = vld [vmem:[%s7 + $0x708] sm:$0xf]
        %v2045 = vld [vmem:[%s7 + $0x70c] sm:$0xf]
        %v2046 = vld [vmem:[%s7 + $0x710] sm:$0xf]
        %v2047 = vld [vmem:[%s7 + $0x714] sm:$0xf]
        %v2048 = vld [vmem:[%s7 + $0x718] sm:$0xf]
        %v2049 = vld [vmem:[%s7 + $0x71c] sm:$0xf]
        %v2050 = vld [vmem:[%s7 + $0x720] sm:$0xf]
        %v2051 = vld [vmem:[%s7 + $0x724] sm:$0xf]
        %v2052 = vld [vmem:[%s7 + $0x728] sm:$0xf]
        %v2053 = vld [vmem:[%s7 + $0x72c] sm:$0xf]
        %v2054 = vld [vmem:[%s7 + $0x730] sm:$0xf]
        %v2055 = vld [vmem:[%s7 + $0x734] sm:$0xf]
        %v2056 = vld [vmem:[%s7 + $0x738] sm:$0xf]
        %v2057 = vld [vmem:[%s7 + $0x73c] sm:$0xf]
        %v2058 = vld [vmem:[%s7 + $0x740] sm:$0xf]
        %v2059 = vld [vmem:[%s7 + $0x744] sm:$0xf]
        %v2060 = vld [vmem:[%s7 + $0x748] sm:$0xf]
        %v2061 = vld [vmem:[%s7 + $0x74c] sm:$0xf]
        %v2062 = vld [vmem:[%s7 + $0x750] sm:$0xf]
        %v2063 = vld [vmem:[%s7 + $0x754] sm:$0xf]
        %v2064 = vld [vmem:[%s7 + $0x758] sm:$0xf]
        %v2065 = vld [vmem:[%s7 + $0x75c] sm:$0xf]
        %v2066 = vld [vmem:[%s7 + $0x760] sm:$0xf]
        %v2067 = vld [vmem:[%s7 + $0x764] sm:$0xf]
        %v2068 = vld [vmem:[%s7 + $0x768] sm:$0xf]
        %v2069 = vld [vmem:[%s7 + $0x76c] sm:$0xf]
        %v2070 = vld [vmem:[%s7 + $0x770] sm:$0xf]
        %v2071 = vld [vmem:[%s7 + $0x774] sm:$0xf]
        %v2072 = vld [vmem:[%s7 + $0x778] sm:$0xf]
        %v2073 = vld [vmem:[%s7 + $0x77c] sm:$0xf]
        %v2074 = vld [vmem:[%s7 + $0x780] sm:$0xf]
        %v2075 = vld [vmem:[%s7 + $0x784] sm:$0xf]
        %v2076 = vld [vmem:[%s7 + $0x788] sm:$0xf]
        %v2077 = vld [vmem:[%s7 + $0x78c] sm:$0xf]
        %v2078 = vld [vmem:[%s7 + $0x790] sm:$0xf]
        %v2079 = vld [vmem:[%s7 + $0x794] sm:$0xf]
        %v2080 = vld [vmem:[%s7 + $0x798] sm:$0xf]
        %v2081 = vld [vmem:[%s7 + $0x79c] sm:$0xf]
        %v2082 = vld [vmem:[%s7 + $0x7a0] sm:$0xf]
        %v2083 = vld [vmem:[%s7 + $0x7a4] sm:$0xf]
        %v2084 = vld [vmem:[%s7 + $0x7a8] sm:$0xf]
        %v2085 = vld [vmem:[%s7 + $0x7ac] sm:$0xf]
        %v2086 = vld [vmem:[%s7 + $0x7b0] sm:$0xf]
        %v2087 = vld [vmem:[%s7 + $0x7b4] sm:$0xf]
        %v2088 = vld [vmem:[%s7 + $0x7b8] sm:$0xf]
        %v2089 = vld [vmem:[%s7 + $0x7bc] sm:$0xf]
        %v2090 = vld [vmem:[%s7 + $0x7c0] sm:$0xf]
        %v2091 = vld [vmem:[%s7 + $0x7c4] sm:$0xf]
        %v2092 = vld [vmem:[%s7 + $0x7c8] sm:$0xf]
        %v2093 = vld [vmem:[%s7 + $0x7cc] sm:$0xf]
        %v2094 = vld [vmem:[%s7 + $0x7d0] sm:$0xf]
        %v2095 = vld [vmem:[%s7 + $0x7d4] sm:$0xf]
        %v2096 = vld [vmem:[%s7 + $0x7d8] sm:$0xf]
        %v2097 = vld [vmem:[%s7 + $0x7dc] sm:$0xf]
        %v2098 = vld [vmem:[%s7 + $0x7e0] sm:$0xf]
        %v2099 = vld [vmem:[%s7 + $0x7e4] sm:$0xf]
        %v2100 = vld [vmem:[%s7 + $0x7e8] sm:$0xf]
        %v2101 = vld [vmem:[%s7 + $0x7ec] sm:$0xf]
        %v2102 = vld [vmem:[%s7 + $0x7f0] sm:$0xf]
        %v2103 = vld [vmem:[%s7 + $0x7f4] sm:$0xf]
        %v2104 = vld [vmem:[%s7 + $0x7f8] sm:$0xf]
        %v2105 = vld [vmem:[%s7 + $0x7fc] sm:$0xf]
        %v2106 = vunpack.c.l.bf16 %v1594
        %v2107 = vunpack.c.l.bf16 %v1595
        %v2108 = vunpack.c.l.bf16 %v1596
        %v2109 = vunpack.c.l.bf16 %v1597
        %v2110 = vunpack.c.l.bf16 %v1598
        %v2111 = vunpack.c.l.bf16 %v1599
        %v2112 = vunpack.c.l.bf16 %v1600
        %v2113 = vunpack.c.l.bf16 %v1601
        %v2114 = vunpack.c.l.bf16 %v1602
        %v2115 = vunpack.c.l.bf16 %v1603
        %v2116 = vunpack.c.l.bf16 %v1604
        %v2117 = vunpack.c.l.bf16 %v1605
        %v2118 = vunpack.c.l.bf16 %v1606
        %v2119 = vunpack.c.l.bf16 %v1607
        %v2120 = vunpack.c.l.bf16 %v1608
        %v2121 = vunpack.c.l.bf16 %v1609
        %v2122 = vunpack.c.l.bf16 %v1610
        %v2123 = vunpack.c.l.bf16 %v1611
        %v2124 = vunpack.c.l.bf16 %v1612
        %v2125 = vunpack.c.l.bf16 %v1613
        %v2126 = vunpack.c.l.bf16 %v1614
        %v2127 = vunpack.c.l.bf16 %v1615
        %v2128 = vunpack.c.l.bf16 %v1616
        %v2129 = vunpack.c.l.bf16 %v1617
        %v2130 = vunpack.c.l.bf16 %v1618
        %v2131 = vunpack.c.l.bf16 %v1619
        %v2132 = vunpack.c.l.bf16 %v1620
        %v2133 = vunpack.c.l.bf16 %v1621
        %v2134 = vunpack.c.l.bf16 %v1622
        %v2135 = vunpack.c.l.bf16 %v1623
        %v2136 = vunpack.c.l.bf16 %v1624
        %v2137 = vunpack.c.l.bf16 %v1625
        %v2138 = vunpack.c.l.bf16 %v1626
        %v2139 = vunpack.c.l.bf16 %v1627
        %v2140 = vunpack.c.l.bf16 %v1628
        %v2141 = vunpack.c.l.bf16 %v1629
        %v2142 = vunpack.c.l.bf16 %v1630
        %v2143 = vunpack.c.l.bf16 %v1631
        %v2144 = vunpack.c.l.bf16 %v1632
        %v2145 = vunpack.c.l.bf16 %v1633
        %v2146 = vunpack.c.l.bf16 %v1634
        %v2147 = vunpack.c.l.bf16 %v1635
        %v2148 = vunpack.c.l.bf16 %v1636
        %v2149 = vunpack.c.l.bf16 %v1637
        %v2150 = vunpack.c.l.bf16 %v1638
        %v2151 = vunpack.c.l.bf16 %v1639
        %v2152 = vunpack.c.l.bf16 %v1640
        %v2153 = vunpack.c.l.bf16 %v1641
        %v2154 = vunpack.c.l.bf16 %v1642
        %v2155 = vunpack.c.l.bf16 %v1643
        %v2156 = vunpack.c.l.bf16 %v1644
        %v2157 = vunpack.c.l.bf16 %v1645
        %v2158 = vunpack.c.l.bf16 %v1646
        %v2159 = vunpack.c.l.bf16 %v1647
        %v2160 = vunpack.c.l.bf16 %v1648
        %v2161 = vunpack.c.l.bf16 %v1649
        %v2162 = vunpack.c.l.bf16 %v1650
        %v2163 = vunpack.c.l.bf16 %v1651
        %v2164 = vunpack.c.l.bf16 %v1652
        %v2165 = vunpack.c.l.bf16 %v1653
        %v2166 = vunpack.c.l.bf16 %v1654
        %v2167 = vunpack.c.l.bf16 %v1655
        %v2168 = vunpack.c.l.bf16 %v1656
        %v2169 = vunpack.c.l.bf16 %v1657
        %v2170 = vunpack.c.l.bf16 %v1658
        %v2171 = vunpack.c.l.bf16 %v1659
        %v2172 = vunpack.c.l.bf16 %v1660
        %v2173 = vunpack.c.l.bf16 %v1661
        %v2174 = vunpack.c.l.bf16 %v1662
        %v2175 = vunpack.c.l.bf16 %v1663
        %v2176 = vunpack.c.l.bf16 %v1664
        %v2177 = vunpack.c.l.bf16 %v1665
        %v2178 = vunpack.c.l.bf16 %v1666
        %v2179 = vunpack.c.l.bf16 %v1667
        %v2180 = vunpack.c.l.bf16 %v1668
        %v2181 = vunpack.c.l.bf16 %v1669
        %v2182 = vunpack.c.l.bf16 %v1670
        %v2183 = vunpack.c.l.bf16 %v1671
        %v2184 = vunpack.c.l.bf16 %v1672
        %v2185 = vunpack.c.l.bf16 %v1673
        %v2186 = vunpack.c.l.bf16 %v1674
        %v2187 = vunpack.c.l.bf16 %v1675
        %v2188 = vunpack.c.l.bf16 %v1676
        %v2189 = vunpack.c.l.bf16 %v1677
        %v2190 = vunpack.c.l.bf16 %v1678
        %v2191 = vunpack.c.l.bf16 %v1679
        %v2192 = vunpack.c.l.bf16 %v1680
        %v2193 = vunpack.c.l.bf16 %v1681
        %v2194 = vunpack.c.l.bf16 %v1682
        %v2195 = vunpack.c.l.bf16 %v1683
        %v2196 = vunpack.c.l.bf16 %v1684
        %v2197 = vunpack.c.l.bf16 %v1685
        %v2198 = vunpack.c.l.bf16 %v1686
        %v2199 = vunpack.c.l.bf16 %v1687
        %v2200 = vunpack.c.l.bf16 %v1688
        %v2201 = vunpack.c.l.bf16 %v1689
        %v2202 = vunpack.c.l.bf16 %v1690
        %v2203 = vunpack.c.l.bf16 %v1691
        %v2204 = vunpack.c.l.bf16 %v1692
        %v2205 = vunpack.c.l.bf16 %v1693
        %v2206 = vunpack.c.l.bf16 %v1694
        %v2207 = vunpack.c.l.bf16 %v1695
        %v2208 = vunpack.c.l.bf16 %v1696
        %v2209 = vunpack.c.l.bf16 %v1697
        %v2210 = vunpack.c.l.bf16 %v1698
        %v2211 = vunpack.c.l.bf16 %v1699
        %v2212 = vunpack.c.l.bf16 %v1700
        %v2213 = vunpack.c.l.bf16 %v1701
        %v2214 = vunpack.c.l.bf16 %v1702
        %v2215 = vunpack.c.l.bf16 %v1703
        %v2216 = vunpack.c.l.bf16 %v1704
        %v2217 = vunpack.c.l.bf16 %v1705
        %v2218 = vunpack.c.l.bf16 %v1706
        %v2219 = vunpack.c.l.bf16 %v1707
        %v2220 = vunpack.c.l.bf16 %v1708
        %v2221 = vunpack.c.l.bf16 %v1709
        %v2222 = vunpack.c.l.bf16 %v1710
        %v2223 = vunpack.c.l.bf16 %v1711
        %v2224 = vunpack.c.l.bf16 %v1712
        %v2225 = vunpack.c.l.bf16 %v1713
        %v2226 = vunpack.c.l.bf16 %v1714
        %v2227 = vunpack.c.l.bf16 %v1715
        %v2228 = vunpack.c.l.bf16 %v1716
        %v2229 = vunpack.c.l.bf16 %v1717
        %v2230 = vunpack.c.l.bf16 %v1718
        %v2231 = vunpack.c.l.bf16 %v1719
        %v2232 = vunpack.c.l.bf16 %v1720
        %v2233 = vunpack.c.l.bf16 %v1721
        %v2234 = vunpack.c.l.bf16 %v1722
        %v2235 = vunpack.c.l.bf16 %v1723
        %v2236 = vunpack.c.l.bf16 %v1724
        %v2237 = vunpack.c.l.bf16 %v1725
        %v2238 = vunpack.c.l.bf16 %v1726
        %v2239 = vunpack.c.l.bf16 %v1727
        %v2240 = vunpack.c.l.bf16 %v1728
        %v2241 = vunpack.c.l.bf16 %v1729
        %v2242 = vunpack.c.l.bf16 %v1730
        %v2243 = vunpack.c.l.bf16 %v1731
        %v2244 = vunpack.c.l.bf16 %v1732
        %v2245 = vunpack.c.l.bf16 %v1733
        %v2246 = vunpack.c.l.bf16 %v1734
        %v2247 = vunpack.c.l.bf16 %v1735
        %v2248 = vunpack.c.l.bf16 %v1736
        %v2249 = vunpack.c.l.bf16 %v1737
        %v2250 = vunpack.c.l.bf16 %v1738
        %v2251 = vunpack.c.l.bf16 %v1739
        %v2252 = vunpack.c.l.bf16 %v1740
        %v2253 = vunpack.c.l.bf16 %v1741
        %v2254 = vunpack.c.l.bf16 %v1742
        %v2255 = vunpack.c.l.bf16 %v1743
        %v2256 = vunpack.c.l.bf16 %v1744
        %v2257 = vunpack.c.l.bf16 %v1745
        %v2258 = vunpack.c.l.bf16 %v1746
        %v2259 = vunpack.c.l.bf16 %v1747
        %v2260 = vunpack.c.l.bf16 %v1748
        %v2261 = vunpack.c.l.bf16 %v1749
        %v2262 = vunpack.c.l.bf16 %v1750
        %v2263 = vunpack.c.l.bf16 %v1751
        %v2264 = vunpack.c.l.bf16 %v1752
        %v2265 = vunpack.c.l.bf16 %v1753
        %v2266 = vunpack.c.l.bf16 %v1754
        %v2267 = vunpack.c.l.bf16 %v1755
        %v2268 = vunpack.c.l.bf16 %v1756
        %v2269 = vunpack.c.l.bf16 %v1757
        %v2270 = vunpack.c.l.bf16 %v1758
        %v2271 = vunpack.c.l.bf16 %v1759
        %v2272 = vunpack.c.l.bf16 %v1760
        %v2273 = vunpack.c.l.bf16 %v1761
        %v2274 = vunpack.c.l.bf16 %v1762
        %v2275 = vunpack.c.l.bf16 %v1763
        %v2276 = vunpack.c.l.bf16 %v1764
        %v2277 = vunpack.c.l.bf16 %v1765
        %v2278 = vunpack.c.l.bf16 %v1766
        %v2279 = vunpack.c.l.bf16 %v1767
        %v2280 = vunpack.c.l.bf16 %v1768
        %v2281 = vunpack.c.l.bf16 %v1769
        %v2282 = vunpack.c.l.bf16 %v1770
        %v2283 = vunpack.c.l.bf16 %v1771
        %v2284 = vunpack.c.l.bf16 %v1772
        %v2285 = vunpack.c.l.bf16 %v1773
        %v2286 = vunpack.c.l.bf16 %v1774
        %v2287 = vunpack.c.l.bf16 %v1775
        %v2288 = vunpack.c.l.bf16 %v1776
        %v2289 = vunpack.c.l.bf16 %v1777
        %v2290 = vunpack.c.l.bf16 %v1778
        %v2291 = vunpack.c.l.bf16 %v1779
        %v2292 = vunpack.c.l.bf16 %v1780
        %v2293 = vunpack.c.l.bf16 %v1781
        %v2294 = vunpack.c.l.bf16 %v1782
        %v2295 = vunpack.c.l.bf16 %v1783
        %v2296 = vunpack.c.l.bf16 %v1784
        %v2297 = vunpack.c.l.bf16 %v1785
        %v2298 = vunpack.c.l.bf16 %v1786
        %v2299 = vunpack.c.l.bf16 %v1787
        %v2300 = vunpack.c.l.bf16 %v1788
        %v2301 = vunpack.c.l.bf16 %v1789
        %v2302 = vunpack.c.l.bf16 %v1790
        %v2303 = vunpack.c.l.bf16 %v1791
        %v2304 = vunpack.c.l.bf16 %v1792
        %v2305 = vunpack.c.l.bf16 %v1793
        %v2306 = vunpack.c.l.bf16 %v1794
        %v2307 = vunpack.c.l.bf16 %v1795
        %v2308 = vunpack.c.l.bf16 %v1796
        %v2309 = vunpack.c.l.bf16 %v1797
        %v2310 = vunpack.c.l.bf16 %v1798
        %v2311 = vunpack.c.l.bf16 %v1799
        %v2312 = vunpack.c.l.bf16 %v1800
        %v2313 = vunpack.c.l.bf16 %v1801
        %v2314 = vunpack.c.l.bf16 %v1802
        %v2315 = vunpack.c.l.bf16 %v1803
        %v2316 = vunpack.c.l.bf16 %v1804
        %v2317 = vunpack.c.l.bf16 %v1805
        %v2318 = vunpack.c.l.bf16 %v1806
        %v2319 = vunpack.c.l.bf16 %v1807
        %v2320 = vunpack.c.l.bf16 %v1808
        %v2321 = vunpack.c.l.bf16 %v1809
        %v2322 = vunpack.c.l.bf16 %v1810
        %v2323 = vunpack.c.l.bf16 %v1811
        %v2324 = vunpack.c.l.bf16 %v1812
        %v2325 = vunpack.c.l.bf16 %v1813
        %v2326 = vunpack.c.l.bf16 %v1814
        %v2327 = vunpack.c.l.bf16 %v1815
        %v2328 = vunpack.c.l.bf16 %v1816
        %v2329 = vunpack.c.l.bf16 %v1817
        %v2330 = vunpack.c.l.bf16 %v1818
        %v2331 = vunpack.c.l.bf16 %v1819
        %v2332 = vunpack.c.l.bf16 %v1820
        %v2333 = vunpack.c.l.bf16 %v1821
        %v2334 = vunpack.c.l.bf16 %v1822
        %v2335 = vunpack.c.l.bf16 %v1823
        %v2336 = vunpack.c.l.bf16 %v1824
        %v2337 = vunpack.c.l.bf16 %v1825
        %v2338 = vunpack.c.l.bf16 %v1826
        %v2339 = vunpack.c.l.bf16 %v1827
        %v2340 = vunpack.c.l.bf16 %v1828
        %v2341 = vunpack.c.l.bf16 %v1829
        %v2342 = vunpack.c.l.bf16 %v1830
        %v2343 = vunpack.c.l.bf16 %v1831
        %v2344 = vunpack.c.l.bf16 %v1832
        %v2345 = vunpack.c.l.bf16 %v1833
        %v2346 = vunpack.c.l.bf16 %v1834
        %v2347 = vunpack.c.l.bf16 %v1835
        %v2348 = vunpack.c.l.bf16 %v1836
        %v2349 = vunpack.c.l.bf16 %v1837
        %v2350 = vunpack.c.l.bf16 %v1838
        %v2351 = vunpack.c.l.bf16 %v1839
        %v2352 = vunpack.c.l.bf16 %v1840
        %v2353 = vunpack.c.l.bf16 %v1841
        %v2354 = vunpack.c.l.bf16 %v1842
        %v2355 = vunpack.c.l.bf16 %v1843
        %v2356 = vunpack.c.l.bf16 %v1844
        %v2357 = vunpack.c.l.bf16 %v1845
        %v2358 = vunpack.c.l.bf16 %v1846
        %v2359 = vunpack.c.l.bf16 %v1847
        %v2360 = vunpack.c.l.bf16 %v1848
        %v2361 = vunpack.c.l.bf16 %v1849
        %v2362 = vunpack.c.l.bf16 %v1850
        %v2363 = vunpack.c.l.bf16 %v1851
        %v2364 = vunpack.c.l.bf16 %v1852
        %v2365 = vunpack.c.l.bf16 %v1853
        %v2366 = vunpack.c.l.bf16 %v1854
        %v2367 = vunpack.c.l.bf16 %v1855
        %v2368 = vunpack.c.l.bf16 %v1856
        %v2369 = vunpack.c.l.bf16 %v1857
        %v2370 = vunpack.c.l.bf16 %v1858
        %v2371 = vunpack.c.l.bf16 %v1859
        %v2372 = vunpack.c.l.bf16 %v1860
        %v2373 = vunpack.c.l.bf16 %v1861
        %v2374 = vunpack.c.l.bf16 %v1862
        %v2375 = vunpack.c.l.bf16 %v1863
        %v2376 = vunpack.c.l.bf16 %v1864
        %v2377 = vunpack.c.l.bf16 %v1865
        %v2378 = vunpack.c.l.bf16 %v1866
        %v2379 = vunpack.c.l.bf16 %v1867
        %v2380 = vunpack.c.l.bf16 %v1868
        %v2381 = vunpack.c.l.bf16 %v1869
        %v2382 = vunpack.c.l.bf16 %v1870
        %v2383 = vunpack.c.l.bf16 %v1871
        %v2384 = vunpack.c.l.bf16 %v1872
        %v2385 = vunpack.c.l.bf16 %v1873
        %v2386 = vunpack.c.l.bf16 %v1874
        %v2387 = vunpack.c.l.bf16 %v1875
        %v2388 = vunpack.c.l.bf16 %v1876
        %v2389 = vunpack.c.l.bf16 %v1877
        %v2390 = vunpack.c.l.bf16 %v1878
        %v2391 = vunpack.c.l.bf16 %v1879
        %v2392 = vunpack.c.l.bf16 %v1880
        %v2393 = vunpack.c.l.bf16 %v1881
        %v2394 = vunpack.c.l.bf16 %v1882
        %v2395 = vunpack.c.l.bf16 %v1883
        %v2396 = vunpack.c.l.bf16 %v1884
        %v2397 = vunpack.c.l.bf16 %v1885
        %v2398 = vunpack.c.l.bf16 %v1886
        %v2399 = vunpack.c.l.bf16 %v1887
        %v2400 = vunpack.c.l.bf16 %v1888
        %v2401 = vunpack.c.l.bf16 %v1889
        %v2402 = vunpack.c.l.bf16 %v1890
        %v2403 = vunpack.c.l.bf16 %v1891
        %v2404 = vunpack.c.l.bf16 %v1892
        %v2405 = vunpack.c.l.bf16 %v1893
        %v2406 = vunpack.c.l.bf16 %v1894
        %v2407 = vunpack.c.l.bf16 %v1895
        %v2408 = vunpack.c.l.bf16 %v1896
        %v2409 = vunpack.c.l.bf16 %v1897
        %v2410 = vunpack.c.l.bf16 %v1898
        %v2411 = vunpack.c.l.bf16 %v1899
        %v2412 = vunpack.c.l.bf16 %v1900
        %v2413 = vunpack.c.l.bf16 %v1901
        %v2414 = vunpack.c.l.bf16 %v1902
        %v2415 = vunpack.c.l.bf16 %v1903
        %v2416 = vunpack.c.l.bf16 %v1904
        %v2417 = vunpack.c.l.bf16 %v1905
        %v2418 = vunpack.c.l.bf16 %v1906
        %v2419 = vunpack.c.l.bf16 %v1907
        %v2420 = vunpack.c.l.bf16 %v1908
        %v2421 = vunpack.c.l.bf16 %v1909
        %v2422 = vunpack.c.l.bf16 %v1910
        %v2423 = vunpack.c.l.bf16 %v1911
        %v2424 = vunpack.c.l.bf16 %v1912
        %v2425 = vunpack.c.l.bf16 %v1913
        %v2426 = vunpack.c.l.bf16 %v1914
        %v2427 = vunpack.c.l.bf16 %v1915
        %v2428 = vunpack.c.l.bf16 %v1916
        %v2429 = vunpack.c.l.bf16 %v1917
        %v2430 = vunpack.c.l.bf16 %v1918
        %v2431 = vunpack.c.l.bf16 %v1919
        %v2432 = vunpack.c.l.bf16 %v1920
        %v2433 = vunpack.c.l.bf16 %v1921
        %v2434 = vunpack.c.l.bf16 %v1922
        %v2435 = vunpack.c.l.bf16 %v1923
        %v2436 = vunpack.c.l.bf16 %v1924
        %v2437 = vunpack.c.l.bf16 %v1925
        %v2438 = vunpack.c.l.bf16 %v1926
        %v2439 = vunpack.c.l.bf16 %v1927
        %v2440 = vunpack.c.l.bf16 %v1928
        %v2441 = vunpack.c.l.bf16 %v1929
        %v2442 = vunpack.c.l.bf16 %v1930
        %v2443 = vunpack.c.l.bf16 %v1931
        %v2444 = vunpack.c.l.bf16 %v1932
        %v2445 = vunpack.c.l.bf16 %v1933
        %v2446 = vunpack.c.l.bf16 %v1934
        %v2447 = vunpack.c.l.bf16 %v1935
        %v2448 = vunpack.c.l.bf16 %v1936
        %v2449 = vunpack.c.l.bf16 %v1937
        %v2450 = vunpack.c.l.bf16 %v1938
        %v2451 = vunpack.c.l.bf16 %v1939
        %v2452 = vunpack.c.l.bf16 %v1940
        %v2453 = vunpack.c.l.bf16 %v1941
        %v2454 = vunpack.c.l.bf16 %v1942
        %v2455 = vunpack.c.l.bf16 %v1943
        %v2456 = vunpack.c.l.bf16 %v1944
        %v2457 = vunpack.c.l.bf16 %v1945
        %v2458 = vunpack.c.l.bf16 %v1946
        %v2459 = vunpack.c.l.bf16 %v1947
        %v2460 = vunpack.c.l.bf16 %v1948
        %v2461 = vunpack.c.l.bf16 %v1949
        %v2462 = vunpack.c.l.bf16 %v1950
        %v2463 = vunpack.c.l.bf16 %v1951
        %v2464 = vunpack.c.l.bf16 %v1952
        %v2465 = vunpack.c.l.bf16 %v1953
        %v2466 = vunpack.c.l.bf16 %v1954
        %v2467 = vunpack.c.l.bf16 %v1955
        %v2468 = vunpack.c.l.bf16 %v1956
        %v2469 = vunpack.c.l.bf16 %v1957
        %v2470 = vunpack.c.l.bf16 %v1958
        %v2471 = vunpack.c.l.bf16 %v1959
        %v2472 = vunpack.c.l.bf16 %v1960
        %v2473 = vunpack.c.l.bf16 %v1961
        %v2474 = vunpack.c.l.bf16 %v1962
        %v2475 = vunpack.c.l.bf16 %v1963
        %v2476 = vunpack.c.l.bf16 %v1964
        %v2477 = vunpack.c.l.bf16 %v1965
        %v2478 = vunpack.c.l.bf16 %v1966
        %v2479 = vunpack.c.l.bf16 %v1967
        %v2480 = vunpack.c.l.bf16 %v1968
        %v2481 = vunpack.c.l.bf16 %v1969
        %v2482 = vunpack.c.l.bf16 %v1970
        %v2483 = vunpack.c.l.bf16 %v1971
        %v2484 = vunpack.c.l.bf16 %v1972
        %v2485 = vunpack.c.l.bf16 %v1973
        %v2486 = vunpack.c.l.bf16 %v1974
        %v2487 = vunpack.c.l.bf16 %v1975
        %v2488 = vunpack.c.l.bf16 %v1976
        %v2489 = vunpack.c.l.bf16 %v1977
        %v2490 = vunpack.c.l.bf16 %v1978
        %v2491 = vunpack.c.l.bf16 %v1979
        %v2492 = vunpack.c.l.bf16 %v1980
        %v2493 = vunpack.c.l.bf16 %v1981
        %v2494 = vunpack.c.l.bf16 %v1982
        %v2495 = vunpack.c.l.bf16 %v1983
        %v2496 = vunpack.c.l.bf16 %v1984
        %v2497 = vunpack.c.l.bf16 %v1985
        %v2498 = vunpack.c.l.bf16 %v1986
        %v2499 = vunpack.c.l.bf16 %v1987
        %v2500 = vunpack.c.l.bf16 %v1988
        %v2501 = vunpack.c.l.bf16 %v1989
        %v2502 = vunpack.c.l.bf16 %v1990
        %v2503 = vunpack.c.l.bf16 %v1991
        %v2504 = vunpack.c.l.bf16 %v1992
        %v2505 = vunpack.c.l.bf16 %v1993
        %v2506 = vunpack.c.l.bf16 %v1994
        %v2507 = vunpack.c.l.bf16 %v1995
        %v2508 = vunpack.c.l.bf16 %v1996
        %v2509 = vunpack.c.l.bf16 %v1997
        %v2510 = vunpack.c.l.bf16 %v1998
        %v2511 = vunpack.c.l.bf16 %v1999
        %v2512 = vunpack.c.l.bf16 %v2000
        %v2513 = vunpack.c.l.bf16 %v2001
        %v2514 = vunpack.c.l.bf16 %v2002
        %v2515 = vunpack.c.l.bf16 %v2003
        %v2516 = vunpack.c.l.bf16 %v2004
        %v2517 = vunpack.c.l.bf16 %v2005
        %v2518 = vunpack.c.l.bf16 %v2006
        %v2519 = vunpack.c.l.bf16 %v2007
        %v2520 = vunpack.c.l.bf16 %v2008
        %v2521 = vunpack.c.l.bf16 %v2009
        %v2522 = vunpack.c.l.bf16 %v2010
        %v2523 = vunpack.c.l.bf16 %v2011
        %v2524 = vunpack.c.l.bf16 %v2012
        %v2525 = vunpack.c.l.bf16 %v2013
        %v2526 = vunpack.c.l.bf16 %v2014
        %v2527 = vunpack.c.l.bf16 %v2015
        %v2528 = vunpack.c.l.bf16 %v2016
        %v2529 = vunpack.c.l.bf16 %v2017
        %v2530 = vunpack.c.l.bf16 %v2018
        %v2531 = vunpack.c.l.bf16 %v2019
        %v2532 = vunpack.c.l.bf16 %v2020
        %v2533 = vunpack.c.l.bf16 %v2021
        %v2534 = vunpack.c.l.bf16 %v2022
        %v2535 = vunpack.c.l.bf16 %v2023
        %v2536 = vunpack.c.l.bf16 %v2024
        %v2537 = vunpack.c.l.bf16 %v2025
        %v2538 = vunpack.c.l.bf16 %v2026
        %v2539 = vunpack.c.l.bf16 %v2027
        %v2540 = vunpack.c.l.bf16 %v2028
        %v2541 = vunpack.c.l.bf16 %v2029
        %v2542 = vunpack.c.l.bf16 %v2030
        %v2543 = vunpack.c.l.bf16 %v2031
        %v2544 = vunpack.c.l.bf16 %v2032
        %v2545 = vunpack.c.l.bf16 %v2033
        %v2546 = vunpack.c.l.bf16 %v2034
        %v2547 = vunpack.c.l.bf16 %v2035
        %v2548 = vunpack.c.l.bf16 %v2036
        %v2549 = vunpack.c.l.bf16 %v2037
        %v2550 = vunpack.c.l.bf16 %v2038
        %v2551 = vunpack.c.l.bf16 %v2039
        %v2552 = vunpack.c.l.bf16 %v2040
        %v2553 = vunpack.c.l.bf16 %v2041
        %v2554 = vunpack.c.l.bf16 %v2042
        %v2555 = vunpack.c.l.bf16 %v2043
        %v2556 = vunpack.c.l.bf16 %v2044
        %v2557 = vunpack.c.l.bf16 %v2045
        %v2558 = vunpack.c.l.bf16 %v2046
        %v2559 = vunpack.c.l.bf16 %v2047
        %v2560 = vunpack.c.l.bf16 %v2048
        %v2561 = vunpack.c.l.bf16 %v2049
        %v2562 = vunpack.c.l.bf16 %v2050
        %v2563 = vunpack.c.l.bf16 %v2051
        %v2564 = vunpack.c.l.bf16 %v2052
        %v2565 = vunpack.c.l.bf16 %v2053
        %v2566 = vunpack.c.l.bf16 %v2054
        %v2567 = vunpack.c.l.bf16 %v2055
        %v2568 = vunpack.c.l.bf16 %v2056
        %v2569 = vunpack.c.l.bf16 %v2057
        %v2570 = vunpack.c.l.bf16 %v2058
        %v2571 = vunpack.c.l.bf16 %v2059
        %v2572 = vunpack.c.l.bf16 %v2060
        %v2573 = vunpack.c.l.bf16 %v2061
        %v2574 = vunpack.c.l.bf16 %v2062
        %v2575 = vunpack.c.l.bf16 %v2063
        %v2576 = vunpack.c.l.bf16 %v2064
        %v2577 = vunpack.c.l.bf16 %v2065
        %v2578 = vunpack.c.l.bf16 %v2066
        %v2579 = vunpack.c.l.bf16 %v2067
        %v2580 = vunpack.c.l.bf16 %v2068
        %v2581 = vunpack.c.l.bf16 %v2069
        %v2582 = vunpack.c.l.bf16 %v2070
        %v2583 = vunpack.c.l.bf16 %v2071
        %v2584 = vunpack.c.l.bf16 %v2072
        %v2585 = vunpack.c.l.bf16 %v2073
        %v2586 = vunpack.c.l.bf16 %v2074
        %v2587 = vunpack.c.l.bf16 %v2075
        %v2588 = vunpack.c.l.bf16 %v2076
        %v2589 = vunpack.c.l.bf16 %v2077
        %v2590 = vunpack.c.l.bf16 %v2078
        %v2591 = vunpack.c.l.bf16 %v2079
        %v2592 = vunpack.c.l.bf16 %v2080
        %v2593 = vunpack.c.l.bf16 %v2081
        %v2594 = vunpack.c.l.bf16 %v2082
        %v2595 = vunpack.c.l.bf16 %v2083
        %v2596 = vunpack.c.l.bf16 %v2084
        %v2597 = vunpack.c.l.bf16 %v2085
        %v2598 = vunpack.c.l.bf16 %v2086
        %v2599 = vunpack.c.l.bf16 %v2087
        %v2600 = vunpack.c.l.bf16 %v2088
        %v2601 = vunpack.c.l.bf16 %v2089
        %v2602 = vunpack.c.l.bf16 %v2090
        %v2603 = vunpack.c.l.bf16 %v2091
        %v2604 = vunpack.c.l.bf16 %v2092
        %v2605 = vunpack.c.l.bf16 %v2093
        %v2606 = vunpack.c.l.bf16 %v2094
        %v2607 = vunpack.c.l.bf16 %v2095
        %v2608 = vunpack.c.l.bf16 %v2096
        %v2609 = vunpack.c.l.bf16 %v2097
        %v2610 = vunpack.c.l.bf16 %v2098
        %v2611 = vunpack.c.l.bf16 %v2099
        %v2612 = vunpack.c.l.bf16 %v2100
        %v2613 = vunpack.c.l.bf16 %v2101
        %v2614 = vunpack.c.l.bf16 %v2102
        %v2615 = vunpack.c.l.bf16 %v2103
        %v2616 = vunpack.c.l.bf16 %v2104
        %v2617 = vunpack.c.l.bf16 %v2105
        %v2620 = vrot.slane %v1590, 1
        %v2621 = vrot.slane %v1591, 1
        %2624 = vmatprep.subr.mxu0 0.0
        %2625 = vmatpush1.msra.mxu0 %v2153
        %2626 = vmatprep.subr.mxu0 0.0
        %2627 = vmatpush1.msra.mxu0 %v2152
        %2628 = vmatprep.subr.mxu0 0.0
        %2629 = vmatpush1.msra.mxu0 %v2151
        %2630 = vmatprep.subr.mxu0 0.0
        %2631 = vmatpush1.msra.mxu0 %v2150
        %2632 = vmatprep.subr.mxu0 0.0
        %2633 = vmatpush1.msra.mxu0 %v2149
        %2634 = vmatprep.subr.mxu0 0.0
        %2635 = vmatpush1.msra.mxu0 %v2148
        %2636 = vmatprep.subr.mxu0 0.0
        %2637 = vmatpush1.msra.mxu0 %v2147
        %2638 = vmatprep.subr.mxu0 0.0
        %2639 = vmatpush1.msra.mxu0 %v2146
        %2640 = vmatprep.subr.mxu0 0.0
        %2641 = vmatpush1.msra.mxu0 %v2145
        %2642 = vmatprep.subr.mxu0 0.0
        %2643 = vmatpush1.msra.mxu0 %v2144
        %2644 = vmatprep.subr.mxu0 0.0
        %2645 = vmatpush1.msra.mxu0 %v2143
        %2646 = vmatprep.subr.mxu0 0.0
        %2647 = vmatpush1.msra.mxu0 %v2142
        %2648 = vmatprep.subr.mxu0 0.0
        %2649 = vmatpush1.msra.mxu0 %v2141
        %2650 = vmatprep.subr.mxu0 0.0
        %2651 = vmatpush1.msra.mxu0 %v2140
        %2652 = vmatprep.subr.mxu0 0.0
        %2653 = vmatpush1.msra.mxu0 %v2139
        %2654 = vmatprep.subr.mxu0 0.0
        %2655 = vmatpush1.msra.mxu0 %v2138
        %2656 = vmatprep.subr.mxu0 0.0
        %2657 = vmatpush2.msra.mxu0 %v2169
        %2658 = vmatprep.subr.mxu0 0.0
        %2659 = vmatpush2.msra.mxu0 %v2168
        %2660 = vmatprep.subr.mxu0 0.0
        %2661 = vmatpush2.msra.mxu0 %v2167
        %2662 = vmatprep.subr.mxu0 0.0
        %2663 = vmatpush2.msra.mxu0 %v2166
        %2664 = vmatprep.subr.mxu0 0.0
        %2665 = vmatpush2.msra.mxu0 %v2165
        %2666 = vmatprep.subr.mxu0 0.0
        %2667 = vmatpush2.msra.mxu0 %v2164
        %2668 = vmatprep.subr.mxu0 0.0
        %2669 = vmatpush2.msra.mxu0 %v2163
        %2670 = vmatprep.subr.mxu0 0.0
        %2671 = vmatpush2.msra.mxu0 %v2162
        %2672 = vmatprep.subr.mxu0 0.0
        %2673 = vmatpush2.msra.mxu0 %v2161
        %2674 = vmatprep.subr.mxu0 0.0
        %2675 = vmatpush2.msra.mxu0 %v2160
        %2676 = vmatprep.subr.mxu0 0.0
        %2677 = vmatpush2.msra.mxu0 %v2159
        %2678 = vmatprep.subr.mxu0 0.0
        %2679 = vmatpush2.msra.mxu0 %v2158
        %2680 = vmatprep.subr.mxu0 0.0
        %2681 = vmatpush2.msra.mxu0 %v2157
        %2682 = vmatprep.subr.mxu0 0.0
        %2683 = vmatpush2.msra.mxu0 %v2156
        %2684 = vmatprep.subr.mxu0 0.0
        %2685 = vmatpush2.msra.mxu0 %v2155
        %2686 = vmatprep.subr.mxu0 0.0
        %2687 = vmatpush2.msra.mxu0 %v2154
        %2688 = vmatprep.mubr.f32.mxu0 %v2621
        %2689 = vmatmul.mubr.f32.gmra.mxu0 %v2620
        %v2690 = vpop.f32.mrf.mxu0
        %v2691 = vadd.f32 0.0, %v2690
        %v2692 = vpop.f32.mrf.mxu0
        %2693 = vdwg.mxu0
        %2694 = vmatprep.subr.mxu0 0.0
        %2695 = vmatpush1.msra.mxu0 %v2121
        %2696 = vmatprep.subr.mxu0 0.0
        %2697 = vmatpush1.msra.mxu0 %v2120
        %2698 = vmatprep.subr.mxu0 0.0
        %2699 = vmatpush1.msra.mxu0 %v2119
        %2700 = vmatprep.subr.mxu0 0.0
        %2701 = vmatpush1.msra.mxu0 %v2118
        %2702 = vmatprep.subr.mxu0 0.0
        %2703 = vmatpush1.msra.mxu0 %v2117
        %2704 = vmatprep.subr.mxu0 0.0
        %2705 = vmatpush1.msra.mxu0 %v2116
        %2706 = vmatprep.subr.mxu0 0.0
        %2707 = vmatpush1.msra.mxu0 %v2115
        %2708 = vmatprep.subr.mxu0 0.0
        %2709 = vmatpush1.msra.mxu0 %v2114
        %2710 = vmatprep.subr.mxu0 0.0
        %2711 = vmatpush1.msra.mxu0 %v2113
        %2712 = vmatprep.subr.mxu0 0.0
        %2713 = vmatpush1.msra.mxu0 %v2112
        %2714 = vmatprep.subr.mxu0 0.0
        %2715 = vmatpush1.msra.mxu0 %v2111
        %2716 = vmatprep.subr.mxu0 0.0
        %2717 = vmatpush1.msra.mxu0 %v2110
        %2718 = vmatprep.subr.mxu0 0.0
        %2719 = vmatpush1.msra.mxu0 %v2109
        %2720 = vmatprep.subr.mxu0 0.0
        %2721 = vmatpush1.msra.mxu0 %v2108
        %2722 = vmatprep.subr.mxu0 0.0
        %2723 = vmatpush1.msra.mxu0 %v2107
        %2724 = vmatprep.subr.mxu0 0.0
        %2725 = vmatpush1.msra.mxu0 %v2106
        %2726 = vmatprep.subr.mxu0 0.0
        %2727 = vmatpush2.msra.mxu0 %v2137
        %2728 = vmatprep.subr.mxu0 0.0
        %2729 = vmatpush2.msra.mxu0 %v2136
        %2730 = vmatprep.subr.mxu0 0.0
        %2731 = vmatpush2.msra.mxu0 %v2135
        %2732 = vmatprep.subr.mxu0 0.0
        %2733 = vmatpush2.msra.mxu0 %v2134
        %2734 = vmatprep.subr.mxu0 0.0
        %2735 = vmatpush2.msra.mxu0 %v2133
        %2736 = vmatprep.subr.mxu0 0.0
        %2737 = vmatpush2.msra.mxu0 %v2132
        %2738 = vmatprep.subr.mxu0 0.0
        %2739 = vmatpush2.msra.mxu0 %v2131
        %2740 = vmatprep.subr.mxu0 0.0
        %2741 = vmatpush2.msra.mxu0 %v2130
        %2742 = vmatprep.subr.mxu0 0.0
        %2743 = vmatpush2.msra.mxu0 %v2129
        %2744 = vmatprep.subr.mxu0 0.0
        %2745 = vmatpush2.msra.mxu0 %v2128
        %2746 = vmatprep.subr.mxu0 0.0
        %2747 = vmatpush2.msra.mxu0 %v2127
        %2748 = vmatprep.subr.mxu0 0.0
        %2749 = vmatpush2.msra.mxu0 %v2126
        %2750 = vmatprep.subr.mxu0 0.0
        %2751 = vmatpush2.msra.mxu0 %v2125
        %2752 = vmatprep.subr.mxu0 0.0
        %2753 = vmatpush2.msra.mxu0 %v2124
        %2754 = vmatprep.subr.mxu0 0.0
        %2755 = vmatpush2.msra.mxu0 %v2123
        %2756 = vmatprep.subr.mxu0 0.0
        %2757 = vmatpush2.msra.mxu0 %v2122
        %2758 = vmatprep.mubr.f32.mxu0 %v1591
        %2759 = vmatmul.mubr.f32.gmra.mxu0 %v1590
        %v2760 = vpop.f32.mrf.mxu0
        %v2761 = vadd.f32 %v2691, %v2760
        %v2762 = vpop.f32.mrf.mxu0
        %2763 = vdwg.mxu0
        %v2764 = vrot.slane %v1590, 2
        %v2765 = vrot.slane %v1591, 2
        %2768 = vmatprep.subr.mxu0 0.0
        %2769 = vmatpush1.msra.mxu0 %v2185
        %2770 = vmatprep.subr.mxu0 0.0
        %2771 = vmatpush1.msra.mxu0 %v2184
        %2772 = vmatprep.subr.mxu0 0.0
        %2773 = vmatpush1.msra.mxu0 %v2183
        %2774 = vmatprep.subr.mxu0 0.0
        %2775 = vmatpush1.msra.mxu0 %v2182
        %2776 = vmatprep.subr.mxu0 0.0
        %2777 = vmatpush1.msra.mxu0 %v2181
        %2778 = vmatprep.subr.mxu0 0.0
        %2779 = vmatpush1.msra.mxu0 %v2180
        %2780 = vmatprep.subr.mxu0 0.0
        %2781 = vmatpush1.msra.mxu0 %v2179
        %2782 = vmatprep.subr.mxu0 0.0
        %2783 = vmatpush1.msra.mxu0 %v2178
        %2784 = vmatprep.subr.mxu0 0.0
        %2785 = vmatpush1.msra.mxu0 %v2177
        %2786 = vmatprep.subr.mxu0 0.0
        %2787 = vmatpush1.msra.mxu0 %v2176
        %2788 = vmatprep.subr.mxu0 0.0
        %2789 = vmatpush1.msra.mxu0 %v2175
        %2790 = vmatprep.subr.mxu0 0.0
        %2791 = vmatpush1.msra.mxu0 %v2174
        %2792 = vmatprep.subr.mxu0 0.0
        %2793 = vmatpush1.msra.mxu0 %v2173
        %2794 = vmatprep.subr.mxu0 0.0
        %2795 = vmatpush1.msra.mxu0 %v2172
        %2796 = vmatprep.subr.mxu0 0.0
        %2797 = vmatpush1.msra.mxu0 %v2171
        %2798 = vmatprep.subr.mxu0 0.0
        %2799 = vmatpush1.msra.mxu0 %v2170
        %2800 = vmatprep.subr.mxu0 0.0
        %2801 = vmatpush2.msra.mxu0 %v2201
        %2802 = vmatprep.subr.mxu0 0.0
        %2803 = vmatpush2.msra.mxu0 %v2200
        %2804 = vmatprep.subr.mxu0 0.0
        %2805 = vmatpush2.msra.mxu0 %v2199
        %2806 = vmatprep.subr.mxu0 0.0
        %2807 = vmatpush2.msra.mxu0 %v2198
        %2808 = vmatprep.subr.mxu0 0.0
        %2809 = vmatpush2.msra.mxu0 %v2197
        %2810 = vmatprep.subr.mxu0 0.0
        %2811 = vmatpush2.msra.mxu0 %v2196
        %2812 = vmatprep.subr.mxu0 0.0
        %2813 = vmatpush2.msra.mxu0 %v2195
        %2814 = vmatprep.subr.mxu0 0.0
        %2815 = vmatpush2.msra.mxu0 %v2194
        %2816 = vmatprep.subr.mxu0 0.0
        %2817 = vmatpush2.msra.mxu0 %v2193
        %2818 = vmatprep.subr.mxu0 0.0
        %2819 = vmatpush2.msra.mxu0 %v2192
        %2820 = vmatprep.subr.mxu0 0.0
        %2821 = vmatpush2.msra.mxu0 %v2191
        %2822 = vmatprep.subr.mxu0 0.0
        %2823 = vmatpush2.msra.mxu0 %v2190
        %2824 = vmatprep.subr.mxu0 0.0
        %2825 = vmatpush2.msra.mxu0 %v2189
        %2826 = vmatprep.subr.mxu0 0.0
        %2827 = vmatpush2.msra.mxu0 %v2188
        %2828 = vmatprep.subr.mxu0 0.0
        %2829 = vmatpush2.msra.mxu0 %v2187
        %2830 = vmatprep.subr.mxu0 0.0
        %2831 = vmatpush2.msra.mxu0 %v2186
        %2832 = vmatprep.mubr.f32.mxu0 %v2765
        %2833 = vmatmul.mubr.f32.gmra.mxu0 %v2764
        %v2834 = vpop.f32.mrf.mxu0
        %v2835 = vadd.f32 0.0, %v2834
        %v2836 = vpop.f32.mrf.mxu0
        %2837 = vdwg.mxu0
        %v2838 = vadd.f32 %v2761, %v2835
        %v2839 = vrot.slane %v1590, 3
        %v2840 = vrot.slane %v1591, 3
        %2843 = vmatprep.subr.mxu0 0.0
        %2844 = vmatpush1.msra.mxu0 %v2217
        %2845 = vmatprep.subr.mxu0 0.0
        %2846 = vmatpush1.msra.mxu0 %v2216
        %2847 = vmatprep.subr.mxu0 0.0
        %2848 = vmatpush1.msra.mxu0 %v2215
        %2849 = vmatprep.subr.mxu0 0.0
        %2850 = vmatpush1.msra.mxu0 %v2214
        %2851 = vmatprep.subr.mxu0 0.0
        %2852 = vmatpush1.msra.mxu0 %v2213
        %2853 = vmatprep.subr.mxu0 0.0
        %2854 = vmatpush1.msra.mxu0 %v2212
        %2855 = vmatprep.subr.mxu0 0.0
        %2856 = vmatpush1.msra.mxu0 %v2211
        %2857 = vmatprep.subr.mxu0 0.0
        %2858 = vmatpush1.msra.mxu0 %v2210
        %2859 = vmatprep.subr.mxu0 0.0
        %2860 = vmatpush1.msra.mxu0 %v2209
        %2861 = vmatprep.subr.mxu0 0.0
        %2862 = vmatpush1.msra.mxu0 %v2208
        %2863 = vmatprep.subr.mxu0 0.0
        %2864 = vmatpush1.msra.mxu0 %v2207
        %2865 = vmatprep.subr.mxu0 0.0
        %2866 = vmatpush1.msra.mxu0 %v2206
        %2867 = vmatprep.subr.mxu0 0.0
        %2868 = vmatpush1.msra.mxu0 %v2205
        %2869 = vmatprep.subr.mxu0 0.0
        %2870 = vmatpush1.msra.mxu0 %v2204
        %2871 = vmatprep.subr.mxu0 0.0
        %2872 = vmatpush1.msra.mxu0 %v2203
        %2873 = vmatprep.subr.mxu0 0.0
        %2874 = vmatpush1.msra.mxu0 %v2202
        %2875 = vmatprep.subr.mxu0 0.0
        %2876 = vmatpush2.msra.mxu0 %v2233
        %2877 = vmatprep.subr.mxu0 0.0
        %2878 = vmatpush2.msra.mxu0 %v2232
        %2879 = vmatprep.subr.mxu0 0.0
        %2880 = vmatpush2.msra.mxu0 %v2231
        %2881 = vmatprep.subr.mxu0 0.0
        %2882 = vmatpush2.msra.mxu0 %v2230
        %2883 = vmatprep.subr.mxu0 0.0
        %2884 = vmatpush2.msra.mxu0 %v2229
        %2885 = vmatprep.subr.mxu0 0.0
        %2886 = vmatpush2.msra.mxu0 %v2228
        %2887 = vmatprep.subr.mxu0 0.0
        %2888 = vmatpush2.msra.mxu0 %v2227
        %2889 = vmatprep.subr.mxu0 0.0
        %2890 = vmatpush2.msra.mxu0 %v2226
        %2891 = vmatprep.subr.mxu0 0.0
        %2892 = vmatpush2.msra.mxu0 %v2225
        %2893 = vmatprep.subr.mxu0 0.0
        %2894 = vmatpush2.msra.mxu0 %v2224
        %2895 = vmatprep.subr.mxu0 0.0
        %2896 = vmatpush2.msra.mxu0 %v2223
        %2897 = vmatprep.subr.mxu0 0.0
        %2898 = vmatpush2.msra.mxu0 %v2222
        %2899 = vmatprep.subr.mxu0 0.0
        %2900 = vmatpush2.msra.mxu0 %v2221
        %2901 = vmatprep.subr.mxu0 0.0
        %2902 = vmatpush2.msra.mxu0 %v2220
        %2903 = vmatprep.subr.mxu0 0.0
        %2904 = vmatpush2.msra.mxu0 %v2219
        %2905 = vmatprep.subr.mxu0 0.0
        %2906 = vmatpush2.msra.mxu0 %v2218
        %2907 = vmatprep.mubr.f32.mxu0 %v2840
        %2908 = vmatmul.mubr.f32.gmra.mxu0 %v2839
        %v2909 = vpop.f32.mrf.mxu0
        %v2910 = vadd.f32 0.0, %v2909
        %v2911 = vpop.f32.mrf.mxu0
        %2912 = vdwg.mxu0
        %v2913 = vadd.f32 %v2838, %v2910
        %v2914 = vrot.slane %v1590, 4
        %v2915 = vrot.slane %v1591, 4
        %2918 = vmatprep.subr.mxu0 0.0
        %2919 = vmatpush1.msra.mxu0 %v2249
        %2920 = vmatprep.subr.mxu0 0.0
        %2921 = vmatpush1.msra.mxu0 %v2248
        %2922 = vmatprep.subr.mxu0 0.0
        %2923 = vmatpush1.msra.mxu0 %v2247
        %2924 = vmatprep.subr.mxu0 0.0
        %2925 = vmatpush1.msra.mxu0 %v2246
        %2926 = vmatprep.subr.mxu0 0.0
        %2927 = vmatpush1.msra.mxu0 %v2245
        %2928 = vmatprep.subr.mxu0 0.0
        %2929 = vmatpush1.msra.mxu0 %v2244
        %2930 = vmatprep.subr.mxu0 0.0
        %2931 = vmatpush1.msra.mxu0 %v2243
        %2932 = vmatprep.subr.mxu0 0.0
        %2933 = vmatpush1.msra.mxu0 %v2242
        %2934 = vmatprep.subr.mxu0 0.0
        %2935 = vmatpush1.msra.mxu0 %v2241
        %2936 = vmatprep.subr.mxu0 0.0
        %2937 = vmatpush1.msra.mxu0 %v2240
        %2938 = vmatprep.subr.mxu0 0.0
        %2939 = vmatpush1.msra.mxu0 %v2239
        %2940 = vmatprep.subr.mxu0 0.0
        %2941 = vmatpush1.msra.mxu0 %v2238
        %2942 = vmatprep.subr.mxu0 0.0
        %2943 = vmatpush1.msra.mxu0 %v2237
        %2944 = vmatprep.subr.mxu0 0.0
        %2945 = vmatpush1.msra.mxu0 %v2236
        %2946 = vmatprep.subr.mxu0 0.0
        %2947 = vmatpush1.msra.mxu0 %v2235
        %2948 = vmatprep.subr.mxu0 0.0
        %2949 = vmatpush1.msra.mxu0 %v2234
        %2950 = vmatprep.subr.mxu0 0.0
        %2951 = vmatpush2.msra.mxu0 %v2265
        %2952 = vmatprep.subr.mxu0 0.0
        %2953 = vmatpush2.msra.mxu0 %v2264
        %2954 = vmatprep.subr.mxu0 0.0
        %2955 = vmatpush2.msra.mxu0 %v2263
        %2956 = vmatprep.subr.mxu0 0.0
        %2957 = vmatpush2.msra.mxu0 %v2262
        %2958 = vmatprep.subr.mxu0 0.0
        %2959 = vmatpush2.msra.mxu0 %v2261
        %2960 = vmatprep.subr.mxu0 0.0
        %2961 = vmatpush2.msra.mxu0 %v2260
        %2962 = vmatprep.subr.mxu0 0.0
        %2963 = vmatpush2.msra.mxu0 %v2259
        %2964 = vmatprep.subr.mxu0 0.0
        %2965 = vmatpush2.msra.mxu0 %v2258
        %2966 = vmatprep.subr.mxu0 0.0
        %2967 = vmatpush2.msra.mxu0 %v2257
        %2968 = vmatprep.subr.mxu0 0.0
        %2969 = vmatpush2.msra.mxu0 %v2256
        %2970 = vmatprep.subr.mxu0 0.0
        %2971 = vmatpush2.msra.mxu0 %v2255
        %2972 = vmatprep.subr.mxu0 0.0
        %2973 = vmatpush2.msra.mxu0 %v2254
        %2974 = vmatprep.subr.mxu0 0.0
        %2975 = vmatpush2.msra.mxu0 %v2253
        %2976 = vmatprep.subr.mxu0 0.0
        %2977 = vmatpush2.msra.mxu0 %v2252
        %2978 = vmatprep.subr.mxu0 0.0
        %2979 = vmatpush2.msra.mxu0 %v2251
        %2980 = vmatprep.subr.mxu0 0.0
        %2981 = vmatpush2.msra.mxu0 %v2250
        %2982 = vmatprep.mubr.f32.mxu0 %v2915
        %2983 = vmatmul.mubr.f32.gmra.mxu0 %v2914
        %v2984 = vpop.f32.mrf.mxu0
        %v2985 = vadd.f32 0.0, %v2984
        %v2986 = vpop.f32.mrf.mxu0
        %2987 = vdwg.mxu0
        %v2988 = vadd.f32 %v2913, %v2985
        %v2989 = vrot.slane %v1590, 5
        %v2990 = vrot.slane %v1591, 5
        %2993 = vmatprep.subr.mxu0 0.0
        %2994 = vmatpush1.msra.mxu0 %v2281
        %2995 = vmatprep.subr.mxu0 0.0
        %2996 = vmatpush1.msra.mxu0 %v2280
        %2997 = vmatprep.subr.mxu0 0.0
        %2998 = vmatpush1.msra.mxu0 %v2279
        %2999 = vmatprep.subr.mxu0 0.0
        %3000 = vmatpush1.msra.mxu0 %v2278
        %3001 = vmatprep.subr.mxu0 0.0
        %3002 = vmatpush1.msra.mxu0 %v2277
        %3003 = vmatprep.subr.mxu0 0.0
        %3004 = vmatpush1.msra.mxu0 %v2276
        %3005 = vmatprep.subr.mxu0 0.0
        %3006 = vmatpush1.msra.mxu0 %v2275
        %3007 = vmatprep.subr.mxu0 0.0
        %3008 = vmatpush1.msra.mxu0 %v2274
        %3009 = vmatprep.subr.mxu0 0.0
        %3010 = vmatpush1.msra.mxu0 %v2273
        %3011 = vmatprep.subr.mxu0 0.0
        %3012 = vmatpush1.msra.mxu0 %v2272
        %3013 = vmatprep.subr.mxu0 0.0
        %3014 = vmatpush1.msra.mxu0 %v2271
        %3015 = vmatprep.subr.mxu0 0.0
        %3016 = vmatpush1.msra.mxu0 %v2270
        %3017 = vmatprep.subr.mxu0 0.0
        %3018 = vmatpush1.msra.mxu0 %v2269
        %3019 = vmatprep.subr.mxu0 0.0
        %3020 = vmatpush1.msra.mxu0 %v2268
        %3021 = vmatprep.subr.mxu0 0.0
        %3022 = vmatpush1.msra.mxu0 %v2267
        %3023 = vmatprep.subr.mxu0 0.0
        %3024 = vmatpush1.msra.mxu0 %v2266
        %3025 = vmatprep.subr.mxu0 0.0
        %3026 = vmatpush2.msra.mxu0 %v2297
        %3027 = vmatprep.subr.mxu0 0.0
        %3028 = vmatpush2.msra.mxu0 %v2296
        %3029 = vmatprep.subr.mxu0 0.0
        %3030 = vmatpush2.msra.mxu0 %v2295
        %3031 = vmatprep.subr.mxu0 0.0
        %3032 = vmatpush2.msra.mxu0 %v2294
        %3033 = vmatprep.subr.mxu0 0.0
        %3034 = vmatpush2.msra.mxu0 %v2293
        %3035 = vmatprep.subr.mxu0 0.0
        %3036 = vmatpush2.msra.mxu0 %v2292
        %3037 = vmatprep.subr.mxu0 0.0
        %3038 = vmatpush2.msra.mxu0 %v2291
        %3039 = vmatprep.subr.mxu0 0.0
        %3040 = vmatpush2.msra.mxu0 %v2290
        %3041 = vmatprep.subr.mxu0 0.0
        %3042 = vmatpush2.msra.mxu0 %v2289
        %3043 = vmatprep.subr.mxu0 0.0
        %3044 = vmatpush2.msra.mxu0 %v2288
        %3045 = vmatprep.subr.mxu0 0.0
        %3046 = vmatpush2.msra.mxu0 %v2287
        %3047 = vmatprep.subr.mxu0 0.0
        %3048 = vmatpush2.msra.mxu0 %v2286
        %3049 = vmatprep.subr.mxu0 0.0
        %3050 = vmatpush2.msra.mxu0 %v2285
        %3051 = vmatprep.subr.mxu0 0.0
        %3052 = vmatpush2.msra.mxu0 %v2284
        %3053 = vmatprep.subr.mxu0 0.0
        %3054 = vmatpush2.msra.mxu0 %v2283
        %3055 = vmatprep.subr.mxu0 0.0
        %3056 = vmatpush2.msra.mxu0 %v2282
        %3057 = vmatprep.mubr.f32.mxu0 %v2990
        %3058 = vmatmul.mubr.f32.gmra.mxu0 %v2989
        %v3059 = vpop.f32.mrf.mxu0
        %v3060 = vadd.f32 0.0, %v3059
        %v3061 = vpop.f32.mrf.mxu0
        %3062 = vdwg.mxu0
        %v3063 = vadd.f32 %v2988, %v3060
        %v3064 = vrot.slane %v1590, 6
        %v3065 = vrot.slane %v1591, 6
        %3068 = vmatprep.subr.mxu0 0.0
        %3069 = vmatpush1.msra.mxu0 %v2313
        %3070 = vmatprep.subr.mxu0 0.0
        %3071 = vmatpush1.msra.mxu0 %v2312
        %3072 = vmatprep.subr.mxu0 0.0
        %3073 = vmatpush1.msra.mxu0 %v2311
        %3074 = vmatprep.subr.mxu0 0.0
        %3075 = vmatpush1.msra.mxu0 %v2310
        %3076 = vmatprep.subr.mxu0 0.0
        %3077 = vmatpush1.msra.mxu0 %v2309
        %3078 = vmatprep.subr.mxu0 0.0
        %3079 = vmatpush1.msra.mxu0 %v2308
        %3080 = vmatprep.subr.mxu0 0.0
        %3081 = vmatpush1.msra.mxu0 %v2307
        %3082 = vmatprep.subr.mxu0 0.0
        %3083 = vmatpush1.msra.mxu0 %v2306
        %3084 = vmatprep.subr.mxu0 0.0
        %3085 = vmatpush1.msra.mxu0 %v2305
        %3086 = vmatprep.subr.mxu0 0.0
        %3087 = vmatpush1.msra.mxu0 %v2304
        %3088 = vmatprep.subr.mxu0 0.0
        %3089 = vmatpush1.msra.mxu0 %v2303
        %3090 = vmatprep.subr.mxu0 0.0
        %3091 = vmatpush1.msra.mxu0 %v2302
        %3092 = vmatprep.subr.mxu0 0.0
        %3093 = vmatpush1.msra.mxu0 %v2301
        %3094 = vmatprep.subr.mxu0 0.0
        %3095 = vmatpush1.msra.mxu0 %v2300
        %3096 = vmatprep.subr.mxu0 0.0
        %3097 = vmatpush1.msra.mxu0 %v2299
        %3098 = vmatprep.subr.mxu0 0.0
        %3099 = vmatpush1.msra.mxu0 %v2298
        %3100 = vmatprep.subr.mxu0 0.0
        %3101 = vmatpush2.msra.mxu0 %v2329
        %3102 = vmatprep.subr.mxu0 0.0
        %3103 = vmatpush2.msra.mxu0 %v2328
        %3104 = vmatprep.subr.mxu0 0.0
        %3105 = vmatpush2.msra.mxu0 %v2327
        %3106 = vmatprep.subr.mxu0 0.0
        %3107 = vmatpush2.msra.mxu0 %v2326
        %3108 = vmatprep.subr.mxu0 0.0
        %3109 = vmatpush2.msra.mxu0 %v2325
        %3110 = vmatprep.subr.mxu0 0.0
        %3111 = vmatpush2.msra.mxu0 %v2324
        %3112 = vmatprep.subr.mxu0 0.0
        %3113 = vmatpush2.msra.mxu0 %v2323
        %3114 = vmatprep.subr.mxu0 0.0
        %3115 = vmatpush2.msra.mxu0 %v2322
        %3116 = vmatprep.subr.mxu0 0.0
        %3117 = vmatpush2.msra.mxu0 %v2321
        %3118 = vmatprep.subr.mxu0 0.0
        %3119 = vmatpush2.msra.mxu0 %v2320
        %3120 = vmatprep.subr.mxu0 0.0
        %3121 = vmatpush2.msra.mxu0 %v2319
        %3122 = vmatprep.subr.mxu0 0.0
        %3123 = vmatpush2.msra.mxu0 %v2318
        %3124 = vmatprep.subr.mxu0 0.0
        %3125 = vmatpush2.msra.mxu0 %v2317
        %3126 = vmatprep.subr.mxu0 0.0
        %3127 = vmatpush2.msra.mxu0 %v2316
        %3128 = vmatprep.subr.mxu0 0.0
        %3129 = vmatpush2.msra.mxu0 %v2315
        %3130 = vmatprep.subr.mxu0 0.0
        %3131 = vmatpush2.msra.mxu0 %v2314
        %3132 = vmatprep.mubr.f32.mxu0 %v3065
        %3133 = vmatmul.mubr.f32.gmra.mxu0 %v3064
        %v3134 = vpop.f32.mrf.mxu0
        %v3135 = vadd.f32 0.0, %v3134
        %v3136 = vpop.f32.mrf.mxu0
        %3137 = vdwg.mxu0
        %v3138 = vadd.f32 %v3063, %v3135
        %v3139 = vrot.slane %v1590, 7
        %v3140 = vrot.slane %v1591, 7
        %3143 = vmatprep.subr.mxu0 0.0
        %3144 = vmatpush1.msra.mxu0 %v2345
        %3145 = vmatprep.subr.mxu0 0.0
        %3146 = vmatpush1.msra.mxu0 %v2344
        %3147 = vmatprep.subr.mxu0 0.0
        %3148 = vmatpush1.msra.mxu0 %v2343
        %3149 = vmatprep.subr.mxu0 0.0
        %3150 = vmatpush1.msra.mxu0 %v2342
        %3151 = vmatprep.subr.mxu0 0.0
        %3152 = vmatpush1.msra.mxu0 %v2341
        %3153 = vmatprep.subr.mxu0 0.0
        %3154 = vmatpush1.msra.mxu0 %v2340
        %3155 = vmatprep.subr.mxu0 0.0
        %3156 = vmatpush1.msra.mxu0 %v2339
        %3157 = vmatprep.subr.mxu0 0.0
        %3158 = vmatpush1.msra.mxu0 %v2338
        %3159 = vmatprep.subr.mxu0 0.0
        %3160 = vmatpush1.msra.mxu0 %v2337
        %3161 = vmatprep.subr.mxu0 0.0
        %3162 = vmatpush1.msra.mxu0 %v2336
        %3163 = vmatprep.subr.mxu0 0.0
        %3164 = vmatpush1.msra.mxu0 %v2335
        %3165 = vmatprep.subr.mxu0 0.0
        %3166 = vmatpush1.msra.mxu0 %v2334
        %3167 = vmatprep.subr.mxu0 0.0
        %3168 = vmatpush1.msra.mxu0 %v2333
        %3169 = vmatprep.subr.mxu0 0.0
        %3170 = vmatpush1.msra.mxu0 %v2332
        %3171 = vmatprep.subr.mxu0 0.0
        %3172 = vmatpush1.msra.mxu0 %v2331
        %3173 = vmatprep.subr.mxu0 0.0
        %3174 = vmatpush1.msra.mxu0 %v2330
        %3175 = vmatprep.subr.mxu0 0.0
        %3176 = vmatpush2.msra.mxu0 %v2361
        %3177 = vmatprep.subr.mxu0 0.0
        %3178 = vmatpush2.msra.mxu0 %v2360
        %3179 = vmatprep.subr.mxu0 0.0
        %3180 = vmatpush2.msra.mxu0 %v2359
        %3181 = vmatprep.subr.mxu0 0.0
        %3182 = vmatpush2.msra.mxu0 %v2358
        %3183 = vmatprep.subr.mxu0 0.0
        %3184 = vmatpush2.msra.mxu0 %v2357
        %3185 = vmatprep.subr.mxu0 0.0
        %3186 = vmatpush2.msra.mxu0 %v2356
        %3187 = vmatprep.subr.mxu0 0.0
        %3188 = vmatpush2.msra.mxu0 %v2355
        %3189 = vmatprep.subr.mxu0 0.0
        %3190 = vmatpush2.msra.mxu0 %v2354
        %3191 = vmatprep.subr.mxu0 0.0
        %3192 = vmatpush2.msra.mxu0 %v2353
        %3193 = vmatprep.subr.mxu0 0.0
        %3194 = vmatpush2.msra.mxu0 %v2352
        %3195 = vmatprep.subr.mxu0 0.0
        %3196 = vmatpush2.msra.mxu0 %v2351
        %3197 = vmatprep.subr.mxu0 0.0
        %3198 = vmatpush2.msra.mxu0 %v2350
        %3199 = vmatprep.subr.mxu0 0.0
        %3200 = vmatpush2.msra.mxu0 %v2349
        %3201 = vmatprep.subr.mxu0 0.0
        %3202 = vmatpush2.msra.mxu0 %v2348
        %3203 = vmatprep.subr.mxu0 0.0
        %3204 = vmatpush2.msra.mxu0 %v2347
        %3205 = vmatprep.subr.mxu0 0.0
        %3206 = vmatpush2.msra.mxu0 %v2346
        %3207 = vmatprep.mubr.f32.mxu0 %v3140
        %3208 = vmatmul.mubr.f32.gmra.mxu0 %v3139
        %v3209 = vpop.f32.mrf.mxu0
        %v3210 = vadd.f32 0.0, %v3209
        %v3211 = vpop.f32.mrf.mxu0
        %3212 = vdwg.mxu0
        %v3213 = vadd.f32 %v3138, %v3210
        %3214 = vmatprep.subr.mxu0 0.0
        %3215 = vmatpush1.msra.mxu0 %v2377
        %3216 = vmatprep.subr.mxu0 0.0
        %3217 = vmatpush1.msra.mxu0 %v2376
        %3218 = vmatprep.subr.mxu0 0.0
        %3219 = vmatpush1.msra.mxu0 %v2375
        %3220 = vmatprep.subr.mxu0 0.0
        %3221 = vmatpush1.msra.mxu0 %v2374
        %3222 = vmatprep.subr.mxu0 0.0
        %3223 = vmatpush1.msra.mxu0 %v2373
        %3224 = vmatprep.subr.mxu0 0.0
        %3225 = vmatpush1.msra.mxu0 %v2372
        %3226 = vmatprep.subr.mxu0 0.0
        %3227 = vmatpush1.msra.mxu0 %v2371
        %3228 = vmatprep.subr.mxu0 0.0
        %3229 = vmatpush1.msra.mxu0 %v2370
        %3230 = vmatprep.subr.mxu0 0.0
        %3231 = vmatpush1.msra.mxu0 %v2369
        %3232 = vmatprep.subr.mxu0 0.0
        %3233 = vmatpush1.msra.mxu0 %v2368
        %3234 = vmatprep.subr.mxu0 0.0
        %3235 = vmatpush1.msra.mxu0 %v2367
        %3236 = vmatprep.subr.mxu0 0.0
        %3237 = vmatpush1.msra.mxu0 %v2366
        %3238 = vmatprep.subr.mxu0 0.0
        %3239 = vmatpush1.msra.mxu0 %v2365
        %3240 = vmatprep.subr.mxu0 0.0
        %3241 = vmatpush1.msra.mxu0 %v2364
        %3242 = vmatprep.subr.mxu0 0.0
        %3243 = vmatpush1.msra.mxu0 %v2363
        %3244 = vmatprep.subr.mxu0 0.0
        %3245 = vmatpush1.msra.mxu0 %v2362
        %3246 = vmatprep.subr.mxu0 0.0
        %3247 = vmatpush2.msra.mxu0 %v2393
        %3248 = vmatprep.subr.mxu0 0.0
        %3249 = vmatpush2.msra.mxu0 %v2392
        %3250 = vmatprep.subr.mxu0 0.0
        %3251 = vmatpush2.msra.mxu0 %v2391
        %3252 = vmatprep.subr.mxu0 0.0
        %3253 = vmatpush2.msra.mxu0 %v2390
        %3254 = vmatprep.subr.mxu0 0.0
        %3255 = vmatpush2.msra.mxu0 %v2389
        %3256 = vmatprep.subr.mxu0 0.0
        %3257 = vmatpush2.msra.mxu0 %v2388
        %3258 = vmatprep.subr.mxu0 0.0
        %3259 = vmatpush2.msra.mxu0 %v2387
        %3260 = vmatprep.subr.mxu0 0.0
        %3261 = vmatpush2.msra.mxu0 %v2386
        %3262 = vmatprep.subr.mxu0 0.0
        %3263 = vmatpush2.msra.mxu0 %v2385
        %3264 = vmatprep.subr.mxu0 0.0
        %3265 = vmatpush2.msra.mxu0 %v2384
        %3266 = vmatprep.subr.mxu0 0.0
        %3267 = vmatpush2.msra.mxu0 %v2383
        %3268 = vmatprep.subr.mxu0 0.0
        %3269 = vmatpush2.msra.mxu0 %v2382
        %3270 = vmatprep.subr.mxu0 0.0
        %3271 = vmatpush2.msra.mxu0 %v2381
        %3272 = vmatprep.subr.mxu0 0.0
        %3273 = vmatpush2.msra.mxu0 %v2380
        %3274 = vmatprep.subr.mxu0 0.0
        %3275 = vmatpush2.msra.mxu0 %v2379
        %3276 = vmatprep.subr.mxu0 0.0
        %3277 = vmatpush2.msra.mxu0 %v2378
        %3278 = vmatprep.mubr.f32.mxu0 %v1593
        %3279 = vmatmul.mubr.f32.gmra.mxu0 %v1592
        %v3280 = vpop.f32.mrf.mxu0
        %v3281 = vadd.f32 0.0, %v3280
        %v3282 = vpop.f32.mrf.mxu0
        %3283 = vdwg.mxu0
        %v3284 = vadd.f32 %v3213, %v3281
        %v3287 = vrot.slane %v1592, 1
        %v3288 = vrot.slane %v1593, 1
        %3291 = vmatprep.subr.mxu0 0.0
        %3292 = vmatpush1.msra.mxu0 %v2409
        %3293 = vmatprep.subr.mxu0 0.0
        %3294 = vmatpush1.msra.mxu0 %v2408
        %3295 = vmatprep.subr.mxu0 0.0
        %3296 = vmatpush1.msra.mxu0 %v2407
        %3297 = vmatprep.subr.mxu0 0.0
        %3298 = vmatpush1.msra.mxu0 %v2406
        %3299 = vmatprep.subr.mxu0 0.0
        %3300 = vmatpush1.msra.mxu0 %v2405
        %3301 = vmatprep.subr.mxu0 0.0
        %3302 = vmatpush1.msra.mxu0 %v2404
        %3303 = vmatprep.subr.mxu0 0.0
        %3304 = vmatpush1.msra.mxu0 %v2403
        %3305 = vmatprep.subr.mxu0 0.0
        %3306 = vmatpush1.msra.mxu0 %v2402
        %3307 = vmatprep.subr.mxu0 0.0
        %3308 = vmatpush1.msra.mxu0 %v2401
        %3309 = vmatprep.subr.mxu0 0.0
        %3310 = vmatpush1.msra.mxu0 %v2400
        %3311 = vmatprep.subr.mxu0 0.0
        %3312 = vmatpush1.msra.mxu0 %v2399
        %3313 = vmatprep.subr.mxu0 0.0
        %3314 = vmatpush1.msra.mxu0 %v2398
        %3315 = vmatprep.subr.mxu0 0.0
        %3316 = vmatpush1.msra.mxu0 %v2397
        %3317 = vmatprep.subr.mxu0 0.0
        %3318 = vmatpush1.msra.mxu0 %v2396
        %3319 = vmatprep.subr.mxu0 0.0
        %3320 = vmatpush1.msra.mxu0 %v2395
        %3321 = vmatprep.subr.mxu0 0.0
        %3322 = vmatpush1.msra.mxu0 %v2394
        %3323 = vmatprep.subr.mxu0 0.0
        %3324 = vmatpush2.msra.mxu0 %v2425
        %3325 = vmatprep.subr.mxu0 0.0
        %3326 = vmatpush2.msra.mxu0 %v2424
        %3327 = vmatprep.subr.mxu0 0.0
        %3328 = vmatpush2.msra.mxu0 %v2423
        %3329 = vmatprep.subr.mxu0 0.0
        %3330 = vmatpush2.msra.mxu0 %v2422
        %3331 = vmatprep.subr.mxu0 0.0
        %3332 = vmatpush2.msra.mxu0 %v2421
        %3333 = vmatprep.subr.mxu0 0.0
        %3334 = vmatpush2.msra.mxu0 %v2420
        %3335 = vmatprep.subr.mxu0 0.0
        %3336 = vmatpush2.msra.mxu0 %v2419
        %3337 = vmatprep.subr.mxu0 0.0
        %3338 = vmatpush2.msra.mxu0 %v2418
        %3339 = vmatprep.subr.mxu0 0.0
        %3340 = vmatpush2.msra.mxu0 %v2417
        %3341 = vmatprep.subr.mxu0 0.0
        %3342 = vmatpush2.msra.mxu0 %v2416
        %3343 = vmatprep.subr.mxu0 0.0
        %3344 = vmatpush2.msra.mxu0 %v2415
        %3345 = vmatprep.subr.mxu0 0.0
        %3346 = vmatpush2.msra.mxu0 %v2414
        %3347 = vmatprep.subr.mxu0 0.0
        %3348 = vmatpush2.msra.mxu0 %v2413
        %3349 = vmatprep.subr.mxu0 0.0
        %3350 = vmatpush2.msra.mxu0 %v2412
        %3351 = vmatprep.subr.mxu0 0.0
        %3352 = vmatpush2.msra.mxu0 %v2411
        %3353 = vmatprep.subr.mxu0 0.0
        %3354 = vmatpush2.msra.mxu0 %v2410
        %3355 = vmatprep.mubr.f32.mxu0 %v3288
        %3356 = vmatmul.mubr.f32.gmra.mxu0 %v3287
        %v3357 = vpop.f32.mrf.mxu0
        %v3358 = vadd.f32 0.0, %v3357
        %v3359 = vpop.f32.mrf.mxu0
        %3360 = vdwg.mxu0
        %v3361 = vadd.f32 %v3284, %v3358
        %v3362 = vrot.slane %v1592, 2
        %v3363 = vrot.slane %v1593, 2
        %3366 = vmatprep.subr.mxu0 0.0
        %3367 = vmatpush1.msra.mxu0 %v2441
        %3368 = vmatprep.subr.mxu0 0.0
        %3369 = vmatpush1.msra.mxu0 %v2440
        %3370 = vmatprep.subr.mxu0 0.0
        %3371 = vmatpush1.msra.mxu0 %v2439
        %3372 = vmatprep.subr.mxu0 0.0
        %3373 = vmatpush1.msra.mxu0 %v2438
        %3374 = vmatprep.subr.mxu0 0.0
        %3375 = vmatpush1.msra.mxu0 %v2437
        %3376 = vmatprep.subr.mxu0 0.0
        %3377 = vmatpush1.msra.mxu0 %v2436
        %3378 = vmatprep.subr.mxu0 0.0
        %3379 = vmatpush1.msra.mxu0 %v2435
        %3380 = vmatprep.subr.mxu0 0.0
        %3381 = vmatpush1.msra.mxu0 %v2434
        %3382 = vmatprep.subr.mxu0 0.0
        %3383 = vmatpush1.msra.mxu0 %v2433
        %3384 = vmatprep.subr.mxu0 0.0
        %3385 = vmatpush1.msra.mxu0 %v2432
        %3386 = vmatprep.subr.mxu0 0.0
        %3387 = vmatpush1.msra.mxu0 %v2431
        %3388 = vmatprep.subr.mxu0 0.0
        %3389 = vmatpush1.msra.mxu0 %v2430
        %3390 = vmatprep.subr.mxu0 0.0
        %3391 = vmatpush1.msra.mxu0 %v2429
        %3392 = vmatprep.subr.mxu0 0.0
        %3393 = vmatpush1.msra.mxu0 %v2428
        %3394 = vmatprep.subr.mxu0 0.0
        %3395 = vmatpush1.msra.mxu0 %v2427
        %3396 = vmatprep.subr.mxu0 0.0
        %3397 = vmatpush1.msra.mxu0 %v2426
        %3398 = vmatprep.subr.mxu0 0.0
        %3399 = vmatpush2.msra.mxu0 %v2457
        %3400 = vmatprep.subr.mxu0 0.0
        %3401 = vmatpush2.msra.mxu0 %v2456
        %3402 = vmatprep.subr.mxu0 0.0
        %3403 = vmatpush2.msra.mxu0 %v2455
        %3404 = vmatprep.subr.mxu0 0.0
        %3405 = vmatpush2.msra.mxu0 %v2454
        %3406 = vmatprep.subr.mxu0 0.0
        %3407 = vmatpush2.msra.mxu0 %v2453
        %3408 = vmatprep.subr.mxu0 0.0
        %3409 = vmatpush2.msra.mxu0 %v2452
        %3410 = vmatprep.subr.mxu0 0.0
        %3411 = vmatpush2.msra.mxu0 %v2451
        %3412 = vmatprep.subr.mxu0 0.0
        %3413 = vmatpush2.msra.mxu0 %v2450
        %3414 = vmatprep.subr.mxu0 0.0
        %3415 = vmatpush2.msra.mxu0 %v2449
        %3416 = vmatprep.subr.mxu0 0.0
        %3417 = vmatpush2.msra.mxu0 %v2448
        %3418 = vmatprep.subr.mxu0 0.0
        %3419 = vmatpush2.msra.mxu0 %v2447
        %3420 = vmatprep.subr.mxu0 0.0
        %3421 = vmatpush2.msra.mxu0 %v2446
        %3422 = vmatprep.subr.mxu0 0.0
        %3423 = vmatpush2.msra.mxu0 %v2445
        %3424 = vmatprep.subr.mxu0 0.0
        %3425 = vmatpush2.msra.mxu0 %v2444
        %3426 = vmatprep.subr.mxu0 0.0
        %3427 = vmatpush2.msra.mxu0 %v2443
        %3428 = vmatprep.subr.mxu0 0.0
        %3429 = vmatpush2.msra.mxu0 %v2442
        %3430 = vmatprep.mubr.f32.mxu0 %v3363
        %3431 = vmatmul.mubr.f32.gmra.mxu0 %v3362
        %v3432 = vpop.f32.mrf.mxu0
        %v3433 = vadd.f32 0.0, %v3432
        %v3434 = vpop.f32.mrf.mxu0
        %3435 = vdwg.mxu0
        %v3436 = vadd.f32 %v3361, %v3433
        %v3437 = vrot.slane %v1592, 3
        %v3438 = vrot.slane %v1593, 3
        %3441 = vmatprep.subr.mxu0 0.0
        %3442 = vmatpush1.msra.mxu0 %v2473
        %3443 = vmatprep.subr.mxu0 0.0
        %3444 = vmatpush1.msra.mxu0 %v2472
        %3445 = vmatprep.subr.mxu0 0.0
        %3446 = vmatpush1.msra.mxu0 %v2471
        %3447 = vmatprep.subr.mxu0 0.0
        %3448 = vmatpush1.msra.mxu0 %v2470
        %3449 = vmatprep.subr.mxu0 0.0
        %3450 = vmatpush1.msra.mxu0 %v2469
        %3451 = vmatprep.subr.mxu0 0.0
        %3452 = vmatpush1.msra.mxu0 %v2468
        %3453 = vmatprep.subr.mxu0 0.0
        %3454 = vmatpush1.msra.mxu0 %v2467
        %3455 = vmatprep.subr.mxu0 0.0
        %3456 = vmatpush1.msra.mxu0 %v2466
        %3457 = vmatprep.subr.mxu0 0.0
        %3458 = vmatpush1.msra.mxu0 %v2465
        %3459 = vmatprep.subr.mxu0 0.0
        %3460 = vmatpush1.msra.mxu0 %v2464
        %3461 = vmatprep.subr.mxu0 0.0
        %3462 = vmatpush1.msra.mxu0 %v2463
        %3463 = vmatprep.subr.mxu0 0.0
        %3464 = vmatpush1.msra.mxu0 %v2462
        %3465 = vmatprep.subr.mxu0 0.0
        %3466 = vmatpush1.msra.mxu0 %v2461
        %3467 = vmatprep.subr.mxu0 0.0
        %3468 = vmatpush1.msra.mxu0 %v2460
        %3469 = vmatprep.subr.mxu0 0.0
        %3470 = vmatpush1.msra.mxu0 %v2459
        %3471 = vmatprep.subr.mxu0 0.0
        %3472 = vmatpush1.msra.mxu0 %v2458
        %3473 = vmatprep.subr.mxu0 0.0
        %3474 = vmatpush2.msra.mxu0 %v2489
        %3475 = vmatprep.subr.mxu0 0.0
        %3476 = vmatpush2.msra.mxu0 %v2488
        %3477 = vmatprep.subr.mxu0 0.0
        %3478 = vmatpush2.msra.mxu0 %v2487
        %3479 = vmatprep.subr.mxu0 0.0
        %3480 = vmatpush2.msra.mxu0 %v2486
        %3481 = vmatprep.subr.mxu0 0.0
        %3482 = vmatpush2.msra.mxu0 %v2485
        %3483 = vmatprep.subr.mxu0 0.0
        %3484 = vmatpush2.msra.mxu0 %v2484
        %3485 = vmatprep.subr.mxu0 0.0
        %3486 = vmatpush2.msra.mxu0 %v2483
        %3487 = vmatprep.subr.mxu0 0.0
        %3488 = vmatpush2.msra.mxu0 %v2482
        %3489 = vmatprep.subr.mxu0 0.0
        %3490 = vmatpush2.msra.mxu0 %v2481
        %3491 = vmatprep.subr.mxu0 0.0
        %3492 = vmatpush2.msra.mxu0 %v2480
        %3493 = vmatprep.subr.mxu0 0.0
        %3494 = vmatpush2.msra.mxu0 %v2479
        %3495 = vmatprep.subr.mxu0 0.0
        %3496 = vmatpush2.msra.mxu0 %v2478
        %3497 = vmatprep.subr.mxu0 0.0
        %3498 = vmatpush2.msra.mxu0 %v2477
        %3499 = vmatprep.subr.mxu0 0.0
        %3500 = vmatpush2.msra.mxu0 %v2476
        %3501 = vmatprep.subr.mxu0 0.0
        %3502 = vmatpush2.msra.mxu0 %v2475
        %3503 = vmatprep.subr.mxu0 0.0
        %3504 = vmatpush2.msra.mxu0 %v2474
        %3505 = vmatprep.mubr.f32.mxu0 %v3438
        %3506 = vmatmul.mubr.f32.gmra.mxu0 %v3437
        %v3507 = vpop.f32.mrf.mxu0
        %v3508 = vadd.f32 0.0, %v3507
        %v3509 = vpop.f32.mrf.mxu0
        %3510 = vdwg.mxu0
        %v3511 = vadd.f32 %v3436, %v3508
        %v3512 = vrot.slane %v1592, 4
        %v3513 = vrot.slane %v1593, 4
        %3516 = vmatprep.subr.mxu0 0.0
        %3517 = vmatpush1.msra.mxu0 %v2505
        %3518 = vmatprep.subr.mxu0 0.0
        %3519 = vmatpush1.msra.mxu0 %v2504
        %3520 = vmatprep.subr.mxu0 0.0
        %3521 = vmatpush1.msra.mxu0 %v2503
        %3522 = vmatprep.subr.mxu0 0.0
        %3523 = vmatpush1.msra.mxu0 %v2502
        %3524 = vmatprep.subr.mxu0 0.0
        %3525 = vmatpush1.msra.mxu0 %v2501
        %3526 = vmatprep.subr.mxu0 0.0
        %3527 = vmatpush1.msra.mxu0 %v2500
        %3528 = vmatprep.subr.mxu0 0.0
        %3529 = vmatpush1.msra.mxu0 %v2499
        %3530 = vmatprep.subr.mxu0 0.0
        %3531 = vmatpush1.msra.mxu0 %v2498
        %3532 = vmatprep.subr.mxu0 0.0
        %3533 = vmatpush1.msra.mxu0 %v2497
        %3534 = vmatprep.subr.mxu0 0.0
        %3535 = vmatpush1.msra.mxu0 %v2496
        %3536 = vmatprep.subr.mxu0 0.0
        %3537 = vmatpush1.msra.mxu0 %v2495
        %3538 = vmatprep.subr.mxu0 0.0
        %3539 = vmatpush1.msra.mxu0 %v2494
        %3540 = vmatprep.subr.mxu0 0.0
        %3541 = vmatpush1.msra.mxu0 %v2493
        %3542 = vmatprep.subr.mxu0 0.0
        %3543 = vmatpush1.msra.mxu0 %v2492
        %3544 = vmatprep.subr.mxu0 0.0
        %3545 = vmatpush1.msra.mxu0 %v2491
        %3546 = vmatprep.subr.mxu0 0.0
        %3547 = vmatpush1.msra.mxu0 %v2490
        %3548 = vmatprep.subr.mxu0 0.0
        %3549 = vmatpush2.msra.mxu0 %v2521
        %3550 = vmatprep.subr.mxu0 0.0
        %3551 = vmatpush2.msra.mxu0 %v2520
        %3552 = vmatprep.subr.mxu0 0.0
        %3553 = vmatpush2.msra.mxu0 %v2519
        %3554 = vmatprep.subr.mxu0 0.0
        %3555 = vmatpush2.msra.mxu0 %v2518
        %3556 = vmatprep.subr.mxu0 0.0
        %3557 = vmatpush2.msra.mxu0 %v2517
        %3558 = vmatprep.subr.mxu0 0.0
        %3559 = vmatpush2.msra.mxu0 %v2516
        %3560 = vmatprep.subr.mxu0 0.0
        %3561 = vmatpush2.msra.mxu0 %v2515
        %3562 = vmatprep.subr.mxu0 0.0
        %3563 = vmatpush2.msra.mxu0 %v2514
        %3564 = vmatprep.subr.mxu0 0.0
        %3565 = vmatpush2.msra.mxu0 %v2513
        %3566 = vmatprep.subr.mxu0 0.0
        %3567 = vmatpush2.msra.mxu0 %v2512
        %3568 = vmatprep.subr.mxu0 0.0
        %3569 = vmatpush2.msra.mxu0 %v2511
        %3570 = vmatprep.subr.mxu0 0.0
        %3571 = vmatpush2.msra.mxu0 %v2510
        %3572 = vmatprep.subr.mxu0 0.0
        %3573 = vmatpush2.msra.mxu0 %v2509
        %3574 = vmatprep.subr.mxu0 0.0
        %3575 = vmatpush2.msra.mxu0 %v2508
        %3576 = vmatprep.subr.mxu0 0.0
        %3577 = vmatpush2.msra.mxu0 %v2507
        %3578 = vmatprep.subr.mxu0 0.0
        %3579 = vmatpush2.msra.mxu0 %v2506
        %3580 = vmatprep.mubr.f32.mxu0 %v3513
        %3581 = vmatmul.mubr.f32.gmra.mxu0 %v3512
        %v3582 = vpop.f32.mrf.mxu0
        %v3583 = vadd.f32 0.0, %v3582
        %v3584 = vpop.f32.mrf.mxu0
        %3585 = vdwg.mxu0
        %v3586 = vadd.f32 %v3511, %v3583
        %v3587 = vrot.slane %v1592, 5
        %v3588 = vrot.slane %v1593, 5
        %3591 = vmatprep.subr.mxu0 0.0
        %3592 = vmatpush1.msra.mxu0 %v2537
        %3593 = vmatprep.subr.mxu0 0.0
        %3594 = vmatpush1.msra.mxu0 %v2536
        %3595 = vmatprep.subr.mxu0 0.0
        %3596 = vmatpush1.msra.mxu0 %v2535
        %3597 = vmatprep.subr.mxu0 0.0
        %3598 = vmatpush1.msra.mxu0 %v2534
        %3599 = vmatprep.subr.mxu0 0.0
        %3600 = vmatpush1.msra.mxu0 %v2533
        %3601 = vmatprep.subr.mxu0 0.0
        %3602 = vmatpush1.msra.mxu0 %v2532
        %3603 = vmatprep.subr.mxu0 0.0
        %3604 = vmatpush1.msra.mxu0 %v2531
        %3605 = vmatprep.subr.mxu0 0.0
        %3606 = vmatpush1.msra.mxu0 %v2530
        %3607 = vmatprep.subr.mxu0 0.0
        %3608 = vmatpush1.msra.mxu0 %v2529
        %3609 = vmatprep.subr.mxu0 0.0
        %3610 = vmatpush1.msra.mxu0 %v2528
        %3611 = vmatprep.subr.mxu0 0.0
        %3612 = vmatpush1.msra.mxu0 %v2527
        %3613 = vmatprep.subr.mxu0 0.0
        %3614 = vmatpush1.msra.mxu0 %v2526
        %3615 = vmatprep.subr.mxu0 0.0
        %3616 = vmatpush1.msra.mxu0 %v2525
        %3617 = vmatprep.subr.mxu0 0.0
        %3618 = vmatpush1.msra.mxu0 %v2524
        %3619 = vmatprep.subr.mxu0 0.0
        %3620 = vmatpush1.msra.mxu0 %v2523
        %3621 = vmatprep.subr.mxu0 0.0
        %3622 = vmatpush1.msra.mxu0 %v2522
        %3623 = vmatprep.subr.mxu0 0.0
        %3624 = vmatpush2.msra.mxu0 %v2553
        %3625 = vmatprep.subr.mxu0 0.0
        %3626 = vmatpush2.msra.mxu0 %v2552
        %3627 = vmatprep.subr.mxu0 0.0
        %3628 = vmatpush2.msra.mxu0 %v2551
        %3629 = vmatprep.subr.mxu0 0.0
        %3630 = vmatpush2.msra.mxu0 %v2550
        %3631 = vmatprep.subr.mxu0 0.0
        %3632 = vmatpush2.msra.mxu0 %v2549
        %3633 = vmatprep.subr.mxu0 0.0
        %3634 = vmatpush2.msra.mxu0 %v2548
        %3635 = vmatprep.subr.mxu0 0.0
        %3636 = vmatpush2.msra.mxu0 %v2547
        %3637 = vmatprep.subr.mxu0 0.0
        %3638 = vmatpush2.msra.mxu0 %v2546
        %3639 = vmatprep.subr.mxu0 0.0
        %3640 = vmatpush2.msra.mxu0 %v2545
        %3641 = vmatprep.subr.mxu0 0.0
        %3642 = vmatpush2.msra.mxu0 %v2544
        %3643 = vmatprep.subr.mxu0 0.0
        %3644 = vmatpush2.msra.mxu0 %v2543
        %3645 = vmatprep.subr.mxu0 0.0
        %3646 = vmatpush2.msra.mxu0 %v2542
        %3647 = vmatprep.subr.mxu0 0.0
        %3648 = vmatpush2.msra.mxu0 %v2541
        %3649 = vmatprep.subr.mxu0 0.0
        %3650 = vmatpush2.msra.mxu0 %v2540
        %3651 = vmatprep.subr.mxu0 0.0
        %3652 = vmatpush2.msra.mxu0 %v2539
        %3653 = vmatprep.subr.mxu0 0.0
        %3654 = vmatpush2.msra.mxu0 %v2538
        %3655 = vmatprep.mubr.f32.mxu0 %v3588
        %3656 = vmatmul.mubr.f32.gmra.mxu0 %v3587
        %v3657 = vpop.f32.mrf.mxu0
        %v3658 = vadd.f32 0.0, %v3657
        %v3659 = vpop.f32.mrf.mxu0
        %3660 = vdwg.mxu0
        %v3661 = vadd.f32 %v3586, %v3658
        %v3662 = vrot.slane %v1592, 6
        %v3663 = vrot.slane %v1593, 6
        %3666 = vmatprep.subr.mxu0 0.0
        %3667 = vmatpush1.msra.mxu0 %v2569
        %3668 = vmatprep.subr.mxu0 0.0
        %3669 = vmatpush1.msra.mxu0 %v2568
        %3670 = vmatprep.subr.mxu0 0.0
        %3671 = vmatpush1.msra.mxu0 %v2567
        %3672 = vmatprep.subr.mxu0 0.0
        %3673 = vmatpush1.msra.mxu0 %v2566
        %3674 = vmatprep.subr.mxu0 0.0
        %3675 = vmatpush1.msra.mxu0 %v2565
        %3676 = vmatprep.subr.mxu0 0.0
        %3677 = vmatpush1.msra.mxu0 %v2564
        %3678 = vmatprep.subr.mxu0 0.0
        %3679 = vmatpush1.msra.mxu0 %v2563
        %3680 = vmatprep.subr.mxu0 0.0
        %3681 = vmatpush1.msra.mxu0 %v2562
        %3682 = vmatprep.subr.mxu0 0.0
        %3683 = vmatpush1.msra.mxu0 %v2561
        %3684 = vmatprep.subr.mxu0 0.0
        %3685 = vmatpush1.msra.mxu0 %v2560
        %3686 = vmatprep.subr.mxu0 0.0
        %3687 = vmatpush1.msra.mxu0 %v2559
        %3688 = vmatprep.subr.mxu0 0.0
        %3689 = vmatpush1.msra.mxu0 %v2558
        %3690 = vmatprep.subr.mxu0 0.0
        %3691 = vmatpush1.msra.mxu0 %v2557
        %3692 = vmatprep.subr.mxu0 0.0
        %3693 = vmatpush1.msra.mxu0 %v2556
        %3694 = vmatprep.subr.mxu0 0.0
        %3695 = vmatpush1.msra.mxu0 %v2555
        %3696 = vmatprep.subr.mxu0 0.0
        %3697 = vmatpush1.msra.mxu0 %v2554
        %3698 = vmatprep.subr.mxu0 0.0
        %3699 = vmatpush2.msra.mxu0 %v2585
        %3700 = vmatprep.subr.mxu0 0.0
        %3701 = vmatpush2.msra.mxu0 %v2584
        %3702 = vmatprep.subr.mxu0 0.0
        %3703 = vmatpush2.msra.mxu0 %v2583
        %3704 = vmatprep.subr.mxu0 0.0
        %3705 = vmatpush2.msra.mxu0 %v2582
        %3706 = vmatprep.subr.mxu0 0.0
        %3707 = vmatpush2.msra.mxu0 %v2581
        %3708 = vmatprep.subr.mxu0 0.0
        %3709 = vmatpush2.msra.mxu0 %v2580
        %3710 = vmatprep.subr.mxu0 0.0
        %3711 = vmatpush2.msra.mxu0 %v2579
        %3712 = vmatprep.subr.mxu0 0.0
        %3713 = vmatpush2.msra.mxu0 %v2578
        %3714 = vmatprep.subr.mxu0 0.0
        %3715 = vmatpush2.msra.mxu0 %v2577
        %3716 = vmatprep.subr.mxu0 0.0
        %3717 = vmatpush2.msra.mxu0 %v2576
        %3718 = vmatprep.subr.mxu0 0.0
        %3719 = vmatpush2.msra.mxu0 %v2575
        %3720 = vmatprep.subr.mxu0 0.0
        %3721 = vmatpush2.msra.mxu0 %v2574
        %3722 = vmatprep.subr.mxu0 0.0
        %3723 = vmatpush2.msra.mxu0 %v2573
        %3724 = vmatprep.subr.mxu0 0.0
        %3725 = vmatpush2.msra.mxu0 %v2572
        %3726 = vmatprep.subr.mxu0 0.0
        %3727 = vmatpush2.msra.mxu0 %v2571
        %3728 = vmatprep.subr.mxu0 0.0
        %3729 = vmatpush2.msra.mxu0 %v2570
        %3730 = vmatprep.mubr.f32.mxu0 %v3663
        %3731 = vmatmul.mubr.f32.gmra.mxu0 %v3662
        %v3732 = vpop.f32.mrf.mxu0
        %v3733 = vadd.f32 0.0, %v3732
        %v3734 = vpop.f32.mrf.mxu0
        %3735 = vdwg.mxu0
        %v3736 = vadd.f32 %v3661, %v3733
        %v3737 = vrot.slane %v1592, 7
        %v3738 = vrot.slane %v1593, 7
        %3741 = vmatprep.subr.mxu0 0.0
        %3742 = vmatpush1.msra.mxu0 %v2601
        %3743 = vmatprep.subr.mxu0 0.0
        %3744 = vmatpush1.msra.mxu0 %v2600
        %3745 = vmatprep.subr.mxu0 0.0
        %3746 = vmatpush1.msra.mxu0 %v2599
        %3747 = vmatprep.subr.mxu0 0.0
        %3748 = vmatpush1.msra.mxu0 %v2598
        %3749 = vmatprep.subr.mxu0 0.0
        %3750 = vmatpush1.msra.mxu0 %v2597
        %3751 = vmatprep.subr.mxu0 0.0
        %3752 = vmatpush1.msra.mxu0 %v2596
        %3753 = vmatprep.subr.mxu0 0.0
        %3754 = vmatpush1.msra.mxu0 %v2595
        %3755 = vmatprep.subr.mxu0 0.0
        %3756 = vmatpush1.msra.mxu0 %v2594
        %3757 = vmatprep.subr.mxu0 0.0
        %3758 = vmatpush1.msra.mxu0 %v2593
        %3759 = vmatprep.subr.mxu0 0.0
        %3760 = vmatpush1.msra.mxu0 %v2592
        %3761 = vmatprep.subr.mxu0 0.0
        %3762 = vmatpush1.msra.mxu0 %v2591
        %3763 = vmatprep.subr.mxu0 0.0
        %3764 = vmatpush1.msra.mxu0 %v2590
        %3765 = vmatprep.subr.mxu0 0.0
        %3766 = vmatpush1.msra.mxu0 %v2589
        %3767 = vmatprep.subr.mxu0 0.0
        %3768 = vmatpush1.msra.mxu0 %v2588
        %3769 = vmatprep.subr.mxu0 0.0
        %3770 = vmatpush1.msra.mxu0 %v2587
        %3771 = vmatprep.subr.mxu0 0.0
        %3772 = vmatpush1.msra.mxu0 %v2586
        %3773 = vmatprep.subr.mxu0 0.0
        %3774 = vmatpush2.msra.mxu0 %v2617
        %3775 = vmatprep.subr.mxu0 0.0
        %3776 = vmatpush2.msra.mxu0 %v2616
        %3777 = vmatprep.subr.mxu0 0.0
        %3778 = vmatpush2.msra.mxu0 %v2615
        %3779 = vmatprep.subr.mxu0 0.0
        %3780 = vmatpush2.msra.mxu0 %v2614
        %3781 = vmatprep.subr.mxu0 0.0
        %3782 = vmatpush2.msra.mxu0 %v2613
        %3783 = vmatprep.subr.mxu0 0.0
        %3784 = vmatpush2.msra.mxu0 %v2612
        %3785 = vmatprep.subr.mxu0 0.0
        %3786 = vmatpush2.msra.mxu0 %v2611
        %3787 = vmatprep.subr.mxu0 0.0
        %3788 = vmatpush2.msra.mxu0 %v2610
        %3789 = vmatprep.subr.mxu0 0.0
        %3790 = vmatpush2.msra.mxu0 %v2609
        %3791 = vmatprep.subr.mxu0 0.0
        %3792 = vmatpush2.msra.mxu0 %v2608
        %3793 = vmatprep.subr.mxu0 0.0
        %3794 = vmatpush2.msra.mxu0 %v2607
        %3795 = vmatprep.subr.mxu0 0.0
        %3796 = vmatpush2.msra.mxu0 %v2606
        %3797 = vmatprep.subr.mxu0 0.0
        %3798 = vmatpush2.msra.mxu0 %v2605
        %3799 = vmatprep.subr.mxu0 0.0
        %3800 = vmatpush2.msra.mxu0 %v2604
        %3801 = vmatprep.subr.mxu0 0.0
        %3802 = vmatpush2.msra.mxu0 %v2603
        %3803 = vmatprep.subr.mxu0 0.0
        %3804 = vmatpush2.msra.mxu0 %v2602
        %3805 = vmatprep.mubr.f32.mxu0 %v3738
        %3806 = vmatmul.mubr.f32.gmra.mxu0 %v3737
        %v3807 = vpop.f32.mrf.mxu0
        %v3808 = vadd.f32 0.0, %v3807
        %v3809 = vpop.f32.mrf.mxu0
        %3810 = vdwg.mxu0
        %v3811 = vadd.f32 %v3736, %v3808
        %v3812 = vld [vmem:[%s8] sm:$0x1]
        %v3813 = vadd.f32 %v3811, %v3812
        %v3814 = vmax.f32 %v3813, 0.0
        %v3815 = vld [vmem:[%s9] sm:$0xf]
        %v3816 = vld [vmem:[%s9 + $0x4] sm:$0xf]
        %v3817 = vld [vmem:[%s9 + $0x8] sm:$0xf]
        %v3818 = vld [vmem:[%s9 + $0xc] sm:$0xf]
        %v3819 = vld [vmem:[%s9 + $0x10] sm:$0xf]
        %v3820 = vld [vmem:[%s9 + $0x14] sm:$0xf]
        %v3821 = vld [vmem:[%s9 + $0x18] sm:$0xf]
        %v3822 = vld [vmem:[%s9 + $0x1c] sm:$0xf]
        %v3823 = vld [vmem:[%s9 + $0x20] sm:$0xf]
        %v3824 = vld [vmem:[%s9 + $0x24] sm:$0xf]
        %v3825 = vld [vmem:[%s9 + $0x28] sm:$0xf]
        %v3826 = vld [vmem:[%s9 + $0x2c] sm:$0xf]
        %v3827 = vld [vmem:[%s9 + $0x30] sm:$0xf]
        %v3828 = vld [vmem:[%s9 + $0x34] sm:$0xf]
        %v3829 = vld [vmem:[%s9 + $0x38] sm:$0xf]
        %v3830 = vld [vmem:[%s9 + $0x3c] sm:$0xf]
        %v3831 = vunpack.c.l.bf16 %v3815
        %v3832 = vunpack.c.l.bf16 %v3816
        %v3833 = vunpack.c.l.bf16 %v3817
        %v3834 = vunpack.c.l.bf16 %v3818
        %v3835 = vunpack.c.l.bf16 %v3819
        %v3836 = vunpack.c.l.bf16 %v3820
        %v3837 = vunpack.c.l.bf16 %v3821
        %v3838 = vunpack.c.l.bf16 %v3822
        %v3839 = vunpack.c.l.bf16 %v3823
        %v3840 = vunpack.c.l.bf16 %v3824
        %v3841 = vunpack.c.l.bf16 %v3825
        %v3842 = vunpack.c.l.bf16 %v3826
        %v3843 = vunpack.c.l.bf16 %v3827
        %v3844 = vunpack.c.l.bf16 %v3828
        %v3845 = vunpack.c.l.bf16 %v3829
        %v3846 = vunpack.c.l.bf16 %v3830
        %v3847 = vld [vmem:[%s10] sm:$0x1]
        %3848 = vmatprep.subr.mxu0 0.0
        %3849 = vmatpush1.msra.mxu0 %v3846
        %3850 = vmatprep.subr.mxu0 0.0
        %3851 = vmatpush1.msra.mxu0 %v3845
        %3852 = vmatprep.subr.mxu0 0.0
        %3853 = vmatpush1.msra.mxu0 %v3844
        %3854 = vmatprep.subr.mxu0 0.0
        %3855 = vmatpush1.msra.mxu0 %v3843
        %3856 = vmatprep.subr.mxu0 0.0
        %3857 = vmatpush1.msra.mxu0 %v3842
        %3858 = vmatprep.subr.mxu0 0.0
        %3859 = vmatpush1.msra.mxu0 %v3841
        %3860 = vmatprep.subr.mxu0 0.0
        %3861 = vmatpush1.msra.mxu0 %v3840
        %3862 = vmatprep.subr.mxu0 0.0
        %3863 = vmatpush1.msra.mxu0 %v3839
        %3864 = vmatprep.subr.mxu0 0.0
        %3865 = vmatpush1.msra.mxu0 %v3838
        %3866 = vmatprep.subr.mxu0 0.0
        %3867 = vmatpush1.msra.mxu0 %v3837
        %3868 = vmatprep.subr.mxu0 0.0
        %3869 = vmatpush1.msra.mxu0 %v3836
        %3870 = vmatprep.subr.mxu0 0.0
        %3871 = vmatpush1.msra.mxu0 %v3835
        %3872 = vmatprep.subr.mxu0 0.0
        %3873 = vmatpush1.msra.mxu0 %v3834
        %3874 = vmatprep.subr.mxu0 0.0
        %3875 = vmatpush1.msra.mxu0 %v3833
        %3876 = vmatprep.subr.mxu0 0.0
        %3877 = vmatpush1.msra.mxu0 %v3832
        %3878 = vmatprep.subr.mxu0 0.0
        %3879 = vmatpush1.msra.mxu0 %v3831
        %3880 = vmatprep.subr.mxu0 0.0
        %3881 = vmatpush2.msra.mxu0 0.0
        %3882 = vmatprep.subr.mxu0 0.0
        %3883 = vmatpush2.msra.mxu0 0.0
        %3884 = vmatprep.subr.mxu0 0.0
        %3885 = vmatpush2.msra.mxu0 0.0
        %3886 = vmatprep.subr.mxu0 0.0
        %3887 = vmatpush2.msra.mxu0 0.0
        %3888 = vmatprep.subr.mxu0 0.0
        %3889 = vmatpush2.msra.mxu0 0.0
        %3890 = vmatprep.subr.mxu0 0.0
        %3891 = vmatpush2.msra.mxu0 0.0
        %3892 = vmatprep.subr.mxu0 0.0
        %3893 = vmatpush2.msra.mxu0 0.0
        %3894 = vmatprep.subr.mxu0 0.0
        %3895 = vmatpush2.msra.mxu0 0.0
        %3896 = vmatprep.subr.mxu0 0.0
        %3897 = vmatpush2.msra.mxu0 0.0
        %3898 = vmatprep.subr.mxu0 0.0
        %3899 = vmatpush2.msra.mxu0 0.0
        %3900 = vmatprep.subr.mxu0 0.0
        %3901 = vmatpush2.msra.mxu0 0.0
        %3902 = vmatprep.subr.mxu0 0.0
        %3903 = vmatpush2.msra.mxu0 0.0
        %3904 = vmatprep.subr.mxu0 0.0
        %3905 = vmatpush2.msra.mxu0 0.0
        %3906 = vmatprep.subr.mxu0 0.0
        %3907 = vmatpush2.msra.mxu0 0.0
        %3908 = vmatprep.subr.mxu0 0.0
        %3909 = vmatpush2.msra.mxu0 0.0
        %3910 = vmatprep.subr.mxu0 0.0
        %3911 = vmatpush2.msra.mxu0 0.0
        %3912 = vmatprep.mubr.f32.mxu0 0.0
        %3913 = vmatmul.mubr.f32.gmra.mxu0 %v3814
        %v3914 = vpop.f32.mrf.mxu0
        %v3915 = vadd.f32 %v3847, %v3914
        %v3916 = vpop.f32.mrf.mxu0
        %3917 = vdwg.mxu0
        %vm3918 = vcmask 24576
        %3919 = vst.msk [vmem:[%s378] sm:$0x1] %vm3918, %v3915
        %s3920 = sand.u32 %s269, 1
        %s3921 = scalar_lea.sflag [#allocation3], %s3920
        %s3922 = sand.u32 %s269, 1
        %s3923 = scalar_lea.vmem [#allocation2], %s3922
        // Predicated region
        $region65: #{dqn_forward.1} parent=63 // pred_check
          %p3924 = pneg %p279
        $region66: #{dqn_forward.1} parent=63 // pred_check_branch
          %3926 = sbr.rel (%p3924) target = $region68
        $region67: #{dqn_forward.1} parent=63 // pred_region
          %s3928 = ssub.s32 16, 16
          %3929 = vsyncadd %s3921, %s3928
          %s3930 = smul.addr %s25, 16
          %s3931 = scalar_lea.hbm %s11, %s3930
          %s3933 = sshll.u32 %s3923, 4
          %s3934 = int_to_ptr.vmem [resolvable:$true] %s3933
          %3936 = dma.vmem_to_hbm [thread:$0]  %s3934, 16, %s3931, %s3921
        $region68: #{dqn_forward.1} parent=63 // pred_fallthru
          _
      $region64: #{dqn_forward.1} parent=5 // pred_fallthru
        _
      %p3937 = scmp.le.s32.totalorder 2, %s20
      // Predicated region
      $region69: #{dqn_forward.1} parent=5 // pred_check
        %p3938 = pneg %p3937
      $region70: #{dqn_forward.1} parent=5 // pred_check_branch
        %3940 = sbr.rel (%p3938) target = $region72
      $region71: #{dqn_forward.1} parent=5 // pred_region
        %s3941 = ssub.s32 %s20, 2
        // Predicated region
        $region73: #{dqn_forward.1} parent=71 // pred_check
          %p3942 = pneg %p285
        $region74: #{dqn_forward.1} parent=71 // pred_check_branch
          %3944 = sbr.rel (%p3942) target = $region76
        $region75: #{dqn_forward.1} parent=71 // pred_region
          %s3945 = sand.u32 %s270, 1
          %s3946 = scalar_lea.sflag [#allocation3], %s3945
          %s3947 = sand.u32 %s270, 1
          %s3948 = scalar_lea.vmem [#allocation2], %s3947
          %3949 = dma.done %s3946, 16
        $region76: #{dqn_forward.1} parent=71 // pred_fallthru
          _
      $region72: #{dqn_forward.1} parent=5 // pred_fallthru
        _
    $region6: #{dqn_forward.1} parent=1 // loop_footer
      %s24 = sadd.s32 1, %s20
    $region7: #{dqn_forward.1} parent=1 // loop_footer_branch
      %19 = sbr.rel target = $region3
    $region8: #{dqn_forward.1} parent=1 // loop_exit
      _
    %3950 = vsyncpa [#allocation3], 1
    %s3951 = scalar_lea.sflag [#allocation3], 1
    %3952 = vsyncpa %s3951, 1

</llo_original>
